<compile_context>
chip_gen: v6e
topology: v6e:2x2x1
jax: 0.10.0
libtpu: 0.0.40
codegen_flags: <defaults>
</compile_context>

<pallas_src>
import functools

import jax
import jax.numpy as jnp
from jax.experimental import pallas as pl
from jax.experimental.pallas import tpu as pltpu


def _round_up(v, mult):
    return ((v + mult - 1) // mult) * mult


def _pick_vmem_limit(scratch_bytes, eb, n_pad, d):
    """Per-generation scoped-VMEM budget (raise above the 32 MiB default when
    the chip has headroom, never claim more than ~3/4 of physical VMEM)."""
    try:
        cap = int(pltpu.get_tpu_info().vmem_capacity_bytes)
    except Exception:
        cap = 64 * 1024 * 1024            # v7x-safe fallback
    # resident scratch + pipelined in/out blocks + one-hot / matmul temporaries
    want = scratch_bytes + 8 * (eb * n_pad * 2 + (eb + 2 * n_pad) * d * 4) + (8 << 20)
    return int(max(32 << 20, min(want, (cap * 3) // 4)))


def _neib_rout_kernel(x_ref, src_ref, trg_col_ref, trg_row_ref, o_ref,
                      xn_s, u_s, acc_s, z_s, *oh_scratch,
                      num_caps, tau, cache_onehots, sub_max):
    it = pl.program_id(0)            # routing iteration
    e = pl.program_id(1)             # edge block
    niter = pl.num_programs(0)
    num_eb = pl.num_programs(1)

    n, d = x_ref.shape               # padded node count, feature dim
    eb = src_ref.shape[0]            # edge block size
    k = num_caps
    dd = d // k
    f32 = jnp.float32
    bf16 = jnp.bfloat16

    # Capsule-membership matrices: S[i, c] = 1 iff feature i belongs to capsule c.
    dim_i = jax.lax.broadcasted_iota(jnp.int32, (d, k), 0)
    cap_lo = jax.lax.broadcasted_iota(jnp.int32, (d, k), 1) * dd
    S = ((dim_i >= cap_lo) & (dim_i < cap_lo + dd)).astype(f32)              # (d, k)
    dim_i_t = jax.lax.broadcasted_iota(jnp.int32, (k, d), 1)
    cap_lo_t = jax.lax.broadcasted_iota(jnp.int32, (k, d), 0) * dd
    S_T = ((dim_i_t >= cap_lo_t) & (dim_i_t < cap_lo_t + dd)).astype(f32)    # (k, d)
    S_bf, S_T_bf = S.astype(bf16), S_T.astype(bf16)

    def caps_normalize(v):
        # Per-capsule L2 normalize == F.normalize(v.view(-1, k, dd), dim=2).
        # Runs only once per routing iteration over node state -> kept in f32.
        sq = jnp.dot(v * v, S, preferred_element_type=f32)                   # (rows, k)
        inv = jax.lax.rsqrt(jnp.maximum(sq, 1e-24))   # == 1/max(sqrt(sq), 1e-12)
        scale = jnp.dot(inv, S_T, preferred_element_type=f32)                # (rows, d)
        return v * scale

    def build_trg_onehots():
        node_ids = jax.lax.broadcasted_iota(jnp.int32, (eb, n), 1)
        oh_trg = (node_ids == trg_col_ref[...]).astype(bf16)                 # (eb, n)
        node_ids_t = jax.lax.broadcasted_iota(jnp.int32, (n, eb), 0)
        oh_trg_t = (node_ids_t == trg_row_ref[...]).astype(bf16)             # (n, eb)
        return oh_trg, oh_trg_t

    # ---- one-time init: xn = normalize(x), u0 = xn --------------------------
    @pl.when((it == 0) & (e == 0))
    def _():
        xn = caps_normalize(x_ref[...])
        xn_s[...] = xn
        u_s[...] = xn

    # ---- per-iteration init: zero the scatter accumulator -------------------
    @pl.when(e == 0)
    def _():
        acc_s[...] = jnp.zeros_like(acc_s)

    # ---- first iteration: cache z = xn[src] (and the iteration-invariant
    #      trg one-hot matrices, when VMEM allows) -----------------------------
    @pl.when(it == 0)
    def _():
        node_ids = jax.lax.broadcasted_iota(jnp.int32, (eb, n), 1)
        oh_src = (node_ids == src_ref[...]).astype(bf16)                     # (eb, n)
        z_s[e] = jnp.dot(oh_src, xn_s[...].astype(bf16),
                         preferred_element_type=f32).astype(bf16)
        if cache_onehots:
            oh_trg_s, oh_trg_t_s = oh_scratch
            oh_b, oh_t_b = build_trg_onehots()
            oh_trg_s[e] = oh_b
            oh_trg_t_s[e] = oh_t_b

    # ---- per-edge-block routing ----------------------------------------------
    if cache_onehots:
        oh_trg_s, oh_trg_t_s = oh_scratch
        oh_trg = oh_trg_s[e]                                                 # (eb, n)
        oh_trg_t = oh_trg_t_s[e]                                             # (n, eb)
    else:
        oh_trg, oh_trg_t = build_trg_onehots()

    z = z_s[e].astype(f32)                                                   # (eb, d)
    # gather u[trg]: bf16 one-hot @ bf16 features (exact row copies), f32 accum
    u_t = jnp.dot(oh_trg, u_s[...].astype(bf16), preferred_element_type=f32)

    # Routing weights: softmax over capsules of per-capsule dot products.
    logits = jnp.dot((z * u_t).astype(bf16), S_bf,
                     preferred_element_type=f32) * (1.0 / tau)               # (eb, k)
    if sub_max:
        # Only needed for very small tau; per-capsule unit norms bound |logit|<=1/tau.
        logits = logits - jnp.max(logits, axis=-1, keepdims=True)
    p = jnp.exp(logits)
    p = p * pl.reciprocal(jnp.sum(p, axis=-1, keepdims=True), approx=True)
    w = jnp.dot(p.astype(bf16), S_T_bf, preferred_element_type=f32)          # (eb, d)
    msg = (z * w).astype(bf16)

    # scatter-add:  acc[trg[i]] += msg[i]   ==   one_hot(trg)^T @ msg   (MXU)
    acc_s[...] += jnp.dot(oh_trg_t, msg, preferred_element_type=f32)

    # ---- per-iteration finalize: u <- normalize(acc + xn) -------------------
    @pl.when(e == num_eb - 1)
    def _():
        u_s[...] = caps_normalize(acc_s[...] + xn_s[...])

    # ---- write the lane-dense output once, after the last routing step ------
    @pl.when((it == niter - 1) & (e == num_eb - 1))
    def _():
        o_ref[...] = u_s[...]


def neib_rout_forward(x, src_trg, *, num_caps, niter, tau=1.0, edge_block=1024):
    """Pallas TPU implementation of NeibRoutLayer.forward(x, src_trg)."""
    n, d = x.shape
    assert d % num_caps == 0, "feature dim must be divisible by num_caps"
    assert niter >= 1
    m = src_trg.shape[1]
    src = src_trg[0].astype(jnp.int32)
    trg = src_trg[1].astype(jnp.int32)

    # Pad nodes to a lane multiple (one-hot lane dim / MXU contraction dim) and
    # edges to a multiple of the edge block.
    n_pad = _round_up(n, 128)
    eb = min(_round_up(m, 128), _round_up(edge_block, 128))
    m_pad = _round_up(m, eb)
    num_eb = m_pad // eb

    x_p = jnp.zeros((n_pad, d), jnp.float32).at[:n, :].set(x.astype(jnp.float32))
    # Padded edges: src -> 0 (harmless gather), trg -> n_pad (matches no node).
    src_col = jnp.zeros((m_pad, 1), jnp.int32).at[:m, 0].set(src)
    trg_col = jnp.full((m_pad, 1), n_pad, jnp.int32).at[:m, 0].set(trg)
    trg_row = jnp.full((1, m_pad), n_pad, jnp.int32).at[0, :m].set(trg)

    # VMEM budget for the bf16 caches (z always; trg one-hots if they fit).
    state_bytes = 3 * n_pad * d * 4
    z_bytes = num_eb * eb * d * 2
    oh_bytes = 2 * num_eb * eb * n_pad * 2
    cache_onehots = (state_bytes + z_bytes + oh_bytes) <= (20 << 20)

    scratch_shapes = [
        pltpu.VMEM((n_pad, d), jnp.float32),            # xn: normalized x
        pltpu.VMEM((n_pad, d), jnp.float32),            # u:  current routing state
        pltpu.VMEM((n_pad, d), jnp.float32),            # scatter accumulator
        pltpu.VMEM((num_eb, eb, d), jnp.bfloat16),      # cached z = xn[src]
    ]
    if cache_onehots:
        scratch_shapes += [
            pltpu.VMEM((num_eb, eb, n_pad), jnp.bfloat16),   # one_hot(trg)
            pltpu.VMEM((num_eb, n_pad, eb), jnp.bfloat16),   # one_hot(trg)^T
        ]
    scratch_bytes = state_bytes + z_bytes + (oh_bytes if cache_onehots else 0)

    kernel = functools.partial(
        _neib_rout_kernel, num_caps=num_caps, tau=float(tau),
        cache_onehots=cache_onehots, sub_max=bool(float(tau) < 0.1))

    # Advisory cost estimate (one-hot gather/scatter matmuls dominate).
    flops = (2 * m_pad * n_pad * d * (2 * niter + 1)
             + 4 * m_pad * d * num_caps * niter
             + 4 * n_pad * d * num_caps * (niter + 1))
    transcendentals = niter * m_pad * num_caps + (niter + 1) * n_pad * num_caps
    bytes_accessed = 4 * 2 * n_pad * d + 4 * 3 * m_pad + z_bytes

    out = pl.pallas_call(
        kernel,
        out_shape=jax.ShapeDtypeStruct((n_pad, d), jnp.float32),
        grid_spec=pltpu.PrefetchScalarGridSpec(
            num_scalar_prefetch=0,
            grid=(niter, num_eb),
            in_specs=[
                pl.BlockSpec((n_pad, d), lambda it, e: (0, 0)),   # x (resident)
                pl.BlockSpec((eb, 1), lambda it, e: (e, 0)),      # src, column form
                pl.BlockSpec((eb, 1), lambda it, e: (e, 0)),      # trg, column form
                pl.BlockSpec((1, eb), lambda it, e: (0, e)),      # trg, row form
            ],
            out_specs=pl.BlockSpec((n_pad, d), lambda it, e: (0, 0)),
            scratch_shapes=scratch_shapes,
        ),
        compiler_params=pltpu.CompilerParams(
            # Both grid axes carry sequential state (routing iterations and the
            # shared scatter accumulator) -> must stay "arbitrary".
            dimension_semantics=("arbitrary", "arbitrary"),
            vmem_limit_bytes=_pick_vmem_limit(scratch_bytes, eb, n_pad, d),
        ),
        cost_estimate=pl.CostEstimate(
            flops=flops,
            transcendentals=transcendentals,
            bytes_accessed=bytes_accessed,
        ),
    )(x_p, src_col, trg_col, trg_row)
    return out[:n, :]


def neib_rout_reference(x, src, trg, num_caps, niter, tau):
    """Pure-JAX mirror of the PyTorch forward (gather / scatter_add based)."""
    n, d = x.shape
    k = num_caps
    dd = d // k

    def caps_norm(v):
        v3 = v.reshape(n, k, dd)
        nrm = jnp.sqrt(jnp.sum(v3 * v3, axis=2, keepdims=True))
        return (v3 / jnp.maximum(nrm, 1e-12)).reshape(n, d)

    xn = caps_norm(x.astype(jnp.float32))
    z = xn[src].reshape(-1, k, dd)
    u = xn
    for _ in range(niter):
        u_t = u[trg].reshape(-1, k, dd)
        p = jnp.sum(z * u_t, axis=2)
        p = jax.nn.softmax(p / tau, axis=1)
        msg = (z * p[:, :, None]).reshape(-1, d)
        u = jnp.zeros((n, d), jnp.float32).at[trg].add(msg)
        u = caps_norm(u + xn)
    return u


if __name__ == "__main__":
    key = jax.random.PRNGKey(0)
    k_x, k_src, k_trg = jax.random.split(key, 3)

    num_caps, niter, tau = 4, 3, 1.0
    n, d = 64, 128        # delta_d = 32; d = 128 keeps the output store lane-dense
    m = 500               # edges (padded to a multiple of the edge block internally)

    x = jax.random.normal(k_x, (n, d), dtype=jnp.float32)
    src = jax.random.randint(k_src, (m,), 0, n, dtype=jnp.int32)
    trg = jax.random.randint(k_trg, (m,), 0, n, dtype=jnp.int32)
    src_trg = jnp.stack([src, trg], axis=0)

    u = neib_rout_forward(x, src_trg, num_caps=num_caps, niter=niter, tau=tau)
    u = jax.block_until_ready(u)

    u_ref = neib_rout_reference(x, src, trg, num_caps, niter, tau)
    assert u.shape == (n, d)
    # Tolerance covers bf16 MXU operands (gathered rows / routing messages are
    # bf16-rounded, then re-normalized every iteration), the approx EUP
    # reciprocal in the softmax, and accumulation-order differences vs. the
    # XLA gather/scatter reference.
    max_err = float(jnp.max(jnp.abs(u - u_ref)))
    assert jnp.allclose(u, u_ref, atol=1.5e-2, rtol=2e-2), max_err

    print("KERNEL_OK")
</pallas_src>

<mosaic_0001>
module attributes {stable_mosaic.version = 11 : i64} {
  func.func @_neib_rout_kernel(%arg0: i32, %arg1: i32, %arg2: memref<128x128xf32, #tpu.memory_space<vmem>>, %arg3: memref<512x1xi32, #tpu.memory_space<vmem>>, %arg4: memref<512x1xi32, #tpu.memory_space<vmem>>, %arg5: memref<1x512xi32, #tpu.memory_space<vmem>>, %arg6: memref<128x128xf32, #tpu.memory_space<vmem>>, %arg7: memref<128x128xf32, #tpu.memory_space<vmem>>, %arg8: memref<128x128xf32, #tpu.memory_space<vmem>>, %arg9: memref<128x128xf32, #tpu.memory_space<vmem>>, %arg10: memref<1x512x128xbf16, #tpu.memory_space<vmem>>, %arg11: memref<1x512x128xbf16, #tpu.memory_space<vmem>>, %arg12: memref<1x128x512xbf16, #tpu.memory_space<vmem>>) attributes {dimension_semantics = [#tpu.dimension_semantics<arbitrary>, #tpu.dimension_semantics<arbitrary>], iteration_bounds = array<i64: 3, 1>, scalar_prefetch = 0 : i64, scratch_operands = 6 : i64, tpu.core_type = #tpu.core_type<tc>, window_params = [{pipeline_mode = #tpu.pipeline_mode<synchronous>, transform_indices = @transform_0, window_bounds = array<i64: 128, 128>}, {transform_indices = @transform_1, window_bounds = array<i64: 512, 1>}, {transform_indices = @transform_2, window_bounds = array<i64: 512, 1>}, {transform_indices = @transform_3, window_bounds = array<i64: 1, 512>}, {pipeline_mode = #tpu.pipeline_mode<synchronous>, transform_indices = @transform_4, window_bounds = array<i64: 128, 128>}]} {
    %0 = tpu.iota {dimensions = array<i32: 0>} : vector<128x4xi32>
    %1 = tpu.iota {dimensions = array<i32: 1>} : vector<128x4xi32>
    %c32_i32 = arith.constant 32 : i32
    %2 = vector.broadcast %c32_i32 : i32 to vector<128x4xi32>
    %3 = arith.muli %1, %2 : vector<128x4xi32>
    %4 = arith.cmpi sge, %0, %3 : vector<128x4xi32>
    %c32_i32_0 = arith.constant 32 : i32
    %5 = vector.broadcast %c32_i32_0 : i32 to vector<128x4xi32>
    %6 = arith.addi %3, %5 : vector<128x4xi32>
    %7 = arith.cmpi slt, %0, %6 : vector<128x4xi32>
    %8 = arith.andi %4, %7 : vector<128x4xi1>
    %9 = arith.extui %8 : vector<128x4xi1> to vector<128x4xi32>
    %10 = arith.sitofp %9 : vector<128x4xi32> to vector<128x4xf32>
    %11 = tpu.iota {dimensions = array<i32: 1>} : vector<4x128xi32>
    %12 = tpu.iota {dimensions = array<i32: 0>} : vector<4x128xi32>
    %c32_i32_1 = arith.constant 32 : i32
    %13 = vector.broadcast %c32_i32_1 : i32 to vector<4x128xi32>
    %14 = arith.muli %12, %13 : vector<4x128xi32>
    %15 = arith.cmpi sge, %11, %14 : vector<4x128xi32>
    %c32_i32_2 = arith.constant 32 : i32
    %16 = vector.broadcast %c32_i32_2 : i32 to vector<4x128xi32>
    %17 = arith.addi %14, %16 : vector<4x128xi32>
    %18 = arith.cmpi slt, %11, %17 : vector<4x128xi32>
    %19 = arith.andi %15, %18 : vector<4x128xi1>
    %20 = arith.extui %19 : vector<4x128xi1> to vector<4x128xi32>
    %21 = arith.sitofp %20 : vector<4x128xi32> to vector<4x128xf32>
    %22 = arith.truncf %10 : vector<128x4xf32> to vector<128x4xbf16>
    %23 = arith.truncf %21 : vector<4x128xf32> to vector<4x128xbf16>
    %c0_i32 = arith.constant 0 : i32
    %24 = arith.cmpi eq, %arg0, %c0_i32 : i32
    %c0_i32_3 = arith.constant 0 : i32
    %25 = arith.cmpi eq, %arg1, %c0_i32_3 : i32
    %26 = arith.andi %24, %25 : i1
    %27 = arith.extui %26 : i1 to i32
    %c0_i32_4 = arith.constant 0 : i32
    %28 = arith.cmpi ne, %27, %c0_i32_4 : i32
    scf.if %28 {
      %c0_29 = arith.constant 0 : index
      %c0_30 = arith.constant 0 : index
      %75 = vector.load %arg2[%c0_29, %c0_30] : memref<128x128xf32, #tpu.memory_space<vmem>>, vector<128x128xf32>
      %76 = arith.mulf %75, %75 : vector<128x128xf32>
      %cst_31 = arith.constant dense<0.000000e+00> : vector<128x4xf32>
      %77 = tpu.matmul %76, %10, %cst_31 {dimension_numbers = #tpu.dot_dimension_numbers<[1], [0], [0], [1], [0, 0, 1, 1], [], []>} : vector<128x128xf32>, vector<128x4xf32>, vector<128x4xf32> -> vector<128x4xf32>
      %cst_32 = arith.constant 1.000000e-24 : f32
      %78 = vector.broadcast %cst_32 : f32 to vector<128x4xf32>
      %79 = arith.maximumf %77, %78 : vector<128x4xf32>
      %80 = math.rsqrt %79 : vector<128x4xf32>
      %cst_33 = arith.constant dense<0.000000e+00> : vector<128x128xf32>
      %81 = tpu.matmul %80, %21, %cst_33 {dimension_numbers = #tpu.dot_dimension_numbers<[1], [0], [0], [1], [0, 0, 1, 1], [], []>} : vector<128x4xf32>, vector<4x128xf32>, vector<128x128xf32> -> vector<128x128xf32>
      %82 = arith.mulf %75, %81 : vector<128x128xf32>
      %c0_34 = arith.constant 0 : index
      %c0_35 = arith.constant 0 : index
      %83 = vector.load %arg7[%c0_34, %c0_35] : memref<128x128xf32, #tpu.memory_space<vmem>>, vector<128x128xf32>
      tpu.vector_store %arg7[%c0_34, %c0_35], %82 {strides = array<i32>} : memref<128x128xf32, #tpu.memory_space<vmem>>, vector<128x128xf32>,
      %c0_36 = arith.constant 0 : index
      %c0_37 = arith.constant 0 : index
      %84 = vector.load %arg8[%c0_36, %c0_37] : memref<128x128xf32, #tpu.memory_space<vmem>>, vector<128x128xf32>
      tpu.vector_store %arg8[%c0_36, %c0_37], %82 {strides = array<i32>} : memref<128x128xf32, #tpu.memory_space<vmem>>, vector<128x128xf32>,
    } else {
    }
    %c0_i32_5 = arith.constant 0 : i32
    %29 = arith.cmpi eq, %arg1, %c0_i32_5 : i32
    %30 = arith.extui %29 : i1 to i32
    %c0_i32_6 = arith.constant 0 : i32
    %31 = arith.cmpi ne, %30, %c0_i32_6 : i32
    scf.if %31 {
      %cst_29 = arith.constant 0.000000e+00 : f32
      %75 = vector.broadcast %cst_29 : f32 to vector<128x128xf32>
      %c0_30 = arith.constant 0 : index
      %c0_31 = arith.constant 0 : index
      %76 = vector.load %arg9[%c0_30, %c0_31] : memref<128x128xf32, #tpu.memory_space<vmem>>, vector<128x128xf32>
      tpu.vector_store %arg9[%c0_30, %c0_31], %75 {strides = array<i32>} : memref<128x128xf32, #tpu.memory_space<vmem>>, vector<128x128xf32>,
    } else {
    }
    %c0_i32_7 = arith.constant 0 : i32
    %32 = arith.cmpi eq, %arg0, %c0_i32_7 : i32
    %33 = arith.extui %32 : i1 to i32
    %c0_i32_8 = arith.constant 0 : i32
    %34 = arith.cmpi ne, %33, %c0_i32_8 : i32
    scf.if %34 {
      %75 = tpu.iota {dimensions = array<i32: 1>} : vector<512x128xi32>
      %c0_29 = arith.constant 0 : index
      %c0_30 = arith.constant 0 : index
      %76 = vector.load %arg3[%c0_29, %c0_30] : memref<512x1xi32, #tpu.memory_space<vmem>>, vector<512x1xi32>
      %77 = vector.broadcast %76 : vector<512x1xi32> to vector<512x128xi32>
      %78 = arith.cmpi eq, %75, %77 : vector<512x128xi32>
      %79 = arith.extui %78 : vector<512x128xi1> to vector<512x128xi32>
      %80 = arith.sitofp %79 : vector<512x128xi32> to vector<512x128xf32>
      %81 = arith.truncf %80 : vector<512x128xf32> to vector<512x128xbf16>
      %c0_31 = arith.constant 0 : index
      %c0_32 = arith.constant 0 : index
      %82 = vector.load %arg7[%c0_31, %c0_32] : memref<128x128xf32, #tpu.memory_space<vmem>>, vector<128x128xf32>
      %83 = arith.truncf %82 : vector<128x128xf32> to vector<128x128xbf16>
      %cst_33 = arith.constant dense<0.000000e+00> : vector<512x128xf32>
      %84 = tpu.matmul %81, %83, %cst_33 {dimension_numbers = #tpu.dot_dimension_numbers<[1], [0], [0], [1], [0, 0, 1, 1], [], []>} : vector<512x128xbf16>, vector<128x128xbf16>, vector<512x128xf32> -> vector<512x128xf32>
      %85 = arith.truncf %84 : vector<512x128xf32> to vector<512x128xbf16>
      %86 = arith.index_cast %arg1 : i32 to index
      %c0_34 = arith.constant 0 : index
      %c0_35 = arith.constant 0 : index
      %87 = vector.load %arg10[%86, %c0_34, %c0_35] : memref<1x512x128xbf16, #tpu.memory_space<vmem>>, vector<1x512x128xbf16>
      %88 = vector.shape_cast %87 : vector<1x512x128xbf16> to vector<512x128xbf16>
      %89 = vector.shape_cast %85 : vector<512x128xbf16> to vector<1x512x128xbf16>
      tpu.vector_store %arg10[%86, %c0_34, %c0_35], %89 {strides = array<i32>} : memref<1x512x128xbf16, #tpu.memory_space<vmem>>, vector<1x512x128xbf16>,
      %90 = tpu.iota {dimensions = array<i32: 1>} : vector<512x128xi32>
      %c0_36 = arith.constant 0 : index
      %c0_37 = arith.constant 0 : index
      %91 = vector.load %arg4[%c0_36, %c0_37] : memref<512x1xi32, #tpu.memory_space<vmem>>, vector<512x1xi32>
      %92 = vector.broadcast %91 : vector<512x1xi32> to vector<512x128xi32>
      %93 = arith.cmpi eq, %90, %92 : vector<512x128xi32>
      %94 = arith.extui %93 : vector<512x128xi1> to vector<512x128xi32>
      %95 = arith.sitofp %94 : vector<512x128xi32> to vector<512x128xf32>
      %96 = arith.truncf %95 : vector<512x128xf32> to vector<512x128xbf16>
      %97 = tpu.iota {dimensions = array<i32: 0>} : vector<128x512xi32>
      %c0_38 = arith.constant 0 : index
      %c0_39 = arith.constant 0 : index
      %98 = vector.load %arg5[%c0_38, %c0_39] : memref<1x512xi32, #tpu.memory_space<vmem>>, vector<1x512xi32>
      %99 = vector.broadcast %98 : vector<1x512xi32> to vector<128x512xi32>
      %100 = arith.cmpi eq, %97, %99 : vector<128x512xi32>
      %101 = arith.extui %100 : vector<128x512xi1> to vector<128x512xi32>
      %102 = arith.sitofp %101 : vector<128x512xi32> to vector<128x512xf32>
      %103 = arith.truncf %102 : vector<128x512xf32> to vector<128x512xbf16>
      %104 = arith.index_cast %arg1 : i32 to index
      %c0_40 = arith.constant 0 : index
      %c0_41 = arith.constant 0 : index
      %105 = vector.load %arg11[%104, %c0_40, %c0_41] : memref<1x512x128xbf16, #tpu.memory_space<vmem>>, vector<1x512x128xbf16>
      %106 = vector.shape_cast %105 : vector<1x512x128xbf16> to vector<512x128xbf16>
      %107 = vector.shape_cast %96 : vector<512x128xbf16> to vector<1x512x128xbf16>
      tpu.vector_store %arg11[%104, %c0_40, %c0_41], %107 {strides = array<i32>} : memref<1x512x128xbf16, #tpu.memory_space<vmem>>, vector<1x512x128xbf16>,
      %108 = arith.index_cast %arg1 : i32 to index
      %c0_42 = arith.constant 0 : index
      %c0_43 = arith.constant 0 : index
      %109 = vector.load %arg12[%108, %c0_42, %c0_43] : memref<1x128x512xbf16, #tpu.memory_space<vmem>>, vector<1x128x512xbf16>
      %110 = vector.shape_cast %109 : vector<1x128x512xbf16> to vector<128x512xbf16>
      %111 = vector.shape_cast %103 : vector<128x512xbf16> to vector<1x128x512xbf16>
      tpu.vector_store %arg12[%108, %c0_42, %c0_43], %111 {strides = array<i32>} : memref<1x128x512xbf16, #tpu.memory_space<vmem>>, vector<1x128x512xbf16>,
    } else {
    }
    %35 = arith.index_cast %arg1 : i32 to index
    %c0 = arith.constant 0 : index
    %c0_9 = arith.constant 0 : index
    %36 = vector.load %arg11[%35, %c0, %c0_9] : memref<1x512x128xbf16, #tpu.memory_space<vmem>>, vector<1x512x128xbf16>
    %37 = vector.shape_cast %36 : vector<1x512x128xbf16> to vector<512x128xbf16>
    %38 = arith.index_cast %arg1 : i32 to index
    %c0_10 = arith.constant 0 : index
    %c0_11 = arith.constant 0 : index
    %39 = vector.load %arg12[%38, %c0_10, %c0_11] : memref<1x128x512xbf16, #tpu.memory_space<vmem>>, vector<1x128x512xbf16>
    %40 = vector.shape_cast %39 : vector<1x128x512xbf16> to vector<128x512xbf16>
    %41 = arith.index_cast %arg1 : i32 to index
    %c0_12 = arith.constant 0 : index
    %c0_13 = arith.constant 0 : index
    %42 = vector.load %arg10[%41, %c0_12, %c0_13] : memref<1x512x128xbf16, #tpu.memory_space<vmem>>, vector<1x512x128xbf16>
    %43 = vector.shape_cast %42 : vector<1x512x128xbf16> to vector<512x128xbf16>
    %44 = arith.extf %43 : vector<512x128xbf16> to vector<512x128xf32>
    %c0_14 = arith.constant 0 : index
    %c0_15 = arith.constant 0 : index
    %45 = vector.load %arg8[%c0_14, %c0_15] : memref<128x128xf32, #tpu.memory_space<vmem>>, vector<128x128xf32>
    %46 = arith.truncf %45 : vector<128x128xf32> to vector<128x128xbf16>
    %cst = arith.constant dense<0.000000e+00> : vector<512x128xf32>
    %47 = tpu.matmul %37, %46, %cst {dimension_numbers = #tpu.dot_dimension_numbers<[1], [0], [0], [1], [0, 0, 1, 1], [], []>} : vector<512x128xbf16>, vector<128x128xbf16>, vector<512x128xf32> -> vector<512x128xf32>
    %48 = arith.mulf %44, %47 : vector<512x128xf32>
    %49 = arith.truncf %48 : vector<512x128xf32> to vector<512x128xbf16>
    %cst_16 = arith.constant dense<0.000000e+00> : vector<512x4xf32>
    %50 = tpu.matmul %49, %22, %cst_16 {dimension_numbers = #tpu.dot_dimension_numbers<[1], [0], [0], [1], [0, 0, 1, 1], [], []>} : vector<512x128xbf16>, vector<128x4xbf16>, vector<512x4xf32> -> vector<512x4xf32>
    %cst_17 = arith.constant 1.000000e+00 : f32
    %51 = vector.broadcast %cst_17 : f32 to vector<512x4xf32>
    %52 = arith.mulf %50, %51 : vector<512x4xf32>
    %53 = math.exp %52 : vector<512x4xf32>
    %cst_18 = arith.constant dense<0.000000e+00> : vector<512xf32>
    %54 = vector.multi_reduction <add>, %53, %cst_18 [1] : vector<512x4xf32> to vector<512xf32>
    %55 = vector.shape_cast %54 : vector<512xf32> to vector<512x1xf32>
    %56 = tpu.reciprocal %55 {approx = true} : vector<512x1xf32> -> vector<512x1xf32>
    %57 = vector.broadcast %56 : vector<512x1xf32> to vector<512x4xf32>
    %58 = arith.mulf %53, %57 : vector<512x4xf32>
    %59 = arith.truncf %58 : vector<512x4xf32> to vector<512x4xbf16>
    %cst_19 = arith.constant dense<0.000000e+00> : vector<512x128xf32>
    %60 = tpu.matmul %59, %23, %cst_19 {dimension_numbers = #tpu.dot_dimension_numbers<[1], [0], [0], [1], [0, 0, 1, 1], [], []>} : vector<512x4xbf16>, vector<4x128xbf16>, vector<512x128xf32> -> vector<512x128xf32>
    %61 = arith.mulf %44, %60 : vector<512x128xf32>
    %62 = arith.truncf %61 : vector<512x128xf32> to vector<512x128xbf16>
    %c0_20 = arith.constant 0 : index
    %c0_21 = arith.constant 0 : index
    %63 = vector.load %arg9[%c0_20, %c0_21] : memref<128x128xf32, #tpu.memory_space<vmem>>, vector<128x128xf32>
    %cst_22 = arith.constant dense<0.000000e+00> : vector<128x128xf32>
    %64 = tpu.matmul %40, %62, %cst_22 {dimension_numbers = #tpu.dot_dimension_numbers<[1], [0], [0], [1], [0, 0, 1, 1], [], []>} : vector<128x512xbf16>, vector<512x128xbf16>, vector<128x128xf32> -> vector<128x128xf32>
    %65 = arith.addf %63, %64 : vector<128x128xf32>
    %c0_23 = arith.constant 0 : index
    %c0_24 = arith.constant 0 : index
    %66 = vector.load %arg9[%c0_23, %c0_24] : memref<128x128xf32, #tpu.memory_space<vmem>>, vector<128x128xf32>
    tpu.vector_store %arg9[%c0_23, %c0_24], %65 {strides = array<i32>} : memref<128x128xf32, #tpu.memory_space<vmem>>, vector<128x128xf32>,
    %c0_i32_25 = arith.constant 0 : i32
    %67 = arith.cmpi eq, %arg1, %c0_i32_25 : i32
    %68 = arith.extui %67 : i1 to i32
    %c0_i32_26 = arith.constant 0 : i32
    %69 = arith.cmpi ne, %68, %c0_i32_26 : i32
    scf.if %69 {
      %c0_29 = arith.constant 0 : index
      %c0_30 = arith.constant 0 : index
      %75 = vector.load %arg9[%c0_29, %c0_30] : memref<128x128xf32, #tpu.memory_space<vmem>>, vector<128x128xf32>
      %c0_31 = arith.constant 0 : index
      %c0_32 = arith.constant 0 : index
      %76 = vector.load %arg7[%c0_31, %c0_32] : memref<128x128xf32, #tpu.memory_space<vmem>>, vector<128x128xf32>
      %77 = arith.addf %75, %76 : vector<128x128xf32>
      %78 = arith.mulf %77, %77 : vector<128x128xf32>
      %cst_33 = arith.constant dense<0.000000e+00> : vector<128x4xf32>
      %79 = tpu.matmul %78, %10, %cst_33 {dimension_numbers = #tpu.dot_dimension_numbers<[1], [0], [0], [1], [0, 0, 1, 1], [], []>} : vector<128x128xf32>, vector<128x4xf32>, vector<128x4xf32> -> vector<128x4xf32>
      %cst_34 = arith.constant 1.000000e-24 : f32
      %80 = vector.broadcast %cst_34 : f32 to vector<128x4xf32>
      %81 = arith.maximumf %79, %80 : vector<128x4xf32>
      %82 = math.rsqrt %81 : vector<128x4xf32>
      %cst_35 = arith.constant dense<0.000000e+00> : vector<128x128xf32>
      %83 = tpu.matmul %82, %21, %cst_35 {dimension_numbers = #tpu.dot_dimension_numbers<[1], [0], [0], [1], [0, 0, 1, 1], [], []>} : vector<128x4xf32>, vector<4x128xf32>, vector<128x128xf32> -> vector<128x128xf32>
      %84 = arith.mulf %77, %83 : vector<128x128xf32>
      %c0_36 = arith.constant 0 : index
      %c0_37 = arith.constant 0 : index
      %85 = vector.load %arg8[%c0_36, %c0_37] : memref<128x128xf32, #tpu.memory_space<vmem>>, vector<128x128xf32>
      tpu.vector_store %arg8[%c0_36, %c0_37], %84 {strides = array<i32>} : memref<128x128xf32, #tpu.memory_space<vmem>>, vector<128x128xf32>,
    } else {
    }
    %c2_i32 = arith.constant 2 : i32
    %70 = arith.cmpi eq, %arg0, %c2_i32 : i32
    %c0_i32_27 = arith.constant 0 : i32
    %71 = arith.cmpi eq, %arg1, %c0_i32_27 : i32
    %72 = arith.andi %70, %71 : i1
    %73 = arith.extui %72 : i1 to i32
    %c0_i32_28 = arith.constant 0 : i32
    %74 = arith.cmpi ne, %73, %c0_i32_28 : i32
    scf.if %74 {
      %c0_29 = arith.constant 0 : index
      %c0_30 = arith.constant 0 : index
      %75 = vector.load %arg8[%c0_29, %c0_30] : memref<128x128xf32, #tpu.memory_space<vmem>>, vector<128x128xf32>
      %c0_31 = arith.constant 0 : index
      %c0_32 = arith.constant 0 : index
      %76 = vector.load %arg6[%c0_31, %c0_32] : memref<128x128xf32, #tpu.memory_space<vmem>>, vector<128x128xf32>
      tpu.vector_store %arg6[%c0_31, %c0_32], %75 {strides = array<i32>} : memref<128x128xf32, #tpu.memory_space<vmem>>, vector<128x128xf32>,
    } else {
    }
    return
  }
  func.func @transform_0(%arg0: i32, %arg1: i32) -> (i32, i32) {
    %c0_i32 = arith.constant 0 : i32
    %c0_i32_0 = arith.constant 0 : i32
    %c0_i32_1 = arith.constant 0 : i32
    return %c0_i32, %c0_i32_0 : i32, i32
  }
  func.func @transform_1(%arg0: i32, %arg1: i32) -> (i32, i32) {
    %c0_i32 = arith.constant 0 : i32
    %c0_i32_0 = arith.constant 0 : i32
    return %arg1, %c0_i32 : i32, i32
  }
  func.func @transform_2(%arg0: i32, %arg1: i32) -> (i32, i32) {
    %c0_i32 = arith.constant 0 : i32
    %c0_i32_0 = arith.constant 0 : i32
    return %arg1, %c0_i32 : i32, i32
  }
  func.func @transform_3(%arg0: i32, %arg1: i32) -> (i32, i32) {
    %c0_i32 = arith.constant 0 : i32
    %c0_i32_0 = arith.constant 0 : i32
    return %c0_i32, %arg1 : i32, i32
  }
  func.func @transform_4(%arg0: i32, %arg1: i32) -> (i32, i32) {
    %c0_i32 = arith.constant 0 : i32
    %c0_i32_0 = arith.constant 0 : i32
    %c0_i32_1 = arith.constant 0 : i32
    return %c0_i32, %c0_i32_0 : i32, i32
  }
}

</mosaic_0001>

<llo_original>
// kernel: tpu_custom_call.1
$region0: #{tpu_custom_call.1}
  #allocation0 [shape = 'u32[]', space=smem, size = 0x4, offset = 0x4, fixed_abs, tag = 'smem constant byte address 0x4 - core index']
  #allocation1 [shape = 'u32[144,128]{1,0:T(1,128)}', space=vmem, size = 0x12000, scoped, tag = 'internal scratch']
  #allocation2 [shape = 'f32[128,128]{1,0:T(8,128)}', space=vmem, size = 0x10000, scoped, tag = 'scratch operand']
  #allocation3 [shape = 'f32[128,128]{1,0:T(8,128)}', space=vmem, size = 0x10000, scoped, tag = 'scratch operand']
  #allocation4 [shape = 'f32[128,128]{1,0:T(8,128)}', space=vmem, size = 0x10000, scoped, tag = 'scratch operand']
  #allocation5 [shape = 'bf16[1,512,128]{2,1,0:T(8,128)(2,1)}', space=vmem, size = 0x20000, scoped, tag = 'scratch operand']
  #allocation6 [shape = 'bf16[1,512,128]{2,1,0:T(8,128)(2,1)}', space=vmem, size = 0x20000, scoped, tag = 'scratch operand']
  #allocation7 [shape = 'bf16[1,128,512]{2,1,0:T(8,128)(2,1)}', space=vmem, size = 0x20000, scoped, tag = 'scratch operand']
  %s0 = inlined_call_operand.vmem [shape: f32[128,128], index: 0, kind: input, shape index: {}]
  %s1 = inlined_call_operand.vmem [shape: s32[512,1], index: 1, kind: input, shape index: {}]
  %s2 = inlined_call_operand.vmem [shape: s32[512,1], index: 2, kind: input, shape index: {}]
  %s3 = inlined_call_operand.vmem [shape: s32[1,512], index: 3, kind: input, shape index: {}]
  %s4 = inlined_call_operand.hbm [shape: f32[128,128], index: 4, kind: output, shape index: {}]
  %s5 = sld [smem:[#allocation0]]
  $region69: #{tpu_custom_call.1} parent=0
    _
  %s7 = ssub.s32 1, %s5
  %s8 = scalar_select 0, %s7, %s5
  $region1: #{tpu_custom_call.1} parent=0
    #allocation8 [shape = 'u8[65536]{0}', space=vmem, size = 0x10000, scoped, tag = 'output window, operand 0, single buffered']
    #allocation9 [shape = 's32[2]{0}', space=sflag, size = 0x8, scoped, tag = 'scoped memory for tpu_custom_call.1']
    %9 = vsyncpa [#allocation9], 0
    loop: start=0, step=1, limit=5
    $region2: #{tpu_custom_call.1} parent=1 // loop_pre_header
      _
    $region3: #{tpu_custom_call.1} parent=1 // loop_header
      %s11 = sphi 0, %s15
      %p12 = scmp.ge.s32.totalorder %s11, 5
      %s18 = sphi 0, %s30
      %s19 = sphi 0, %s26
      %s20 = sphi 0, %s18
      %s21 = sphi 0, %s19
      %s22 = sphi 0, %s20
      %s23 = sphi 0, %s21
      %s31 = sphi 0, %s31
      %s33 = sphi 0, %s31
      %s34 = sphi 0, %s33
      %s48 = sphi 0, %s34
      %s54 = sphi 0, %s56
      %s57 = sphi 0, %s54
      %s58 = sphi 0, %s57
      %s74 = sphi 0, %s58
      %s80 = sphi 0, %s82
      %s83 = sphi 0, %s80
      %s84 = sphi 0, %s83
      %s100 = sphi 0, %s84
      %s106 = sphi 0, %s108
      %s109 = sphi 0, %s106
      %s110 = sphi 0, %s109
      %s126 = sphi 0, %s110
      %s130 = sphi 0, %s130
      %s132 = sphi 0, %s130
      %s133 = sphi 0, %s132
      %s147 = sphi 0, %s133
    $region4: #{tpu_custom_call.1} parent=1 // loop_header_branch
      %14 = sbr.rel (%p12) target = $region8
    $region5: #{tpu_custom_call.1} parent=1 // loop_body
      %s16 = ssub.s32 %s11, 1
      %s17 = ssub.s32 %s11, 2
      %s24 = sadd.s32 1, %s19
      %p25 = scmp.ge.s32.totalorder %s24, 1
      %s26 = scalar_select %p25, 0, %s24
      %s27 = sadd.s32 1, %s18
      %s28 = scalar_select %p25, %s27, %s18
      %p29 = scmp.ge.s32.totalorder %s28, 3
      %s30 = scalar_select %p29, 0, %s28
      %s32 = sadd.s32 %s31, 1
      %p35 = scmp.eq.s32.totalorder %s11, 2
      %p36 = scmp.ne.s32.totalorder %s31, %s33
      %p37 = scmp.eq.s32.totalorder %s11, 0
      %p38 = por %p36, %p37
      %p39 = scmp.ne.s32.totalorder %s31, %s33
      %p40 = scmp.eq.s32.totalorder %s16, 2
      %p41 = por %p39, %p40
      %p42 = scmp.ne.s32.totalorder %s33, %s34
      %p43 = scmp.eq.s32.totalorder %s16, 0
      %p44 = por %p42, %p43
      %p45 = scmp.ne.s32.totalorder %s33, %s34
      %p46 = scmp.eq.s32.totalorder %s17, 2
      %p47 = por %p45, %p46
      %p49 = scmp.ne.s32.totalorder %s34, %s48
      %p50 = scmp.eq.s32.totalorder %s17, 0
      %p51 = por %p49, %p50
      %s52 = ssub.s32 %s19, %s26
      %p53 = scmp.eq.s32.totalorder %s52, 0
      %s55 = sadd.s32 %s54, 1
      %s56 = scalar_select %p53, %s54, %s55
      %p59 = pneg %p53
      %p60 = scmp.eq.s32.totalorder %s11, 2
      %p61 = por %p59, %p60
      %p62 = scmp.ne.s32.totalorder %s54, %s57
      %p63 = scmp.eq.s32.totalorder %s11, 0
      %p64 = por %p62, %p63
      %p65 = scmp.ne.s32.totalorder %s54, %s57
      %p66 = scmp.eq.s32.totalorder %s16, 2
      %p67 = por %p65, %p66
      %p68 = scmp.ne.s32.totalorder %s57, %s58
      %p69 = scmp.eq.s32.totalorder %s16, 0
      %p70 = por %p68, %p69
      %p71 = scmp.ne.s32.totalorder %s57, %s58
      %p72 = scmp.eq.s32.totalorder %s17, 2
      %p73 = por %p71, %p72
      %p75 = scmp.ne.s32.totalorder %s58, %s74
      %p76 = scmp.eq.s32.totalorder %s17, 0
      %p77 = por %p75, %p76
      %s78 = ssub.s32 %s19, %s26
      %p79 = scmp.eq.s32.totalorder %s78, 0
      %s81 = sadd.s32 %s80, 1
      %s82 = scalar_select %p79, %s80, %s81
      %p85 = pneg %p79
      %p86 = scmp.eq.s32.totalorder %s11, 2
      %p87 = por %p85, %p86
      %p88 = scmp.ne.s32.totalorder %s80, %s83
      %p89 = scmp.eq.s32.totalorder %s11, 0
      %p90 = por %p88, %p89
      %p91 = scmp.ne.s32.totalorder %s80, %s83
      %p92 = scmp.eq.s32.totalorder %s16, 2
      %p93 = por %p91, %p92
      %p94 = scmp.ne.s32.totalorder %s83, %s84
      %p95 = scmp.eq.s32.totalorder %s16, 0
      %p96 = por %p94, %p95
      %p97 = scmp.ne.s32.totalorder %s83, %s84
      %p98 = scmp.eq.s32.totalorder %s17, 2
      %p99 = por %p97, %p98
      %p101 = scmp.ne.s32.totalorder %s84, %s100
      %p102 = scmp.eq.s32.totalorder %s17, 0
      %p103 = por %p101, %p102
      %s104 = ssub.s32 %s19, %s26
      %p105 = scmp.eq.s32.totalorder %s104, 0
      %s107 = sadd.s32 %s106, 1
      %s108 = scalar_select %p105, %s106, %s107
      %p111 = pneg %p105
      %p112 = scmp.eq.s32.totalorder %s11, 2
      %p113 = por %p111, %p112
      %p114 = scmp.ne.s32.totalorder %s106, %s109
      %p115 = scmp.eq.s32.totalorder %s11, 0
      %p116 = por %p114, %p115
      %p117 = scmp.ne.s32.totalorder %s106, %s109
      %p118 = scmp.eq.s32.totalorder %s16, 2
      %p119 = por %p117, %p118
      %p120 = scmp.ne.s32.totalorder %s109, %s110
      %p121 = scmp.eq.s32.totalorder %s16, 0
      %p122 = por %p120, %p121
      %p123 = scmp.ne.s32.totalorder %s109, %s110
      %p124 = scmp.eq.s32.totalorder %s17, 2
      %p125 = por %p123, %p124
      %p127 = scmp.ne.s32.totalorder %s110, %s126
      %p128 = scmp.eq.s32.totalorder %s17, 0
      %p129 = por %p127, %p128
      %s131 = sadd.s32 %s130, 1
      %p134 = scmp.eq.s32.totalorder %s11, 2
      %p135 = scmp.ne.s32.totalorder %s130, %s132
      %p136 = scmp.eq.s32.totalorder %s11, 0
      %p137 = por %p135, %p136
      %p138 = scmp.ne.s32.totalorder %s130, %s132
      %p139 = scmp.eq.s32.totalorder %s16, 2
      %p140 = por %p138, %p139
      %p141 = scmp.ne.s32.totalorder %s132, %s133
      %p142 = scmp.eq.s32.totalorder %s16, 0
      %p143 = por %p141, %p142
      %p144 = scmp.ne.s32.totalorder %s132, %s133
      %p145 = scmp.eq.s32.totalorder %s17, 2
      %p146 = por %p144, %p145
      %p148 = scmp.ne.s32.totalorder %s133, %s147
      %p149 = scmp.eq.s32.totalorder %s17, 0
      %p150 = por %p148, %p149
      %p151 = scmp.le.s32.totalorder 1, %s11
      %p152 = scmp.lt.s32.totalorder %s11, 4
      %p153 = pnand %p151, %p152
      %p154 = pneg %p153
      // Predicated region
      $region9: #{tpu_custom_call.1} parent=5 // pred_check
        _
      $region10: #{tpu_custom_call.1} parent=5 // pred_check_branch
        %156 = sbr.rel (%p153) target = $region12
      $region11: #{tpu_custom_call.1} parent=5 // pred_region
        %s157 = ssub.s32 %s11, 1
        // Predicated region
        $region13: #{tpu_custom_call.1} parent=11 // pred_check
          %p158 = pneg %p44
        $region14: #{tpu_custom_call.1} parent=11 // pred_check_branch
          %160 = sbr.rel (%p158) target = $region16
        $region15: #{tpu_custom_call.1} parent=11 // pred_region
          _
        $region16: #{tpu_custom_call.1} parent=11 // pred_fallthru
          _
        // Predicated region
        $region17: #{tpu_custom_call.1} parent=11 // pred_check
          %p161 = pneg %p70
        $region18: #{tpu_custom_call.1} parent=11 // pred_check_branch
          %163 = sbr.rel (%p161) target = $region20
        $region19: #{tpu_custom_call.1} parent=11 // pred_region
          %s164 = smul.u32 64, %s21
          %p165 = scmp.lt.s32.totalorder %s164, 63
          %s166 = scalar_select %p165, %s164, 63
          %s167 = smul.addr %s166, 8
          %s168 = scalar_lea.vmem %s1, %s167
          %s169 = smul.u32 64, %s21
        $region20: #{tpu_custom_call.1} parent=11 // pred_fallthru
          _
        // Predicated region
        $region21: #{tpu_custom_call.1} parent=11 // pred_check
          %p170 = pneg %p96
        $region22: #{tpu_custom_call.1} parent=11 // pred_check_branch
          %172 = sbr.rel (%p170) target = $region24
        $region23: #{tpu_custom_call.1} parent=11 // pred_region
          %s173 = smul.u32 64, %s21
          %p174 = scmp.lt.s32.totalorder %s173, 63
          %s175 = scalar_select %p174, %s173, 63
          %s176 = smul.addr %s175, 8
          %s177 = scalar_lea.vmem %s2, %s176
          %s178 = smul.u32 64, %s21
        $region24: #{tpu_custom_call.1} parent=11 // pred_fallthru
          _
        // Predicated region
        $region25: #{tpu_custom_call.1} parent=11 // pred_check
          %p179 = pneg %p122
        $region26: #{tpu_custom_call.1} parent=11 // pred_check_branch
          %181 = sbr.rel (%p179) target = $region28
        $region27: #{tpu_custom_call.1} parent=11 // pred_region
          %s182 = smul.u32 4, %s21
          %p183 = scmp.lt.s32.totalorder %s182, 3
          %s184 = scalar_select %p183, %s182, 3
          %s185 = scalar_lea.vmem %s3, %s184
          %s186 = smul.u32 4, %s21
        $region28: #{tpu_custom_call.1} parent=11 // pred_fallthru
          _
      $region12: #{tpu_custom_call.1} parent=5 // pred_fallthru
        _
      %p187 = scmp.lt.s32.totalorder %s11, 3
      // Predicated region
      $region29: #{tpu_custom_call.1} parent=5 // pred_check
        %p188 = pneg %p187
      $region30: #{tpu_custom_call.1} parent=5 // pred_check_branch
        %190 = sbr.rel (%p188) target = $region32
      $region31: #{tpu_custom_call.1} parent=5 // pred_region
        _
      $region32: #{tpu_custom_call.1} parent=5 // pred_fallthru
        _
      %p191 = scmp.le.s32.totalorder 1, %s11
      %p192 = scmp.lt.s32.totalorder %s11, 4
      %p193 = pnand %p191, %p192
      %p194 = pneg %p193
      // Predicated region
      $region33: #{tpu_custom_call.1} parent=5 // pred_check
        _
      $region34: #{tpu_custom_call.1} parent=5 // pred_check_branch
        %196 = sbr.rel (%p193) target = $region36
      $region35: #{tpu_custom_call.1} parent=5 // pred_region
        %s197 = ssub.s32 %s11, 1
        %p198 = pneg %p44
        %p199 = pneg %p41
        %s200 = smul.u32 64, %s21
        %p201 = scmp.lt.s32.totalorder %s200, 63
        %s202 = scalar_select %p201, %s200, 63
        %s203 = smul.addr %s202, 8
        %s204 = scalar_lea.vmem %s1, %s203
        %p205 = pneg %p70
        %p206 = pneg %p67
        %s207 = smul.u32 64, %s21
        %p208 = scmp.lt.s32.totalorder %s207, 63
        %s209 = scalar_select %p208, %s207, 63
        %s210 = smul.addr %s209, 8
        %s211 = scalar_lea.vmem %s2, %s210
        %p212 = pneg %p96
        %p213 = pneg %p93
        %s214 = smul.u32 4, %s21
        %p215 = scmp.lt.s32.totalorder %s214, 3
        %s216 = scalar_select %p215, %s214, 3
        %s217 = scalar_lea.vmem %s3, %s216
        %p218 = pneg %p122
        %p219 = pneg %p119
        %p220 = pneg %p143
        %p221 = pneg %p140
        %s222 = smul.u32 64, %s21
        %p223 = scmp.lt.s32.totalorder %s222, 63
        %s224 = scalar_select %p223, %s222, 63
        %s225 = smul.addr %s224, 8
        %s226 = scalar_lea.vmem %s1, %s225
        %s227 = smul.u32 64, %s21
        %s228 = smul.u32 64, %s21
        %p229 = scmp.lt.s32.totalorder %s228, 63
        %s230 = scalar_select %p229, %s228, 63
        %s231 = smul.addr %s230, 8
        %s232 = scalar_lea.vmem %s2, %s231
        %s233 = smul.u32 64, %s21
        %s234 = smul.u32 4, %s21
        %p235 = scmp.lt.s32.totalorder %s234, 3
        %s236 = scalar_select %p235, %s234, 3
        %s237 = scalar_lea.vmem %s3, %s236
        %s238 = smul.u32 4, %s21
        %v240 = vlaneseq
        %v241 = vshrl.u32 %v240, 7
        %v242 = vadd.s32 %v241, 8
        %v243 = vadd.s32 %v241, 16
        %v244 = vadd.s32 %v241, 24
        %v245 = vadd.s32 %v241, 32
        %v246 = vadd.s32 %v241, 40
        %v247 = vadd.s32 %v241, 48
        %v248 = vadd.s32 %v241, 56
        %v249 = vadd.s32 %v241, 64
        %v250 = vadd.s32 %v241, 72
        %v251 = vadd.s32 %v241, 80
        %v252 = vadd.s32 %v241, 88
        %v253 = vadd.s32 %v241, 96
        %v254 = vadd.s32 %v241, 104
        %v255 = vadd.s32 %v241, 112
        %v256 = vadd.s32 %v241, 120
        %v257 = vlaneseq
        %v258 = vand.u32 %v257, 127
        %v259 = vmul.u32 %v258, 32
        %vm260 = vcmp.ge.s32.totalorder %v241, %v259
        %vm261 = vcmp.ge.s32.totalorder %v242, %v259
        %vm262 = vcmp.ge.s32.totalorder %v243, %v259
        %vm263 = vcmp.ge.s32.totalorder %v244, %v259
        %vm264 = vcmp.ge.s32.totalorder %v245, %v259
        %vm265 = vcmp.ge.s32.totalorder %v246, %v259
        %vm266 = vcmp.ge.s32.totalorder %v247, %v259
        %vm267 = vcmp.ge.s32.totalorder %v248, %v259
        %vm268 = vcmp.ge.s32.totalorder %v249, %v259
        %vm269 = vcmp.ge.s32.totalorder %v250, %v259
        %vm270 = vcmp.ge.s32.totalorder %v251, %v259
        %vm271 = vcmp.ge.s32.totalorder %v252, %v259
        %vm272 = vcmp.ge.s32.totalorder %v253, %v259
        %vm273 = vcmp.ge.s32.totalorder %v254, %v259
        %vm274 = vcmp.ge.s32.totalorder %v255, %v259
        %vm275 = vcmp.ge.s32.totalorder %v256, %v259
        %v276 = vadd.s32 %v259, 32
        %vm277 = vcmp.lt.s32.totalorder %v241, %v276
        %vm278 = vcmp.lt.s32.totalorder %v242, %v276
        %vm279 = vcmp.lt.s32.totalorder %v243, %v276
        %vm280 = vcmp.lt.s32.totalorder %v244, %v276
        %vm281 = vcmp.lt.s32.totalorder %v245, %v276
        %vm282 = vcmp.lt.s32.totalorder %v246, %v276
        %vm283 = vcmp.lt.s32.totalorder %v247, %v276
        %vm284 = vcmp.lt.s32.totalorder %v248, %v276
        %vm285 = vcmp.lt.s32.totalorder %v249, %v276
        %vm286 = vcmp.lt.s32.totalorder %v250, %v276
        %vm287 = vcmp.lt.s32.totalorder %v251, %v276
        %vm288 = vcmp.lt.s32.totalorder %v252, %v276
        %vm289 = vcmp.lt.s32.totalorder %v253, %v276
        %vm290 = vcmp.lt.s32.totalorder %v254, %v276
        %vm291 = vcmp.lt.s32.totalorder %v255, %v276
        %vm292 = vcmp.lt.s32.totalorder %v256, %v276
        %vm293 = vmand %vm260, %vm277
        %vm294 = vmand %vm261, %vm278
        %vm295 = vmand %vm262, %vm279
        %vm296 = vmand %vm263, %vm280
        %vm297 = vmand %vm264, %vm281
        %vm298 = vmand %vm265, %vm282
        %vm299 = vmand %vm266, %vm283
        %vm300 = vmand %vm267, %vm284
        %vm301 = vmand %vm268, %vm285
        %vm302 = vmand %vm269, %vm286
        %vm303 = vmand %vm270, %vm287
        %vm304 = vmand %vm271, %vm288
        %vm305 = vmand %vm272, %vm289
        %vm306 = vmand %vm273, %vm290
        %vm307 = vmand %vm274, %vm291
        %vm308 = vmand %vm275, %vm292
        %v309 = vsel %vm293, 1, 0
        %v310 = vsel %vm294, 1, 0
        %v311 = vsel %vm295, 1, 0
        %v312 = vsel %vm296, 1, 0
        %v313 = vsel %vm297, 1, 0
        %v314 = vsel %vm298, 1, 0
        %v315 = vsel %vm299, 1, 0
        %v316 = vsel %vm300, 1, 0
        %v317 = vsel %vm301, 1, 0
        %v318 = vsel %vm302, 1, 0
        %v319 = vsel %vm303, 1, 0
        %v320 = vsel %vm304, 1, 0
        %v321 = vsel %vm305, 1, 0
        %v322 = vsel %vm306, 1, 0
        %v323 = vsel %vm307, 1, 0
        %v324 = vsel %vm308, 1, 0
        %v325 = vcvt.s32.f32 %v309
        %v326 = vcvt.s32.f32 %v310
        %v327 = vcvt.s32.f32 %v311
        %v328 = vcvt.s32.f32 %v312
        %v329 = vcvt.s32.f32 %v313
        %v330 = vcvt.s32.f32 %v314
        %v331 = vcvt.s32.f32 %v315
        %v332 = vcvt.s32.f32 %v316
        %v333 = vcvt.s32.f32 %v317
        %v334 = vcvt.s32.f32 %v318
        %v335 = vcvt.s32.f32 %v319
        %v336 = vcvt.s32.f32 %v320
        %v337 = vcvt.s32.f32 %v321
        %v338 = vcvt.s32.f32 %v322
        %v339 = vcvt.s32.f32 %v323
        %v340 = vcvt.s32.f32 %v324
        %v341 = vmul.u32 %v241, 32
        %vm342 = vcmp.ge.s32.totalorder %v258, %v341
        %v343 = vadd.s32 %v341, 32
        %vm344 = vcmp.lt.s32.totalorder %v258, %v343
        %vm345 = vmand %vm342, %vm344
        %v346 = vsel %vm345, 1, 0
        %v347 = vcvt.s32.f32 %v346
        %v348 = vpack.c.bf16 %v326, %v325
        %v349 = vpack.c.bf16 %v328, %v327
        %v350 = vpack.c.bf16 %v330, %v329
        %v351 = vpack.c.bf16 %v332, %v331
        %v352 = vpack.c.bf16 %v334, %v333
        %v353 = vpack.c.bf16 %v336, %v335
        %v354 = vpack.c.bf16 %v338, %v337
        %v355 = vpack.c.bf16 %v340, %v339
        %v356 = vpack.c.bf16 %v347, %v347
        %p357 = scmp.eq.s32.totalorder %s20, 0
        %p358 = scmp.eq.s32.totalorder %s21, 0
        %p359 = pnand %p357, %p358
        %p360 = pneg %p359
        // Predicated region
        $region37: #{tpu_custom_call.1} parent=35 // pred_check
          _
        $region38: #{tpu_custom_call.1} parent=35 // pred_check_branch
          %362 = sbr.rel (%p359) target = $region40
        $region39: #{tpu_custom_call.1} parent=35 // pred_region
          %v363 = vld [vmem:[%s0] sm:$0xff]
          %v364 = vld [vmem:[%s0 + $0x8] sm:$0xff]
          %v365 = vld [vmem:[%s0 + $0x10] sm:$0xff]
          %v366 = vld [vmem:[%s0 + $0x18] sm:$0xff]
          %v367 = vld [vmem:[%s0 + $0x20] sm:$0xff]
          %v368 = vld [vmem:[%s0 + $0x28] sm:$0xff]
          %v369 = vld [vmem:[%s0 + $0x30] sm:$0xff]
          %v370 = vld [vmem:[%s0 + $0x38] sm:$0xff]
          %v371 = vld [vmem:[%s0 + $0x40] sm:$0xff]
          %v372 = vld [vmem:[%s0 + $0x48] sm:$0xff]
          %v373 = vld [vmem:[%s0 + $0x50] sm:$0xff]
          %v374 = vld [vmem:[%s0 + $0x58] sm:$0xff]
          %v375 = vld [vmem:[%s0 + $0x60] sm:$0xff]
          %v376 = vld [vmem:[%s0 + $0x68] sm:$0xff]
          %v377 = vld [vmem:[%s0 + $0x70] sm:$0xff]
          %v378 = vld [vmem:[%s0 + $0x78] sm:$0xff]
          %v379 = vmul.f32 %v363, %v363
          %v380 = vmul.f32 %v364, %v364
          %v381 = vmul.f32 %v365, %v365
          %v382 = vmul.f32 %v366, %v366
          %v383 = vmul.f32 %v367, %v367
          %v384 = vmul.f32 %v368, %v368
          %v385 = vmul.f32 %v369, %v369
          %v386 = vmul.f32 %v370, %v370
          %v387 = vmul.f32 %v371, %v371
          %v388 = vmul.f32 %v372, %v372
          %v389 = vmul.f32 %v373, %v373
          %v390 = vmul.f32 %v374, %v374
          %v391 = vmul.f32 %v375, %v375
          %v392 = vmul.f32 %v376, %v376
          %v393 = vmul.f32 %v377, %v377
          %v394 = vmul.f32 %v378, %v378
          %395 = vmatprep.subr.mxu0 0.0
          %396 = vmatpush1.msra.mxu0 %v340
          %397 = vmatprep.subr.mxu0 0.0
          %398 = vmatpush1.msra.mxu0 %v339
          %399 = vmatprep.subr.mxu0 0.0
          %400 = vmatpush1.msra.mxu0 %v338
          %401 = vmatprep.subr.mxu0 0.0
          %402 = vmatpush1.msra.mxu0 %v337
          %403 = vmatprep.subr.mxu0 0.0
          %404 = vmatpush1.msra.mxu0 %v336
          %405 = vmatprep.subr.mxu0 0.0
          %406 = vmatpush1.msra.mxu0 %v335
          %407 = vmatprep.subr.mxu0 0.0
          %408 = vmatpush1.msra.mxu0 %v334
          %409 = vmatprep.subr.mxu0 0.0
          %410 = vmatpush1.msra.mxu0 %v333
          %411 = vmatprep.subr.mxu0 0.0
          %412 = vmatpush1.msra.mxu0 %v332
          %413 = vmatprep.subr.mxu0 0.0
          %414 = vmatpush1.msra.mxu0 %v331
          %415 = vmatprep.subr.mxu0 0.0
          %416 = vmatpush1.msra.mxu0 %v330
          %417 = vmatprep.subr.mxu0 0.0
          %418 = vmatpush1.msra.mxu0 %v329
          %419 = vmatprep.subr.mxu0 0.0
          %420 = vmatpush1.msra.mxu0 %v328
          %421 = vmatprep.subr.mxu0 0.0
          %422 = vmatpush1.msra.mxu0 %v327
          %423 = vmatprep.subr.mxu0 0.0
          %424 = vmatpush1.msra.mxu0 %v326
          %425 = vmatprep.subr.mxu0 0.0
          %426 = vmatpush1.msra.mxu0 %v325
          %427 = vmatprep.subr.mxu0 0.0
          %428 = vmatpush2.msra.mxu0 0.0
          %429 = vmatprep.subr.mxu0 0.0
          %430 = vmatpush2.msra.mxu0 0.0
          %431 = vmatprep.subr.mxu0 0.0
          %432 = vmatpush2.msra.mxu0 0.0
          %433 = vmatprep.subr.mxu0 0.0
          %434 = vmatpush2.msra.mxu0 0.0
          %435 = vmatprep.subr.mxu0 0.0
          %436 = vmatpush2.msra.mxu0 0.0
          %437 = vmatprep.subr.mxu0 0.0
          %438 = vmatpush2.msra.mxu0 0.0
          %439 = vmatprep.subr.mxu0 0.0
          %440 = vmatpush2.msra.mxu0 0.0
          %441 = vmatprep.subr.mxu0 0.0
          %442 = vmatpush2.msra.mxu0 0.0
          %443 = vmatprep.subr.mxu0 0.0
          %444 = vmatpush2.msra.mxu0 0.0
          %445 = vmatprep.subr.mxu0 0.0
          %446 = vmatpush2.msra.mxu0 0.0
          %447 = vmatprep.subr.mxu0 0.0
          %448 = vmatpush2.msra.mxu0 0.0
          %449 = vmatprep.subr.mxu0 0.0
          %450 = vmatpush2.msra.mxu0 0.0
          %451 = vmatprep.subr.mxu0 0.0
          %452 = vmatpush2.msra.mxu0 0.0
          %453 = vmatprep.subr.mxu0 0.0
          %454 = vmatpush2.msra.mxu0 0.0
          %455 = vmatprep.subr.mxu0 0.0
          %456 = vmatpush2.msra.mxu0 0.0
          %457 = vmatprep.subr.mxu0 0.0
          %458 = vmatpush2.msra.mxu0 0.0
          %459 = vmatprep.mubr.f32.mxu0 0.0
          %460 = vmatmul.mubr.f32.gmra.mxu0 %v379
          %v461 = vpop.f32.mrf.mxu0
          %v462 = vadd.f32 0.0, %v461
          %v463 = vpop.f32.mrf.mxu0
          %464 = vmatprep.mubr.f32.mxu0 0.0
          %465 = vmatmul.mubr.f32.gmra.mxu0 %v380
          %v466 = vpop.f32.mrf.mxu0
          %v467 = vadd.f32 0.0, %v466
          %v468 = vpop.f32.mrf.mxu0
          %469 = vmatprep.mubr.f32.mxu0 0.0
          %470 = vmatmul.mubr.f32.gmra.mxu0 %v381
          %v471 = vpop.f32.mrf.mxu0
          %v472 = vadd.f32 0.0, %v471
          %v473 = vpop.f32.mrf.mxu0
          %474 = vmatprep.mubr.f32.mxu0 0.0
          %475 = vmatmul.mubr.f32.gmra.mxu0 %v382
          %v476 = vpop.f32.mrf.mxu0
          %v477 = vadd.f32 0.0, %v476
          %v478 = vpop.f32.mrf.mxu0
          %479 = vmatprep.mubr.f32.mxu0 0.0
          %480 = vmatmul.mubr.f32.gmra.mxu0 %v383
          %v481 = vpop.f32.mrf.mxu0
          %v482 = vadd.f32 0.0, %v481
          %v483 = vpop.f32.mrf.mxu0
          %484 = vmatprep.mubr.f32.mxu0 0.0
          %485 = vmatmul.mubr.f32.gmra.mxu0 %v384
          %v486 = vpop.f32.mrf.mxu0
          %v487 = vadd.f32 0.0, %v486
          %v488 = vpop.f32.mrf.mxu0
          %489 = vmatprep.mubr.f32.mxu0 0.0
          %490 = vmatmul.mubr.f32.gmra.mxu0 %v385
          %v491 = vpop.f32.mrf.mxu0
          %v492 = vadd.f32 0.0, %v491
          %v493 = vpop.f32.mrf.mxu0
          %494 = vmatprep.mubr.f32.mxu0 0.0
          %495 = vmatmul.mubr.f32.gmra.mxu0 %v386
          %v496 = vpop.f32.mrf.mxu0
          %v497 = vadd.f32 0.0, %v496
          %v498 = vpop.f32.mrf.mxu0
          %499 = vmatprep.mubr.f32.mxu0 0.0
          %500 = vmatmul.mubr.f32.gmra.mxu0 %v387
          %v501 = vpop.f32.mrf.mxu0
          %v502 = vadd.f32 0.0, %v501
          %v503 = vpop.f32.mrf.mxu0
          %504 = vmatprep.mubr.f32.mxu0 0.0
          %505 = vmatmul.mubr.f32.gmra.mxu0 %v388
          %v506 = vpop.f32.mrf.mxu0
          %v507 = vadd.f32 0.0, %v506
          %v508 = vpop.f32.mrf.mxu0
          %509 = vmatprep.mubr.f32.mxu0 0.0
          %510 = vmatmul.mubr.f32.gmra.mxu0 %v389
          %v511 = vpop.f32.mrf.mxu0
          %v512 = vadd.f32 0.0, %v511
          %v513 = vpop.f32.mrf.mxu0
          %514 = vmatprep.mubr.f32.mxu0 0.0
          %515 = vmatmul.mubr.f32.gmra.mxu0 %v390
          %v516 = vpop.f32.mrf.mxu0
          %v517 = vadd.f32 0.0, %v516
          %v518 = vpop.f32.mrf.mxu0
          %519 = vmatprep.mubr.f32.mxu0 0.0
          %520 = vmatmul.mubr.f32.gmra.mxu0 %v391
          %v521 = vpop.f32.mrf.mxu0
          %v522 = vadd.f32 0.0, %v521
          %v523 = vpop.f32.mrf.mxu0
          %524 = vmatprep.mubr.f32.mxu0 0.0
          %525 = vmatmul.mubr.f32.gmra.mxu0 %v392
          %v526 = vpop.f32.mrf.mxu0
          %v527 = vadd.f32 0.0, %v526
          %v528 = vpop.f32.mrf.mxu0
          %529 = vmatprep.mubr.f32.mxu0 0.0
          %530 = vmatmul.mubr.f32.gmra.mxu0 %v393
          %v531 = vpop.f32.mrf.mxu0
          %v532 = vadd.f32 0.0, %v531
          %v533 = vpop.f32.mrf.mxu0
          %534 = vmatprep.mubr.f32.mxu0 0.0
          %535 = vmatmul.mubr.f32.gmra.mxu0 %v394
          %v536 = vpop.f32.mrf.mxu0
          %v537 = vadd.f32 0.0, %v536
          %v538 = vpop.f32.mrf.mxu0
          %539 = vdwg.mxu0
          %v540 = vmax.f32 %v462, 1e-24
          %v541 = vmax.f32 %v467, 1e-24
          %v542 = vmax.f32 %v472, 1e-24
          %v543 = vmax.f32 %v477, 1e-24
          %v544 = vmax.f32 %v482, 1e-24
          %v545 = vmax.f32 %v487, 1e-24
          %v546 = vmax.f32 %v492, 1e-24
          %v547 = vmax.f32 %v497, 1e-24
          %v548 = vmax.f32 %v502, 1e-24
          %v549 = vmax.f32 %v507, 1e-24
          %v550 = vmax.f32 %v512, 1e-24
          %v551 = vmax.f32 %v517, 1e-24
          %v552 = vmax.f32 %v522, 1e-24
          %v553 = vmax.f32 %v527, 1e-24
          %v554 = vmax.f32 %v532, 1e-24
          %v555 = vmax.f32 %v537, 1e-24
          %v556 = vrsqrt.pop %v540
          %v557 = vrsqrt.pop %v541
          %v558 = vrsqrt.pop %v542
          %v559 = vrsqrt.pop %v543
          %v560 = vrsqrt.pop %v544
          %v561 = vrsqrt.pop %v545
          %v562 = vrsqrt.pop %v546
          %v563 = vrsqrt.pop %v547
          %v564 = vrsqrt.pop %v548
          %v565 = vrsqrt.pop %v549
          %v566 = vrsqrt.pop %v550
          %v567 = vrsqrt.pop %v551
          %v568 = vrsqrt.pop %v552
          %v569 = vrsqrt.pop %v553
          %v570 = vrsqrt.pop %v554
          %v571 = vrsqrt.pop %v555
          %vm572 = vcmask 31744
          %v574 = vsel %vm572, %v556, 0
          %v577 = vsel %vm572, %v557, 0
          %v580 = vsel %vm572, %v558, 0
          %v583 = vsel %vm572, %v559, 0
          %v586 = vsel %vm572, %v560, 0
          %v589 = vsel %vm572, %v561, 0
          %v592 = vsel %vm572, %v562, 0
          %v595 = vsel %vm572, %v563, 0
          %v598 = vsel %vm572, %v564, 0
          %v601 = vsel %vm572, %v565, 0
          %v604 = vsel %vm572, %v566, 0
          %v607 = vsel %vm572, %v567, 0
          %v610 = vsel %vm572, %v568, 0
          %v613 = vsel %vm572, %v569, 0
          %v616 = vsel %vm572, %v570, 0
          %v619 = vsel %vm572, %v571, 0
          %vm621 = vcmask 1043456
          %v623 = vsel %vm621, %v347, 0
          %625 = vmatprep.subr.mxu0 0.0
          %626 = vmatpush1.msra.mxu0 0.0
          %627 = vmatprep.subr.mxu0 0.0
          %628 = vmatpush1.msra.mxu0 0.0
          %629 = vmatprep.subr.mxu0 0.0
          %630 = vmatpush1.msra.mxu0 0.0
          %631 = vmatprep.subr.mxu0 0.0
          %632 = vmatpush1.msra.mxu0 0.0
          %633 = vmatprep.subr.mxu0 0.0
          %634 = vmatpush1.msra.mxu0 0.0
          %635 = vmatprep.subr.mxu0 0.0
          %636 = vmatpush1.msra.mxu0 0.0
          %637 = vmatprep.subr.mxu0 0.0
          %638 = vmatpush1.msra.mxu0 0.0
          %639 = vmatprep.subr.mxu0 0.0
          %640 = vmatpush1.msra.mxu0 0.0
          %641 = vmatprep.subr.mxu0 0.0
          %642 = vmatpush1.msra.mxu0 0.0
          %643 = vmatprep.subr.mxu0 0.0
          %644 = vmatpush1.msra.mxu0 0.0
          %645 = vmatprep.subr.mxu0 0.0
          %646 = vmatpush1.msra.mxu0 0.0
          %647 = vmatprep.subr.mxu0 0.0
          %648 = vmatpush1.msra.mxu0 0.0
          %649 = vmatprep.subr.mxu0 0.0
          %650 = vmatpush1.msra.mxu0 0.0
          %651 = vmatprep.subr.mxu0 0.0
          %652 = vmatpush1.msra.mxu0 0.0
          %653 = vmatprep.subr.mxu0 0.0
          %654 = vmatpush1.msra.mxu0 0.0
          %655 = vmatprep.subr.mxu0 0.0
          %656 = vmatpush1.msra.mxu0 %v623
          %657 = vmatprep.subr.mxu0 0.0
          %658 = vmatpush2.msra.mxu0 0.0
          %659 = vmatprep.subr.mxu0 0.0
          %660 = vmatpush2.msra.mxu0 0.0
          %661 = vmatprep.subr.mxu0 0.0
          %662 = vmatpush2.msra.mxu0 0.0
          %663 = vmatprep.subr.mxu0 0.0
          %664 = vmatpush2.msra.mxu0 0.0
          %665 = vmatprep.subr.mxu0 0.0
          %666 = vmatpush2.msra.mxu0 0.0
          %667 = vmatprep.subr.mxu0 0.0
          %668 = vmatpush2.msra.mxu0 0.0
          %669 = vmatprep.subr.mxu0 0.0
          %670 = vmatpush2.msra.mxu0 0.0
          %671 = vmatprep.subr.mxu0 0.0
          %672 = vmatpush2.msra.mxu0 0.0
          %673 = vmatprep.subr.mxu0 0.0
          %674 = vmatpush2.msra.mxu0 0.0
          %675 = vmatprep.subr.mxu0 0.0
          %676 = vmatpush2.msra.mxu0 0.0
          %677 = vmatprep.subr.mxu0 0.0
          %678 = vmatpush2.msra.mxu0 0.0
          %679 = vmatprep.subr.mxu0 0.0
          %680 = vmatpush2.msra.mxu0 0.0
          %681 = vmatprep.subr.mxu0 0.0
          %682 = vmatpush2.msra.mxu0 0.0
          %683 = vmatprep.subr.mxu0 0.0
          %684 = vmatpush2.msra.mxu0 0.0
          %685 = vmatprep.subr.mxu0 0.0
          %686 = vmatpush2.msra.mxu0 0.0
          %687 = vmatprep.subr.mxu0 0.0
          %688 = vmatpush2.msra.mxu0 0.0
          %689 = vmatprep.mubr.f32.mxu0 0.0
          %690 = vmatmul.mubr.f32.gmra.mxu0 %v574
          %v691 = vpop.f32.mrf.mxu0
          %v692 = vadd.f32 0.0, %v691
          %v693 = vpop.f32.mrf.mxu0
          %694 = vmatprep.mubr.f32.mxu0 0.0
          %695 = vmatmul.mubr.f32.gmra.mxu0 %v577
          %v696 = vpop.f32.mrf.mxu0
          %v697 = vadd.f32 0.0, %v696
          %v698 = vpop.f32.mrf.mxu0
          %699 = vmatprep.mubr.f32.mxu0 0.0
          %700 = vmatmul.mubr.f32.gmra.mxu0 %v580
          %v701 = vpop.f32.mrf.mxu0
          %v702 = vadd.f32 0.0, %v701
          %v703 = vpop.f32.mrf.mxu0
          %704 = vmatprep.mubr.f32.mxu0 0.0
          %705 = vmatmul.mubr.f32.gmra.mxu0 %v583
          %v706 = vpop.f32.mrf.mxu0
          %v707 = vadd.f32 0.0, %v706
          %v708 = vpop.f32.mrf.mxu0
          %709 = vmatprep.mubr.f32.mxu0 0.0
          %710 = vmatmul.mubr.f32.gmra.mxu0 %v586
          %v711 = vpop.f32.mrf.mxu0
          %v712 = vadd.f32 0.0, %v711
          %v713 = vpop.f32.mrf.mxu0
          %714 = vmatprep.mubr.f32.mxu0 0.0
          %715 = vmatmul.mubr.f32.gmra.mxu0 %v589
          %v716 = vpop.f32.mrf.mxu0
          %v717 = vadd.f32 0.0, %v716
          %v718 = vpop.f32.mrf.mxu0
          %719 = vmatprep.mubr.f32.mxu0 0.0
          %720 = vmatmul.mubr.f32.gmra.mxu0 %v592
          %v721 = vpop.f32.mrf.mxu0
          %v722 = vadd.f32 0.0, %v721
          %v723 = vpop.f32.mrf.mxu0
          %724 = vmatprep.mubr.f32.mxu0 0.0
          %725 = vmatmul.mubr.f32.gmra.mxu0 %v595
          %v726 = vpop.f32.mrf.mxu0
          %v727 = vadd.f32 0.0, %v726
          %v728 = vpop.f32.mrf.mxu0
          %729 = vmatprep.mubr.f32.mxu0 0.0
          %730 = vmatmul.mubr.f32.gmra.mxu0 %v598
          %v731 = vpop.f32.mrf.mxu0
          %v732 = vadd.f32 0.0, %v731
          %v733 = vpop.f32.mrf.mxu0
          %734 = vmatprep.mubr.f32.mxu0 0.0
          %735 = vmatmul.mubr.f32.gmra.mxu0 %v601
          %v736 = vpop.f32.mrf.mxu0
          %v737 = vadd.f32 0.0, %v736
          %v738 = vpop.f32.mrf.mxu0
          %739 = vmatprep.mubr.f32.mxu0 0.0
          %740 = vmatmul.mubr.f32.gmra.mxu0 %v604
          %v741 = vpop.f32.mrf.mxu0
          %v742 = vadd.f32 0.0, %v741
          %v743 = vpop.f32.mrf.mxu0
          %744 = vmatprep.mubr.f32.mxu0 0.0
          %745 = vmatmul.mubr.f32.gmra.mxu0 %v607
          %v746 = vpop.f32.mrf.mxu0
          %v747 = vadd.f32 0.0, %v746
          %v748 = vpop.f32.mrf.mxu0
          %749 = vmatprep.mubr.f32.mxu0 0.0
          %750 = vmatmul.mubr.f32.gmra.mxu0 %v610
          %v751 = vpop.f32.mrf.mxu0
          %v752 = vadd.f32 0.0, %v751
          %v753 = vpop.f32.mrf.mxu0
          %754 = vmatprep.mubr.f32.mxu0 0.0
          %755 = vmatmul.mubr.f32.gmra.mxu0 %v613
          %v756 = vpop.f32.mrf.mxu0
          %v757 = vadd.f32 0.0, %v756
          %v758 = vpop.f32.mrf.mxu0
          %759 = vmatprep.mubr.f32.mxu0 0.0
          %760 = vmatmul.mubr.f32.gmra.mxu0 %v616
          %v761 = vpop.f32.mrf.mxu0
          %v762 = vadd.f32 0.0, %v761
          %v763 = vpop.f32.mrf.mxu0
          %764 = vmatprep.mubr.f32.mxu0 0.0
          %765 = vmatmul.mubr.f32.gmra.mxu0 %v619
          %v766 = vpop.f32.mrf.mxu0
          %v767 = vadd.f32 0.0, %v766
          %v768 = vpop.f32.mrf.mxu0
          %769 = vdwg.mxu0
          %v770 = vmul.f32 %v363, %v692
          %v771 = vmul.f32 %v364, %v697
          %v772 = vmul.f32 %v365, %v702
          %v773 = vmul.f32 %v366, %v707
          %v774 = vmul.f32 %v367, %v712
          %v775 = vmul.f32 %v368, %v717
          %v776 = vmul.f32 %v369, %v722
          %v777 = vmul.f32 %v370, %v727
          %v778 = vmul.f32 %v371, %v732
          %v779 = vmul.f32 %v372, %v737
          %v780 = vmul.f32 %v373, %v742
          %v781 = vmul.f32 %v374, %v747
          %v782 = vmul.f32 %v375, %v752
          %v783 = vmul.f32 %v376, %v757
          %v784 = vmul.f32 %v377, %v762
          %v785 = vmul.f32 %v378, %v767
          %786 = vst [vmem:[#allocation2] sm:$0xff] %v770
          %787 = vst [vmem:[#allocation2 + $0x8] sm:$0xff] %v771
          %788 = vst [vmem:[#allocation2 + $0x10] sm:$0xff] %v772
          %789 = vst [vmem:[#allocation2 + $0x18] sm:$0xff] %v773
          %790 = vst [vmem:[#allocation2 + $0x20] sm:$0xff] %v774
          %791 = vst [vmem:[#allocation2 + $0x28] sm:$0xff] %v775
          %792 = vst [vmem:[#allocation2 + $0x30] sm:$0xff] %v776
          %793 = vst [vmem:[#allocation2 + $0x38] sm:$0xff] %v777
          %794 = vst [vmem:[#allocation2 + $0x40] sm:$0xff] %v778
          %795 = vst [vmem:[#allocation2 + $0x48] sm:$0xff] %v779
          %796 = vst [vmem:[#allocation2 + $0x50] sm:$0xff] %v780
          %797 = vst [vmem:[#allocation2 + $0x58] sm:$0xff] %v781
          %798 = vst [vmem:[#allocation2 + $0x60] sm:$0xff] %v782
          %799 = vst [vmem:[#allocation2 + $0x68] sm:$0xff] %v783
          %800 = vst [vmem:[#allocation2 + $0x70] sm:$0xff] %v784
          %801 = vst [vmem:[#allocation2 + $0x78] sm:$0xff] %v785
          %802 = vst [vmem:[#allocation3] sm:$0xff] %v770
          %803 = vst [vmem:[#allocation3 + $0x8] sm:$0xff] %v771
          %804 = vst [vmem:[#allocation3 + $0x10] sm:$0xff] %v772
          %805 = vst [vmem:[#allocation3 + $0x18] sm:$0xff] %v773
          %806 = vst [vmem:[#allocation3 + $0x20] sm:$0xff] %v774
          %807 = vst [vmem:[#allocation3 + $0x28] sm:$0xff] %v775
          %808 = vst [vmem:[#allocation3 + $0x30] sm:$0xff] %v776
          %809 = vst [vmem:[#allocation3 + $0x38] sm:$0xff] %v777
          %810 = vst [vmem:[#allocation3 + $0x40] sm:$0xff] %v778
          %811 = vst [vmem:[#allocation3 + $0x48] sm:$0xff] %v779
          %812 = vst [vmem:[#allocation3 + $0x50] sm:$0xff] %v780
          %813 = vst [vmem:[#allocation3 + $0x58] sm:$0xff] %v781
          %814 = vst [vmem:[#allocation3 + $0x60] sm:$0xff] %v782
          %815 = vst [vmem:[#allocation3 + $0x68] sm:$0xff] %v783
          %816 = vst [vmem:[#allocation3 + $0x70] sm:$0xff] %v784
          %817 = vst [vmem:[#allocation3 + $0x78] sm:$0xff] %v785
        $region40: #{tpu_custom_call.1} parent=35 // pred_fallthru
          _
        // Predicated region
        $region41: #{tpu_custom_call.1} parent=35 // pred_check
          %p818 = pneg %p358
        $region42: #{tpu_custom_call.1} parent=35 // pred_check_branch
          %820 = sbr.rel (%p818) target = $region44
        $region43: #{tpu_custom_call.1} parent=35 // pred_region
          %821 = vst [vmem:[#allocation4] sm:$0xff] 0.0
          %822 = vst [vmem:[#allocation4 + $0x8] sm:$0xff] 0.0
          %823 = vst [vmem:[#allocation4 + $0x10] sm:$0xff] 0.0
          %824 = vst [vmem:[#allocation4 + $0x18] sm:$0xff] 0.0
          %825 = vst [vmem:[#allocation4 + $0x20] sm:$0xff] 0.0
          %826 = vst [vmem:[#allocation4 + $0x28] sm:$0xff] 0.0
          %827 = vst [vmem:[#allocation4 + $0x30] sm:$0xff] 0.0
          %828 = vst [vmem:[#allocation4 + $0x38] sm:$0xff] 0.0
          %829 = vst [vmem:[#allocation4 + $0x40] sm:$0xff] 0.0
          %830 = vst [vmem:[#allocation4 + $0x48] sm:$0xff] 0.0
          %831 = vst [vmem:[#allocation4 + $0x50] sm:$0xff] 0.0
          %832 = vst [vmem:[#allocation4 + $0x58] sm:$0xff] 0.0
          %833 = vst [vmem:[#allocation4 + $0x60] sm:$0xff] 0.0
          %834 = vst [vmem:[#allocation4 + $0x68] sm:$0xff] 0.0
          %835 = vst [vmem:[#allocation4 + $0x70] sm:$0xff] 0.0
          %836 = vst [vmem:[#allocation4 + $0x78] sm:$0xff] 0.0
        $region44: #{tpu_custom_call.1} parent=35 // pred_fallthru
          _
        // Predicated region
        $region45: #{tpu_custom_call.1} parent=35 // pred_check
          %p837 = pneg %p357
        $region46: #{tpu_custom_call.1} parent=35 // pred_check_branch
          %839 = sbr.rel (%p837) target = $region48
        $region47: #{tpu_custom_call.1} parent=35 // pred_region
          %v840 = vld [vmem:[%s226] sm:$0xff]
          %v841 = vld [vmem:[%s226 + $0x8] sm:$0xff]
          %v842 = vld [vmem:[%s226 + $0x10] sm:$0xff]
          %v843 = vld [vmem:[%s226 + $0x18] sm:$0xff]
          %v844 = vld [vmem:[%s226 + $0x20] sm:$0xff]
          %v845 = vld [vmem:[%s226 + $0x28] sm:$0xff]
          %v846 = vld [vmem:[%s226 + $0x30] sm:$0xff]
          %v847 = vld [vmem:[%s226 + $0x38] sm:$0xff]
          %v848 = vld [vmem:[%s226 + $0x40] sm:$0xff]
          %v849 = vld [vmem:[%s226 + $0x48] sm:$0xff]
          %v850 = vld [vmem:[%s226 + $0x50] sm:$0xff]
          %v851 = vld [vmem:[%s226 + $0x58] sm:$0xff]
          %v852 = vld [vmem:[%s226 + $0x60] sm:$0xff]
          %v853 = vld [vmem:[%s226 + $0x68] sm:$0xff]
          %v854 = vld [vmem:[%s226 + $0x70] sm:$0xff]
          %v855 = vld [vmem:[%s226 + $0x78] sm:$0xff]
          %v856 = vld [vmem:[%s226 + $0x80] sm:$0xff]
          %v857 = vld [vmem:[%s226 + $0x88] sm:$0xff]
          %v858 = vld [vmem:[%s226 + $0x90] sm:$0xff]
          %v859 = vld [vmem:[%s226 + $0x98] sm:$0xff]
          %v860 = vld [vmem:[%s226 + $0xa0] sm:$0xff]
          %v861 = vld [vmem:[%s226 + $0xa8] sm:$0xff]
          %v862 = vld [vmem:[%s226 + $0xb0] sm:$0xff]
          %v863 = vld [vmem:[%s226 + $0xb8] sm:$0xff]
          %v864 = vld [vmem:[%s226 + $0xc0] sm:$0xff]
          %v865 = vld [vmem:[%s226 + $0xc8] sm:$0xff]
          %v866 = vld [vmem:[%s226 + $0xd0] sm:$0xff]
          %v867 = vld [vmem:[%s226 + $0xd8] sm:$0xff]
          %v868 = vld [vmem:[%s226 + $0xe0] sm:$0xff]
          %v869 = vld [vmem:[%s226 + $0xe8] sm:$0xff]
          %v870 = vld [vmem:[%s226 + $0xf0] sm:$0xff]
          %v871 = vld [vmem:[%s226 + $0xf8] sm:$0xff]
          %v872 = vld [vmem:[%s226 + $0x100] sm:$0xff]
          %v873 = vld [vmem:[%s226 + $0x108] sm:$0xff]
          %v874 = vld [vmem:[%s226 + $0x110] sm:$0xff]
          %v875 = vld [vmem:[%s226 + $0x118] sm:$0xff]
          %v876 = vld [vmem:[%s226 + $0x120] sm:$0xff]
          %v877 = vld [vmem:[%s226 + $0x128] sm:$0xff]
          %v878 = vld [vmem:[%s226 + $0x130] sm:$0xff]
          %v879 = vld [vmem:[%s226 + $0x138] sm:$0xff]
          %v880 = vld [vmem:[%s226 + $0x140] sm:$0xff]
          %v881 = vld [vmem:[%s226 + $0x148] sm:$0xff]
          %v882 = vld [vmem:[%s226 + $0x150] sm:$0xff]
          %v883 = vld [vmem:[%s226 + $0x158] sm:$0xff]
          %v884 = vld [vmem:[%s226 + $0x160] sm:$0xff]
          %v885 = vld [vmem:[%s226 + $0x168] sm:$0xff]
          %v886 = vld [vmem:[%s226 + $0x170] sm:$0xff]
          %v887 = vld [vmem:[%s226 + $0x178] sm:$0xff]
          %v888 = vld [vmem:[%s226 + $0x180] sm:$0xff]
          %v889 = vld [vmem:[%s226 + $0x188] sm:$0xff]
          %v890 = vld [vmem:[%s226 + $0x190] sm:$0xff]
          %v891 = vld [vmem:[%s226 + $0x198] sm:$0xff]
          %v892 = vld [vmem:[%s226 + $0x1a0] sm:$0xff]
          %v893 = vld [vmem:[%s226 + $0x1a8] sm:$0xff]
          %v894 = vld [vmem:[%s226 + $0x1b0] sm:$0xff]
          %v895 = vld [vmem:[%s226 + $0x1b8] sm:$0xff]
          %v896 = vld [vmem:[%s226 + $0x1c0] sm:$0xff]
          %v897 = vld [vmem:[%s226 + $0x1c8] sm:$0xff]
          %v898 = vld [vmem:[%s226 + $0x1d0] sm:$0xff]
          %v899 = vld [vmem:[%s226 + $0x1d8] sm:$0xff]
          %v900 = vld [vmem:[%s226 + $0x1e0] sm:$0xff]
          %v901 = vld [vmem:[%s226 + $0x1e8] sm:$0xff]
          %v902 = vld [vmem:[%s226 + $0x1f0] sm:$0xff]
          %v903 = vld [vmem:[%s226 + $0x1f8] sm:$0xff]
          %904 = vset.pattern.permute.xlu0 0
          %905 = vperm.xlu0 %904, %v840
          %v906 = vpop.permute.xlu0 %905
          %907 = vset.pattern.permute.xlu0 0
          %908 = vperm.xlu0 %907, %v841
          %v909 = vpop.permute.xlu0 %908
          %910 = vset.pattern.permute.xlu0 0
          %911 = vperm.xlu0 %910, %v842
          %v912 = vpop.permute.xlu0 %911
          %913 = vset.pattern.permute.xlu0 0
          %914 = vperm.xlu0 %913, %v843
          %v915 = vpop.permute.xlu0 %914
          %916 = vset.pattern.permute.xlu0 0
          %917 = vperm.xlu0 %916, %v844
          %v918 = vpop.permute.xlu0 %917
          %919 = vset.pattern.permute.xlu0 0
          %920 = vperm.xlu0 %919, %v845
          %v921 = vpop.permute.xlu0 %920
          %922 = vset.pattern.permute.xlu0 0
          %923 = vperm.xlu0 %922, %v846
          %v924 = vpop.permute.xlu0 %923
          %925 = vset.pattern.permute.xlu0 0
          %926 = vperm.xlu0 %925, %v847
          %v927 = vpop.permute.xlu0 %926
          %928 = vset.pattern.permute.xlu0 0
          %929 = vperm.xlu0 %928, %v848
          %v930 = vpop.permute.xlu0 %929
          %931 = vset.pattern.permute.xlu0 0
          %932 = vperm.xlu0 %931, %v849
          %v933 = vpop.permute.xlu0 %932
          %934 = vset.pattern.permute.xlu0 0
          %935 = vperm.xlu0 %934, %v850
          %v936 = vpop.permute.xlu0 %935
          %937 = vset.pattern.permute.xlu0 0
          %938 = vperm.xlu0 %937, %v851
          %v939 = vpop.permute.xlu0 %938
          %940 = vset.pattern.permute.xlu0 0
          %941 = vperm.xlu0 %940, %v852
          %v942 = vpop.permute.xlu0 %941
          %943 = vset.pattern.permute.xlu0 0
          %944 = vperm.xlu0 %943, %v853
          %v945 = vpop.permute.xlu0 %944
          %946 = vset.pattern.permute.xlu0 0
          %947 = vperm.xlu0 %946, %v854
          %v948 = vpop.permute.xlu0 %947
          %949 = vset.pattern.permute.xlu0 0
          %950 = vperm.xlu0 %949, %v855
          %v951 = vpop.permute.xlu0 %950
          %952 = vset.pattern.permute.xlu0 0
          %953 = vperm.xlu0 %952, %v856
          %v954 = vpop.permute.xlu0 %953
          %955 = vset.pattern.permute.xlu0 0
          %956 = vperm.xlu0 %955, %v857
          %v957 = vpop.permute.xlu0 %956
          %958 = vset.pattern.permute.xlu0 0
          %959 = vperm.xlu0 %958, %v858
          %v960 = vpop.permute.xlu0 %959
          %961 = vset.pattern.permute.xlu0 0
          %962 = vperm.xlu0 %961, %v859
          %v963 = vpop.permute.xlu0 %962
          %964 = vset.pattern.permute.xlu0 0
          %965 = vperm.xlu0 %964, %v860
          %v966 = vpop.permute.xlu0 %965
          %967 = vset.pattern.permute.xlu0 0
          %968 = vperm.xlu0 %967, %v861
          %v969 = vpop.permute.xlu0 %968
          %970 = vset.pattern.permute.xlu0 0
          %971 = vperm.xlu0 %970, %v862
          %v972 = vpop.permute.xlu0 %971
          %973 = vset.pattern.permute.xlu0 0
          %974 = vperm.xlu0 %973, %v863
          %v975 = vpop.permute.xlu0 %974
          %976 = vset.pattern.permute.xlu0 0
          %977 = vperm.xlu0 %976, %v864
          %v978 = vpop.permute.xlu0 %977
          %979 = vset.pattern.permute.xlu0 0
          %980 = vperm.xlu0 %979, %v865
          %v981 = vpop.permute.xlu0 %980
          %982 = vset.pattern.permute.xlu0 0
          %983 = vperm.xlu0 %982, %v866
          %v984 = vpop.permute.xlu0 %983
          %985 = vset.pattern.permute.xlu0 0
          %986 = vperm.xlu0 %985, %v867
          %v987 = vpop.permute.xlu0 %986
          %988 = vset.pattern.permute.xlu0 0
          %989 = vperm.xlu0 %988, %v868
          %v990 = vpop.permute.xlu0 %989
          %991 = vset.pattern.permute.xlu0 0
          %992 = vperm.xlu0 %991, %v869
          %v993 = vpop.permute.xlu0 %992
          %994 = vset.pattern.permute.xlu0 0
          %995 = vperm.xlu0 %994, %v870
          %v996 = vpop.permute.xlu0 %995
          %997 = vset.pattern.permute.xlu0 0
          %998 = vperm.xlu0 %997, %v871
          %v999 = vpop.permute.xlu0 %998
          %1000 = vset.pattern.permute.xlu0 0
          %1001 = vperm.xlu0 %1000, %v872
          %v1002 = vpop.permute.xlu0 %1001
          %1003 = vset.pattern.permute.xlu0 0
          %1004 = vperm.xlu0 %1003, %v873
          %v1005 = vpop.permute.xlu0 %1004
          %1006 = vset.pattern.permute.xlu0 0
          %1007 = vperm.xlu0 %1006, %v874
          %v1008 = vpop.permute.xlu0 %1007
          %1009 = vset.pattern.permute.xlu0 0
          %1010 = vperm.xlu0 %1009, %v875
          %v1011 = vpop.permute.xlu0 %1010
          %1012 = vset.pattern.permute.xlu0 0
          %1013 = vperm.xlu0 %1012, %v876
          %v1014 = vpop.permute.xlu0 %1013
          %1015 = vset.pattern.permute.xlu0 0
          %1016 = vperm.xlu0 %1015, %v877
          %v1017 = vpop.permute.xlu0 %1016
          %1018 = vset.pattern.permute.xlu0 0
          %1019 = vperm.xlu0 %1018, %v878
          %v1020 = vpop.permute.xlu0 %1019
          %1021 = vset.pattern.permute.xlu0 0
          %1022 = vperm.xlu0 %1021, %v879
          %v1023 = vpop.permute.xlu0 %1022
          %1024 = vset.pattern.permute.xlu0 0
          %1025 = vperm.xlu0 %1024, %v880
          %v1026 = vpop.permute.xlu0 %1025
          %1027 = vset.pattern.permute.xlu0 0
          %1028 = vperm.xlu0 %1027, %v881
          %v1029 = vpop.permute.xlu0 %1028
          %1030 = vset.pattern.permute.xlu0 0
          %1031 = vperm.xlu0 %1030, %v882
          %v1032 = vpop.permute.xlu0 %1031
          %1033 = vset.pattern.permute.xlu0 0
          %1034 = vperm.xlu0 %1033, %v883
          %v1035 = vpop.permute.xlu0 %1034
          %1036 = vset.pattern.permute.xlu0 0
          %1037 = vperm.xlu0 %1036, %v884
          %v1038 = vpop.permute.xlu0 %1037
          %1039 = vset.pattern.permute.xlu0 0
          %1040 = vperm.xlu0 %1039, %v885
          %v1041 = vpop.permute.xlu0 %1040
          %1042 = vset.pattern.permute.xlu0 0
          %1043 = vperm.xlu0 %1042, %v886
          %v1044 = vpop.permute.xlu0 %1043
          %1045 = vset.pattern.permute.xlu0 0
          %1046 = vperm.xlu0 %1045, %v887
          %v1047 = vpop.permute.xlu0 %1046
          %1048 = vset.pattern.permute.xlu0 0
          %1049 = vperm.xlu0 %1048, %v888
          %v1050 = vpop.permute.xlu0 %1049
          %1051 = vset.pattern.permute.xlu0 0
          %1052 = vperm.xlu0 %1051, %v889
          %v1053 = vpop.permute.xlu0 %1052
          %1054 = vset.pattern.permute.xlu0 0
          %1055 = vperm.xlu0 %1054, %v890
          %v1056 = vpop.permute.xlu0 %1055
          %1057 = vset.pattern.permute.xlu0 0
          %1058 = vperm.xlu0 %1057, %v891
          %v1059 = vpop.permute.xlu0 %1058
          %1060 = vset.pattern.permute.xlu0 0
          %1061 = vperm.xlu0 %1060, %v892
          %v1062 = vpop.permute.xlu0 %1061
          %1063 = vset.pattern.permute.xlu0 0
          %1064 = vperm.xlu0 %1063, %v893
          %v1065 = vpop.permute.xlu0 %1064
          %1066 = vset.pattern.permute.xlu0 0
          %1067 = vperm.xlu0 %1066, %v894
          %v1068 = vpop.permute.xlu0 %1067
          %1069 = vset.pattern.permute.xlu0 0
          %1070 = vperm.xlu0 %1069, %v895
          %v1071 = vpop.permute.xlu0 %1070
          %1072 = vset.pattern.permute.xlu0 0
          %1073 = vperm.xlu0 %1072, %v896
          %v1074 = vpop.permute.xlu0 %1073
          %1075 = vset.pattern.permute.xlu0 0
          %1076 = vperm.xlu0 %1075, %v897
          %v1077 = vpop.permute.xlu0 %1076
          %1078 = vset.pattern.permute.xlu0 0
          %1079 = vperm.xlu0 %1078, %v898
          %v1080 = vpop.permute.xlu0 %1079
          %1081 = vset.pattern.permute.xlu0 0
          %1082 = vperm.xlu0 %1081, %v899
          %v1083 = vpop.permute.xlu0 %1082
          %1084 = vset.pattern.permute.xlu0 0
          %1085 = vperm.xlu0 %1084, %v900
          %v1086 = vpop.permute.xlu0 %1085
          %1087 = vset.pattern.permute.xlu0 0
          %1088 = vperm.xlu0 %1087, %v901
          %v1089 = vpop.permute.xlu0 %1088
          %1090 = vset.pattern.permute.xlu0 0
          %1091 = vperm.xlu0 %1090, %v902
          %v1092 = vpop.permute.xlu0 %1091
          %1093 = vset.pattern.permute.xlu0 0
          %1094 = vperm.xlu0 %1093, %v903
          %v1095 = vpop.permute.xlu0 %1094
          %vm1096 = vcmp.eq.s32.totalorder %v258, %v906
          %vm1097 = vcmp.eq.s32.totalorder %v258, %v909
          %vm1098 = vcmp.eq.s32.totalorder %v258, %v912
          %vm1099 = vcmp.eq.s32.totalorder %v258, %v915
          %vm1100 = vcmp.eq.s32.totalorder %v258, %v918
          %vm1101 = vcmp.eq.s32.totalorder %v258, %v921
          %vm1102 = vcmp.eq.s32.totalorder %v258, %v924
          %vm1103 = vcmp.eq.s32.totalorder %v258, %v927
          %vm1104 = vcmp.eq.s32.totalorder %v258, %v930
          %vm1105 = vcmp.eq.s32.totalorder %v258, %v933
          %vm1106 = vcmp.eq.s32.totalorder %v258, %v936
          %vm1107 = vcmp.eq.s32.totalorder %v258, %v939
          %vm1108 = vcmp.eq.s32.totalorder %v258, %v942
          %vm1109 = vcmp.eq.s32.totalorder %v258, %v945
          %vm1110 = vcmp.eq.s32.totalorder %v258, %v948
          %vm1111 = vcmp.eq.s32.totalorder %v258, %v951
          %vm1112 = vcmp.eq.s32.totalorder %v258, %v954
          %vm1113 = vcmp.eq.s32.totalorder %v258, %v957
          %vm1114 = vcmp.eq.s32.totalorder %v258, %v960
          %vm1115 = vcmp.eq.s32.totalorder %v258, %v963
          %vm1116 = vcmp.eq.s32.totalorder %v258, %v966
          %vm1117 = vcmp.eq.s32.totalorder %v258, %v969
          %vm1118 = vcmp.eq.s32.totalorder %v258, %v972
          %vm1119 = vcmp.eq.s32.totalorder %v258, %v975
          %vm1120 = vcmp.eq.s32.totalorder %v258, %v978
          %vm1121 = vcmp.eq.s32.totalorder %v258, %v981
          %vm1122 = vcmp.eq.s32.totalorder %v258, %v984
          %vm1123 = vcmp.eq.s32.totalorder %v258, %v987
          %vm1124 = vcmp.eq.s32.totalorder %v258, %v990
          %vm1125 = vcmp.eq.s32.totalorder %v258, %v993
          %vm1126 = vcmp.eq.s32.totalorder %v258, %v996
          %vm1127 = vcmp.eq.s32.totalorder %v258, %v999
          %vm1128 = vcmp.eq.s32.totalorder %v258, %v1002
          %vm1129 = vcmp.eq.s32.totalorder %v258, %v1005
          %vm1130 = vcmp.eq.s32.totalorder %v258, %v1008
          %vm1131 = vcmp.eq.s32.totalorder %v258, %v1011
          %vm1132 = vcmp.eq.s32.totalorder %v258, %v1014
          %vm1133 = vcmp.eq.s32.totalorder %v258, %v1017
          %vm1134 = vcmp.eq.s32.totalorder %v258, %v1020
          %vm1135 = vcmp.eq.s32.totalorder %v258, %v1023
          %vm1136 = vcmp.eq.s32.totalorder %v258, %v1026
          %vm1137 = vcmp.eq.s32.totalorder %v258, %v1029
          %vm1138 = vcmp.eq.s32.totalorder %v258, %v1032
          %vm1139 = vcmp.eq.s32.totalorder %v258, %v1035
          %vm1140 = vcmp.eq.s32.totalorder %v258, %v1038
          %vm1141 = vcmp.eq.s32.totalorder %v258, %v1041
          %vm1142 = vcmp.eq.s32.totalorder %v258, %v1044
          %vm1143 = vcmp.eq.s32.totalorder %v258, %v1047
          %vm1144 = vcmp.eq.s32.totalorder %v258, %v1050
          %vm1145 = vcmp.eq.s32.totalorder %v258, %v1053
          %vm1146 = vcmp.eq.s32.totalorder %v258, %v1056
          %vm1147 = vcmp.eq.s32.totalorder %v258, %v1059
          %vm1148 = vcmp.eq.s32.totalorder %v258, %v1062
          %vm1149 = vcmp.eq.s32.totalorder %v258, %v1065
          %vm1150 = vcmp.eq.s32.totalorder %v258, %v1068
          %vm1151 = vcmp.eq.s32.totalorder %v258, %v1071
          %vm1152 = vcmp.eq.s32.totalorder %v258, %v1074
          %vm1153 = vcmp.eq.s32.totalorder %v258, %v1077
          %vm1154 = vcmp.eq.s32.totalorder %v258, %v1080
          %vm1155 = vcmp.eq.s32.totalorder %v258, %v1083
          %vm1156 = vcmp.eq.s32.totalorder %v258, %v1086
          %vm1157 = vcmp.eq.s32.totalorder %v258, %v1089
          %vm1158 = vcmp.eq.s32.totalorder %v258, %v1092
          %vm1159 = vcmp.eq.s32.totalorder %v258, %v1095
          %v1160 = vsel %vm1096, 1, 0
          %v1161 = vsel %vm1097, 1, 0
          %v1162 = vsel %vm1098, 1, 0
          %v1163 = vsel %vm1099, 1, 0
          %v1164 = vsel %vm1100, 1, 0
          %v1165 = vsel %vm1101, 1, 0
          %v1166 = vsel %vm1102, 1, 0
          %v1167 = vsel %vm1103, 1, 0
          %v1168 = vsel %vm1104, 1, 0
          %v1169 = vsel %vm1105, 1, 0
          %v1170 = vsel %vm1106, 1, 0
          %v1171 = vsel %vm1107, 1, 0
          %v1172 = vsel %vm1108, 1, 0
          %v1173 = vsel %vm1109, 1, 0
          %v1174 = vsel %vm1110, 1, 0
          %v1175 = vsel %vm1111, 1, 0
          %v1176 = vsel %vm1112, 1, 0
          %v1177 = vsel %vm1113, 1, 0
          %v1178 = vsel %vm1114, 1, 0
          %v1179 = vsel %vm1115, 1, 0
          %v1180 = vsel %vm1116, 1, 0
          %v1181 = vsel %vm1117, 1, 0
          %v1182 = vsel %vm1118, 1, 0
          %v1183 = vsel %vm1119, 1, 0
          %v1184 = vsel %vm1120, 1, 0
          %v1185 = vsel %vm1121, 1, 0
          %v1186 = vsel %vm1122, 1, 0
          %v1187 = vsel %vm1123, 1, 0
          %v1188 = vsel %vm1124, 1, 0
          %v1189 = vsel %vm1125, 1, 0
          %v1190 = vsel %vm1126, 1, 0
          %v1191 = vsel %vm1127, 1, 0
          %v1192 = vsel %vm1128, 1, 0
          %v1193 = vsel %vm1129, 1, 0
          %v1194 = vsel %vm1130, 1, 0
          %v1195 = vsel %vm1131, 1, 0
          %v1196 = vsel %vm1132, 1, 0
          %v1197 = vsel %vm1133, 1, 0
          %v1198 = vsel %vm1134, 1, 0
          %v1199 = vsel %vm1135, 1, 0
          %v1200 = vsel %vm1136, 1, 0
          %v1201 = vsel %vm1137, 1, 0
          %v1202 = vsel %vm1138, 1, 0
          %v1203 = vsel %vm1139, 1, 0
          %v1204 = vsel %vm1140, 1, 0
          %v1205 = vsel %vm1141, 1, 0
          %v1206 = vsel %vm1142, 1, 0
          %v1207 = vsel %vm1143, 1, 0
          %v1208 = vsel %vm1144, 1, 0
          %v1209 = vsel %vm1145, 1, 0
          %v1210 = vsel %vm1146, 1, 0
          %v1211 = vsel %vm1147, 1, 0
          %v1212 = vsel %vm1148, 1, 0
          %v1213 = vsel %vm1149, 1, 0
          %v1214 = vsel %vm1150, 1, 0
          %v1215 = vsel %vm1151, 1, 0
          %v1216 = vsel %vm1152, 1, 0
          %v1217 = vsel %vm1153, 1, 0
          %v1218 = vsel %vm1154, 1, 0
          %v1219 = vsel %vm1155, 1, 0
          %v1220 = vsel %vm1156, 1, 0
          %v1221 = vsel %vm1157, 1, 0
          %v1222 = vsel %vm1158, 1, 0
          %v1223 = vsel %vm1159, 1, 0
          %v1224 = vcvt.s32.f32 %v1160
          %v1225 = vcvt.s32.f32 %v1161
          %v1226 = vcvt.s32.f32 %v1162
          %v1227 = vcvt.s32.f32 %v1163
          %v1228 = vcvt.s32.f32 %v1164
          %v1229 = vcvt.s32.f32 %v1165
          %v1230 = vcvt.s32.f32 %v1166
          %v1231 = vcvt.s32.f32 %v1167
          %v1232 = vcvt.s32.f32 %v1168
          %v1233 = vcvt.s32.f32 %v1169
          %v1234 = vcvt.s32.f32 %v1170
          %v1235 = vcvt.s32.f32 %v1171
          %v1236 = vcvt.s32.f32 %v1172
          %v1237 = vcvt.s32.f32 %v1173
          %v1238 = vcvt.s32.f32 %v1174
          %v1239 = vcvt.s32.f32 %v1175
          %v1240 = vcvt.s32.f32 %v1176
          %v1241 = vcvt.s32.f32 %v1177
          %v1242 = vcvt.s32.f32 %v1178
          %v1243 = vcvt.s32.f32 %v1179
          %v1244 = vcvt.s32.f32 %v1180
          %v1245 = vcvt.s32.f32 %v1181
          %v1246 = vcvt.s32.f32 %v1182
          %v1247 = vcvt.s32.f32 %v1183
          %v1248 = vcvt.s32.f32 %v1184
          %v1249 = vcvt.s32.f32 %v1185
          %v1250 = vcvt.s32.f32 %v1186
          %v1251 = vcvt.s32.f32 %v1187
          %v1252 = vcvt.s32.f32 %v1188
          %v1253 = vcvt.s32.f32 %v1189
          %v1254 = vcvt.s32.f32 %v1190
          %v1255 = vcvt.s32.f32 %v1191
          %v1256 = vcvt.s32.f32 %v1192
          %v1257 = vcvt.s32.f32 %v1193
          %v1258 = vcvt.s32.f32 %v1194
          %v1259 = vcvt.s32.f32 %v1195
          %v1260 = vcvt.s32.f32 %v1196
          %v1261 = vcvt.s32.f32 %v1197
          %v1262 = vcvt.s32.f32 %v1198
          %v1263 = vcvt.s32.f32 %v1199
          %v1264 = vcvt.s32.f32 %v1200
          %v1265 = vcvt.s32.f32 %v1201
          %v1266 = vcvt.s32.f32 %v1202
          %v1267 = vcvt.s32.f32 %v1203
          %v1268 = vcvt.s32.f32 %v1204
          %v1269 = vcvt.s32.f32 %v1205
          %v1270 = vcvt.s32.f32 %v1206
          %v1271 = vcvt.s32.f32 %v1207
          %v1272 = vcvt.s32.f32 %v1208
          %v1273 = vcvt.s32.f32 %v1209
          %v1274 = vcvt.s32.f32 %v1210
          %v1275 = vcvt.s32.f32 %v1211
          %v1276 = vcvt.s32.f32 %v1212
          %v1277 = vcvt.s32.f32 %v1213
          %v1278 = vcvt.s32.f32 %v1214
          %v1279 = vcvt.s32.f32 %v1215
          %v1280 = vcvt.s32.f32 %v1216
          %v1281 = vcvt.s32.f32 %v1217
          %v1282 = vcvt.s32.f32 %v1218
          %v1283 = vcvt.s32.f32 %v1219
          %v1284 = vcvt.s32.f32 %v1220
          %v1285 = vcvt.s32.f32 %v1221
          %v1286 = vcvt.s32.f32 %v1222
          %v1287 = vcvt.s32.f32 %v1223
          %v1288 = vpack.c.bf16 %v1225, %v1224
          %v1289 = vpack.c.bf16 %v1227, %v1226
          %v1290 = vpack.c.bf16 %v1229, %v1228
          %v1291 = vpack.c.bf16 %v1231, %v1230
          %v1292 = vpack.c.bf16 %v1233, %v1232
          %v1293 = vpack.c.bf16 %v1235, %v1234
          %v1294 = vpack.c.bf16 %v1237, %v1236
          %v1295 = vpack.c.bf16 %v1239, %v1238
          %v1296 = vpack.c.bf16 %v1241, %v1240
          %v1297 = vpack.c.bf16 %v1243, %v1242
          %v1298 = vpack.c.bf16 %v1245, %v1244
          %v1299 = vpack.c.bf16 %v1247, %v1246
          %v1300 = vpack.c.bf16 %v1249, %v1248
          %v1301 = vpack.c.bf16 %v1251, %v1250
          %v1302 = vpack.c.bf16 %v1253, %v1252
          %v1303 = vpack.c.bf16 %v1255, %v1254
          %v1304 = vpack.c.bf16 %v1257, %v1256
          %v1305 = vpack.c.bf16 %v1259, %v1258
          %v1306 = vpack.c.bf16 %v1261, %v1260
          %v1307 = vpack.c.bf16 %v1263, %v1262
          %v1308 = vpack.c.bf16 %v1265, %v1264
          %v1309 = vpack.c.bf16 %v1267, %v1266
          %v1310 = vpack.c.bf16 %v1269, %v1268
          %v1311 = vpack.c.bf16 %v1271, %v1270
          %v1312 = vpack.c.bf16 %v1273, %v1272
          %v1313 = vpack.c.bf16 %v1275, %v1274
          %v1314 = vpack.c.bf16 %v1277, %v1276
          %v1315 = vpack.c.bf16 %v1279, %v1278
          %v1316 = vpack.c.bf16 %v1281, %v1280
          %v1317 = vpack.c.bf16 %v1283, %v1282
          %v1318 = vpack.c.bf16 %v1285, %v1284
          %v1319 = vpack.c.bf16 %v1287, %v1286
          %v1320 = vld [vmem:[#allocation2] sm:$0xff]
          %v1321 = vld [vmem:[#allocation2 + $0x8] sm:$0xff]
          %v1322 = vld [vmem:[#allocation2 + $0x10] sm:$0xff]
          %v1323 = vld [vmem:[#allocation2 + $0x18] sm:$0xff]
          %v1324 = vld [vmem:[#allocation2 + $0x20] sm:$0xff]
          %v1325 = vld [vmem:[#allocation2 + $0x28] sm:$0xff]
          %v1326 = vld [vmem:[#allocation2 + $0x30] sm:$0xff]
          %v1327 = vld [vmem:[#allocation2 + $0x38] sm:$0xff]
          %v1328 = vld [vmem:[#allocation2 + $0x40] sm:$0xff]
          %v1329 = vld [vmem:[#allocation2 + $0x48] sm:$0xff]
          %v1330 = vld [vmem:[#allocation2 + $0x50] sm:$0xff]
          %v1331 = vld [vmem:[#allocation2 + $0x58] sm:$0xff]
          %v1332 = vld [vmem:[#allocation2 + $0x60] sm:$0xff]
          %v1333 = vld [vmem:[#allocation2 + $0x68] sm:$0xff]
          %v1334 = vld [vmem:[#allocation2 + $0x70] sm:$0xff]
          %v1335 = vld [vmem:[#allocation2 + $0x78] sm:$0xff]
          %v1336 = vpack.c.bf16 %v1321, %v1320
          %v1337 = vpack.c.bf16 %v1323, %v1322
          %v1338 = vpack.c.bf16 %v1325, %v1324
          %v1339 = vpack.c.bf16 %v1327, %v1326
          %v1340 = vpack.c.bf16 %v1329, %v1328
          %v1341 = vpack.c.bf16 %v1331, %v1330
          %v1342 = vpack.c.bf16 %v1333, %v1332
          %v1343 = vpack.c.bf16 %v1335, %v1334
          %1344 = vmatprep.subr.bf16.mxu0 0
          %1345 = vmatpush1.bf16.msra.mxu0 %v1343
          %1346 = vmatprep.subr.bf16.mxu0 0
          %1347 = vmatpush1.bf16.msra.mxu0 %v1342
          %1348 = vmatprep.subr.bf16.mxu0 0
          %1349 = vmatpush1.bf16.msra.mxu0 %v1341
          %1350 = vmatprep.subr.bf16.mxu0 0
          %1351 = vmatpush1.bf16.msra.mxu0 %v1340
          %1352 = vmatprep.subr.bf16.mxu0 0
          %1353 = vmatpush1.bf16.msra.mxu0 %v1339
          %1354 = vmatprep.subr.bf16.mxu0 0
          %1355 = vmatpush1.bf16.msra.mxu0 %v1338
          %1356 = vmatprep.subr.bf16.mxu0 0
          %1357 = vmatpush1.bf16.msra.mxu0 %v1337
          %1358 = vmatprep.subr.bf16.mxu0 0
          %1359 = vmatpush1.bf16.msra.mxu0 %v1336
          %1360 = vmatprep.subr.bf16.mxu0 0
          %1361 = vmatpush2.bf16.msra.mxu0 0
          %1362 = vmatprep.subr.bf16.mxu0 0
          %1363 = vmatpush2.bf16.msra.mxu0 0
          %1364 = vmatprep.subr.bf16.mxu0 0
          %1365 = vmatpush2.bf16.msra.mxu0 0
          %1366 = vmatprep.subr.bf16.mxu0 0
          %1367 = vmatpush2.bf16.msra.mxu0 0
          %1368 = vmatprep.subr.bf16.mxu0 0
          %1369 = vmatpush2.bf16.msra.mxu0 0
          %1370 = vmatprep.subr.bf16.mxu0 0
          %1371 = vmatpush2.bf16.msra.mxu0 0
          %1372 = vmatprep.subr.bf16.mxu0 0
          %1373 = vmatpush2.bf16.msra.mxu0 0
          %1374 = vmatprep.subr.bf16.mxu0 0
          %1375 = vmatpush2.bf16.msra.mxu0 0
          %1376 = vmatprep.mubr.bf16.mxu0 0
          %1377 = vmatmul.mubr.bf16.gmra.mxu0 %v1288
          %v1378 = vpop.f32.mrf.mxu0
          %v1379 = vadd.f32 0.0, %v1378
          %v1380 = vpop.f32.mrf.mxu0
          %v1381 = vpop.f32.mrf.mxu0
          %v1382 = vadd.f32 0.0, %v1381
          %v1383 = vpop.f32.mrf.mxu0
          %1384 = vmatprep.mubr.bf16.mxu0 0
          %1385 = vmatmul.mubr.bf16.gmra.mxu0 %v1289
          %v1386 = vpop.f32.mrf.mxu0
          %v1387 = vadd.f32 0.0, %v1386
          %v1388 = vpop.f32.mrf.mxu0
          %v1389 = vpop.f32.mrf.mxu0
          %v1390 = vadd.f32 0.0, %v1389
          %v1391 = vpop.f32.mrf.mxu0
          %1392 = vmatprep.mubr.bf16.mxu0 0
          %1393 = vmatmul.mubr.bf16.gmra.mxu0 %v1290
          %v1394 = vpop.f32.mrf.mxu0
          %v1395 = vadd.f32 0.0, %v1394
          %v1396 = vpop.f32.mrf.mxu0
          %v1397 = vpop.f32.mrf.mxu0
          %v1398 = vadd.f32 0.0, %v1397
          %v1399 = vpop.f32.mrf.mxu0
          %1400 = vmatprep.mubr.bf16.mxu0 0
          %1401 = vmatmul.mubr.bf16.gmra.mxu0 %v1291
          %v1402 = vpop.f32.mrf.mxu0
          %v1403 = vadd.f32 0.0, %v1402
          %v1404 = vpop.f32.mrf.mxu0
          %v1405 = vpop.f32.mrf.mxu0
          %v1406 = vadd.f32 0.0, %v1405
          %v1407 = vpop.f32.mrf.mxu0
          %1408 = vmatprep.mubr.bf16.mxu0 0
          %1409 = vmatmul.mubr.bf16.gmra.mxu0 %v1292
          %v1410 = vpop.f32.mrf.mxu0
          %v1411 = vadd.f32 0.0, %v1410
          %v1412 = vpop.f32.mrf.mxu0
          %v1413 = vpop.f32.mrf.mxu0
          %v1414 = vadd.f32 0.0, %v1413
          %v1415 = vpop.f32.mrf.mxu0
          %1416 = vmatprep.mubr.bf16.mxu0 0
          %1417 = vmatmul.mubr.bf16.gmra.mxu0 %v1293
          %v1418 = vpop.f32.mrf.mxu0
          %v1419 = vadd.f32 0.0, %v1418
          %v1420 = vpop.f32.mrf.mxu0
          %v1421 = vpop.f32.mrf.mxu0
          %v1422 = vadd.f32 0.0, %v1421
          %v1423 = vpop.f32.mrf.mxu0
          %1424 = vmatprep.mubr.bf16.mxu0 0
          %1425 = vmatmul.mubr.bf16.gmra.mxu0 %v1294
          %v1426 = vpop.f32.mrf.mxu0
          %v1427 = vadd.f32 0.0, %v1426
          %v1428 = vpop.f32.mrf.mxu0
          %v1429 = vpop.f32.mrf.mxu0
          %v1430 = vadd.f32 0.0, %v1429
          %v1431 = vpop.f32.mrf.mxu0
          %1432 = vmatprep.mubr.bf16.mxu0 0
          %1433 = vmatmul.mubr.bf16.gmra.mxu0 %v1295
          %v1434 = vpop.f32.mrf.mxu0
          %v1435 = vadd.f32 0.0, %v1434
          %v1436 = vpop.f32.mrf.mxu0
          %v1437 = vpop.f32.mrf.mxu0
          %v1438 = vadd.f32 0.0, %v1437
          %v1439 = vpop.f32.mrf.mxu0
          %1440 = vmatprep.mubr.bf16.mxu0 0
          %1441 = vmatmul.mubr.bf16.gmra.mxu0 %v1296
          %v1442 = vpop.f32.mrf.mxu0
          %v1443 = vadd.f32 0.0, %v1442
          %v1444 = vpop.f32.mrf.mxu0
          %v1445 = vpop.f32.mrf.mxu0
          %v1446 = vadd.f32 0.0, %v1445
          %v1447 = vpop.f32.mrf.mxu0
          %1448 = vmatprep.mubr.bf16.mxu0 0
          %1449 = vmatmul.mubr.bf16.gmra.mxu0 %v1297
          %v1450 = vpop.f32.mrf.mxu0
          %v1451 = vadd.f32 0.0, %v1450
          %v1452 = vpop.f32.mrf.mxu0
          %v1453 = vpop.f32.mrf.mxu0
          %v1454 = vadd.f32 0.0, %v1453
          %v1455 = vpop.f32.mrf.mxu0
          %1456 = vmatprep.mubr.bf16.mxu0 0
          %1457 = vmatmul.mubr.bf16.gmra.mxu0 %v1298
          %v1458 = vpop.f32.mrf.mxu0
          %v1459 = vadd.f32 0.0, %v1458
          %v1460 = vpop.f32.mrf.mxu0
          %v1461 = vpop.f32.mrf.mxu0
          %v1462 = vadd.f32 0.0, %v1461
          %v1463 = vpop.f32.mrf.mxu0
          %1464 = vmatprep.mubr.bf16.mxu0 0
          %1465 = vmatmul.mubr.bf16.gmra.mxu0 %v1299
          %v1466 = vpop.f32.mrf.mxu0
          %v1467 = vadd.f32 0.0, %v1466
          %v1468 = vpop.f32.mrf.mxu0
          %v1469 = vpop.f32.mrf.mxu0
          %v1470 = vadd.f32 0.0, %v1469
          %v1471 = vpop.f32.mrf.mxu0
          %1472 = vmatprep.mubr.bf16.mxu0 0
          %1473 = vmatmul.mubr.bf16.gmra.mxu0 %v1300
          %v1474 = vpop.f32.mrf.mxu0
          %v1475 = vadd.f32 0.0, %v1474
          %v1476 = vpop.f32.mrf.mxu0
          %v1477 = vpop.f32.mrf.mxu0
          %v1478 = vadd.f32 0.0, %v1477
          %v1479 = vpop.f32.mrf.mxu0
          %1480 = vmatprep.mubr.bf16.mxu0 0
          %1481 = vmatmul.mubr.bf16.gmra.mxu0 %v1301
          %v1482 = vpop.f32.mrf.mxu0
          %v1483 = vadd.f32 0.0, %v1482
          %v1484 = vpop.f32.mrf.mxu0
          %v1485 = vpop.f32.mrf.mxu0
          %v1486 = vadd.f32 0.0, %v1485
          %v1487 = vpop.f32.mrf.mxu0
          %1488 = vmatprep.mubr.bf16.mxu0 0
          %1489 = vmatmul.mubr.bf16.gmra.mxu0 %v1302
          %v1490 = vpop.f32.mrf.mxu0
          %v1491 = vadd.f32 0.0, %v1490
          %v1492 = vpop.f32.mrf.mxu0
          %v1493 = vpop.f32.mrf.mxu0
          %v1494 = vadd.f32 0.0, %v1493
          %v1495 = vpop.f32.mrf.mxu0
          %1496 = vmatprep.mubr.bf16.mxu0 0
          %1497 = vmatmul.mubr.bf16.gmra.mxu0 %v1303
          %v1498 = vpop.f32.mrf.mxu0
          %v1499 = vadd.f32 0.0, %v1498
          %v1500 = vpop.f32.mrf.mxu0
          %v1501 = vpop.f32.mrf.mxu0
          %v1502 = vadd.f32 0.0, %v1501
          %v1503 = vpop.f32.mrf.mxu0
          %1504 = vmatprep.mubr.bf16.mxu0 0
          %1505 = vmatmul.mubr.bf16.gmra.mxu0 %v1304
          %v1506 = vpop.f32.mrf.mxu0
          %v1507 = vadd.f32 0.0, %v1506
          %v1508 = vpop.f32.mrf.mxu0
          %v1509 = vpop.f32.mrf.mxu0
          %v1510 = vadd.f32 0.0, %v1509
          %v1511 = vpop.f32.mrf.mxu0
          %1512 = vmatprep.mubr.bf16.mxu0 0
          %1513 = vmatmul.mubr.bf16.gmra.mxu0 %v1305
          %v1514 = vpop.f32.mrf.mxu0
          %v1515 = vadd.f32 0.0, %v1514
          %v1516 = vpop.f32.mrf.mxu0
          %v1517 = vpop.f32.mrf.mxu0
          %v1518 = vadd.f32 0.0, %v1517
          %v1519 = vpop.f32.mrf.mxu0
          %1520 = vmatprep.mubr.bf16.mxu0 0
          %1521 = vmatmul.mubr.bf16.gmra.mxu0 %v1306
          %v1522 = vpop.f32.mrf.mxu0
          %v1523 = vadd.f32 0.0, %v1522
          %v1524 = vpop.f32.mrf.mxu0
          %v1525 = vpop.f32.mrf.mxu0
          %v1526 = vadd.f32 0.0, %v1525
          %v1527 = vpop.f32.mrf.mxu0
          %1528 = vmatprep.mubr.bf16.mxu0 0
          %1529 = vmatmul.mubr.bf16.gmra.mxu0 %v1307
          %v1530 = vpop.f32.mrf.mxu0
          %v1531 = vadd.f32 0.0, %v1530
          %v1532 = vpop.f32.mrf.mxu0
          %v1533 = vpop.f32.mrf.mxu0
          %v1534 = vadd.f32 0.0, %v1533
          %v1535 = vpop.f32.mrf.mxu0
          %1536 = vmatprep.mubr.bf16.mxu0 0
          %1537 = vmatmul.mubr.bf16.gmra.mxu0 %v1308
          %v1538 = vpop.f32.mrf.mxu0
          %v1539 = vadd.f32 0.0, %v1538
          %v1540 = vpop.f32.mrf.mxu0
          %v1541 = vpop.f32.mrf.mxu0
          %v1542 = vadd.f32 0.0, %v1541
          %v1543 = vpop.f32.mrf.mxu0
          %1544 = vmatprep.mubr.bf16.mxu0 0
          %1545 = vmatmul.mubr.bf16.gmra.mxu0 %v1309
          %v1546 = vpop.f32.mrf.mxu0
          %v1547 = vadd.f32 0.0, %v1546
          %v1548 = vpop.f32.mrf.mxu0
          %v1549 = vpop.f32.mrf.mxu0
          %v1550 = vadd.f32 0.0, %v1549
          %v1551 = vpop.f32.mrf.mxu0
          %1552 = vmatprep.mubr.bf16.mxu0 0
          %1553 = vmatmul.mubr.bf16.gmra.mxu0 %v1310
          %v1554 = vpop.f32.mrf.mxu0
          %v1555 = vadd.f32 0.0, %v1554
          %v1556 = vpop.f32.mrf.mxu0
          %v1557 = vpop.f32.mrf.mxu0
          %v1558 = vadd.f32 0.0, %v1557
          %v1559 = vpop.f32.mrf.mxu0
          %1560 = vmatprep.mubr.bf16.mxu0 0
          %1561 = vmatmul.mubr.bf16.gmra.mxu0 %v1311
          %v1562 = vpop.f32.mrf.mxu0
          %v1563 = vadd.f32 0.0, %v1562
          %v1564 = vpop.f32.mrf.mxu0
          %v1565 = vpop.f32.mrf.mxu0
          %v1566 = vadd.f32 0.0, %v1565
          %v1567 = vpop.f32.mrf.mxu0
          %1568 = vmatprep.mubr.bf16.mxu0 0
          %1569 = vmatmul.mubr.bf16.gmra.mxu0 %v1312
          %v1570 = vpop.f32.mrf.mxu0
          %v1571 = vadd.f32 0.0, %v1570
          %v1572 = vpop.f32.mrf.mxu0
          %v1573 = vpop.f32.mrf.mxu0
          %v1574 = vadd.f32 0.0, %v1573
          %v1575 = vpop.f32.mrf.mxu0
          %1576 = vmatprep.mubr.bf16.mxu0 0
          %1577 = vmatmul.mubr.bf16.gmra.mxu0 %v1313
          %v1578 = vpop.f32.mrf.mxu0
          %v1579 = vadd.f32 0.0, %v1578
          %v1580 = vpop.f32.mrf.mxu0
          %v1581 = vpop.f32.mrf.mxu0
          %v1582 = vadd.f32 0.0, %v1581
          %v1583 = vpop.f32.mrf.mxu0
          %1584 = vmatprep.mubr.bf16.mxu0 0
          %1585 = vmatmul.mubr.bf16.gmra.mxu0 %v1314
          %v1586 = vpop.f32.mrf.mxu0
          %v1587 = vadd.f32 0.0, %v1586
          %v1588 = vpop.f32.mrf.mxu0
          %v1589 = vpop.f32.mrf.mxu0
          %v1590 = vadd.f32 0.0, %v1589
          %v1591 = vpop.f32.mrf.mxu0
          %1592 = vmatprep.mubr.bf16.mxu0 0
          %1593 = vmatmul.mubr.bf16.gmra.mxu0 %v1315
          %v1594 = vpop.f32.mrf.mxu0
          %v1595 = vadd.f32 0.0, %v1594
          %v1596 = vpop.f32.mrf.mxu0
          %v1597 = vpop.f32.mrf.mxu0
          %v1598 = vadd.f32 0.0, %v1597
          %v1599 = vpop.f32.mrf.mxu0
          %1600 = vmatprep.mubr.bf16.mxu0 0
          %1601 = vmatmul.mubr.bf16.gmra.mxu0 %v1316
          %v1602 = vpop.f32.mrf.mxu0
          %v1603 = vadd.f32 0.0, %v1602
          %v1604 = vpop.f32.mrf.mxu0
          %v1605 = vpop.f32.mrf.mxu0
          %v1606 = vadd.f32 0.0, %v1605
          %v1607 = vpop.f32.mrf.mxu0
          %1608 = vmatprep.mubr.bf16.mxu0 0
          %1609 = vmatmul.mubr.bf16.gmra.mxu0 %v1317
          %v1610 = vpop.f32.mrf.mxu0
          %v1611 = vadd.f32 0.0, %v1610
          %v1612 = vpop.f32.mrf.mxu0
          %v1613 = vpop.f32.mrf.mxu0
          %v1614 = vadd.f32 0.0, %v1613
          %v1615 = vpop.f32.mrf.mxu0
          %1616 = vmatprep.mubr.bf16.mxu0 0
          %1617 = vmatmul.mubr.bf16.gmra.mxu0 %v1318
          %v1618 = vpop.f32.mrf.mxu0
          %v1619 = vadd.f32 0.0, %v1618
          %v1620 = vpop.f32.mrf.mxu0
          %v1621 = vpop.f32.mrf.mxu0
          %v1622 = vadd.f32 0.0, %v1621
          %v1623 = vpop.f32.mrf.mxu0
          %1624 = vmatprep.mubr.bf16.mxu0 0
          %1625 = vmatmul.mubr.bf16.gmra.mxu0 %v1319
          %v1626 = vpop.f32.mrf.mxu0
          %v1627 = vadd.f32 0.0, %v1626
          %v1628 = vpop.f32.mrf.mxu0
          %v1629 = vpop.f32.mrf.mxu0
          %v1630 = vadd.f32 0.0, %v1629
          %v1631 = vpop.f32.mrf.mxu0
          %1632 = vdwg.mxu0
          %v1633 = vpack.c.bf16 %v1382, %v1379
          %v1634 = vpack.c.bf16 %v1390, %v1387
          %v1635 = vpack.c.bf16 %v1398, %v1395
          %v1636 = vpack.c.bf16 %v1406, %v1403
          %v1637 = vpack.c.bf16 %v1414, %v1411
          %v1638 = vpack.c.bf16 %v1422, %v1419
          %v1639 = vpack.c.bf16 %v1430, %v1427
          %v1640 = vpack.c.bf16 %v1438, %v1435
          %v1641 = vpack.c.bf16 %v1446, %v1443
          %v1642 = vpack.c.bf16 %v1454, %v1451
          %v1643 = vpack.c.bf16 %v1462, %v1459
          %v1644 = vpack.c.bf16 %v1470, %v1467
          %v1645 = vpack.c.bf16 %v1478, %v1475
          %v1646 = vpack.c.bf16 %v1486, %v1483
          %v1647 = vpack.c.bf16 %v1494, %v1491
          %v1648 = vpack.c.bf16 %v1502, %v1499
          %v1649 = vpack.c.bf16 %v1510, %v1507
          %v1650 = vpack.c.bf16 %v1518, %v1515
          %v1651 = vpack.c.bf16 %v1526, %v1523
          %v1652 = vpack.c.bf16 %v1534, %v1531
          %v1653 = vpack.c.bf16 %v1542, %v1539
          %v1654 = vpack.c.bf16 %v1550, %v1547
          %v1655 = vpack.c.bf16 %v1558, %v1555
          %v1656 = vpack.c.bf16 %v1566, %v1563
          %v1657 = vpack.c.bf16 %v1574, %v1571
          %v1658 = vpack.c.bf16 %v1582, %v1579
          %v1659 = vpack.c.bf16 %v1590, %v1587
          %v1660 = vpack.c.bf16 %v1598, %v1595
          %v1661 = vpack.c.bf16 %v1606, %v1603
          %v1662 = vpack.c.bf16 %v1614, %v1611
          %v1663 = vpack.c.bf16 %v1622, %v1619
          %v1664 = vpack.c.bf16 %v1630, %v1627
          %v1697 = vunpack.c.l.b16 %v1633
          %v1698 = vunpack.c.h.b16 %v1633
          %v1699 = vunpack.c.l.b16 %v1634
          %v1700 = vunpack.c.h.b16 %v1634
          %v1701 = vunpack.c.l.b16 %v1635
          %v1702 = vunpack.c.h.b16 %v1635
          %v1703 = vunpack.c.l.b16 %v1636
          %v1704 = vunpack.c.h.b16 %v1636
          %v1705 = vunpack.c.l.b16 %v1637
          %v1706 = vunpack.c.h.b16 %v1637
          %v1707 = vunpack.c.l.b16 %v1638
          %v1708 = vunpack.c.h.b16 %v1638
          %v1709 = vunpack.c.l.b16 %v1639
          %v1710 = vunpack.c.h.b16 %v1639
          %v1711 = vunpack.c.l.b16 %v1640
          %v1712 = vunpack.c.h.b16 %v1640
          %v1713 = vunpack.c.l.b16 %v1641
          %v1714 = vunpack.c.h.b16 %v1641
          %v1715 = vunpack.c.l.b16 %v1642
          %v1716 = vunpack.c.h.b16 %v1642
          %v1717 = vunpack.c.l.b16 %v1643
          %v1718 = vunpack.c.h.b16 %v1643
          %v1719 = vunpack.c.l.b16 %v1644
          %v1720 = vunpack.c.h.b16 %v1644
          %v1721 = vunpack.c.l.b16 %v1645
          %v1722 = vunpack.c.h.b16 %v1645
          %v1723 = vunpack.c.l.b16 %v1646
          %v1724 = vunpack.c.h.b16 %v1646
          %v1725 = vunpack.c.l.b16 %v1647
          %v1726 = vunpack.c.h.b16 %v1647
          %v1727 = vunpack.c.l.b16 %v1648
          %v1728 = vunpack.c.h.b16 %v1648
          %v1729 = vunpack.c.l.b16 %v1649
          %v1730 = vunpack.c.h.b16 %v1649
          %v1731 = vunpack.c.l.b16 %v1650
          %v1732 = vunpack.c.h.b16 %v1650
          %v1733 = vunpack.c.l.b16 %v1651
          %v1734 = vunpack.c.h.b16 %v1651
          %v1735 = vunpack.c.l.b16 %v1652
          %v1736 = vunpack.c.h.b16 %v1652
          %v1737 = vunpack.c.l.b16 %v1653
          %v1738 = vunpack.c.h.b16 %v1653
          %v1739 = vunpack.c.l.b16 %v1654
          %v1740 = vunpack.c.h.b16 %v1654
          %v1741 = vunpack.c.l.b16 %v1655
          %v1742 = vunpack.c.h.b16 %v1655
          %v1743 = vunpack.c.l.b16 %v1656
          %v1744 = vunpack.c.h.b16 %v1656
          %v1745 = vunpack.c.l.b16 %v1657
          %v1746 = vunpack.c.h.b16 %v1657
          %v1747 = vunpack.c.l.b16 %v1658
          %v1748 = vunpack.c.h.b16 %v1658
          %v1749 = vunpack.c.l.b16 %v1659
          %v1750 = vunpack.c.h.b16 %v1659
          %v1751 = vunpack.c.l.b16 %v1660
          %v1752 = vunpack.c.h.b16 %v1660
          %v1753 = vunpack.c.l.b16 %v1661
          %v1754 = vunpack.c.h.b16 %v1661
          %v1755 = vunpack.c.l.b16 %v1662
          %v1756 = vunpack.c.h.b16 %v1662
          %v1757 = vunpack.c.l.b16 %v1663
          %v1758 = vunpack.c.h.b16 %v1663
          %v1759 = vunpack.c.l.b16 %v1664
          %v1760 = vunpack.c.h.b16 %v1664
          %v1761 = vpack.c.b16 %v1697, %v1697
          %v1762 = vpack.c.b16 %v1698, %v1698
          %v1763 = vpack.c.b16 %v1699, %v1699
          %v1764 = vpack.c.b16 %v1700, %v1700
          %v1765 = vpack.c.b16 %v1701, %v1701
          %v1766 = vpack.c.b16 %v1702, %v1702
          %v1767 = vpack.c.b16 %v1703, %v1703
          %v1768 = vpack.c.b16 %v1704, %v1704
          %v1769 = vpack.c.b16 %v1705, %v1705
          %v1770 = vpack.c.b16 %v1706, %v1706
          %v1771 = vpack.c.b16 %v1707, %v1707
          %v1772 = vpack.c.b16 %v1708, %v1708
          %v1773 = vpack.c.b16 %v1709, %v1709
          %v1774 = vpack.c.b16 %v1710, %v1710
          %v1775 = vpack.c.b16 %v1711, %v1711
          %v1776 = vpack.c.b16 %v1712, %v1712
          %v1777 = vpack.c.b16 %v1713, %v1713
          %v1778 = vpack.c.b16 %v1714, %v1714
          %v1779 = vpack.c.b16 %v1715, %v1715
          %v1780 = vpack.c.b16 %v1716, %v1716
          %v1781 = vpack.c.b16 %v1717, %v1717
          %v1782 = vpack.c.b16 %v1718, %v1718
          %v1783 = vpack.c.b16 %v1719, %v1719
          %v1784 = vpack.c.b16 %v1720, %v1720
          %v1785 = vpack.c.b16 %v1721, %v1721
          %v1786 = vpack.c.b16 %v1722, %v1722
          %v1787 = vpack.c.b16 %v1723, %v1723
          %v1788 = vpack.c.b16 %v1724, %v1724
          %v1789 = vpack.c.b16 %v1725, %v1725
          %v1790 = vpack.c.b16 %v1726, %v1726
          %v1791 = vpack.c.b16 %v1727, %v1727
          %v1792 = vpack.c.b16 %v1728, %v1728
          %v1793 = vpack.c.b16 %v1729, %v1729
          %v1794 = vpack.c.b16 %v1730, %v1730
          %v1795 = vpack.c.b16 %v1731, %v1731
          %v1796 = vpack.c.b16 %v1732, %v1732
          %v1797 = vpack.c.b16 %v1733, %v1733
          %v1798 = vpack.c.b16 %v1734, %v1734
          %v1799 = vpack.c.b16 %v1735, %v1735
          %v1800 = vpack.c.b16 %v1736, %v1736
          %v1801 = vpack.c.b16 %v1737, %v1737
          %v1802 = vpack.c.b16 %v1738, %v1738
          %v1803 = vpack.c.b16 %v1739, %v1739
          %v1804 = vpack.c.b16 %v1740, %v1740
          %v1805 = vpack.c.b16 %v1741, %v1741
          %v1806 = vpack.c.b16 %v1742, %v1742
          %v1807 = vpack.c.b16 %v1743, %v1743
          %v1808 = vpack.c.b16 %v1744, %v1744
          %v1809 = vpack.c.b16 %v1745, %v1745
          %v1810 = vpack.c.b16 %v1746, %v1746
          %v1811 = vpack.c.b16 %v1747, %v1747
          %v1812 = vpack.c.b16 %v1748, %v1748
          %v1813 = vpack.c.b16 %v1749, %v1749
          %v1814 = vpack.c.b16 %v1750, %v1750
          %v1815 = vpack.c.b16 %v1751, %v1751
          %v1816 = vpack.c.b16 %v1752, %v1752
          %v1817 = vpack.c.b16 %v1753, %v1753
          %v1818 = vpack.c.b16 %v1754, %v1754
          %v1819 = vpack.c.b16 %v1755, %v1755
          %v1820 = vpack.c.b16 %v1756, %v1756
          %v1821 = vpack.c.b16 %v1757, %v1757
          %v1822 = vpack.c.b16 %v1758, %v1758
          %v1823 = vpack.c.b16 %v1759, %v1759
          %v1824 = vpack.c.b16 %v1760, %v1760
          %s1889 = smul.u32 %s21, 64
          %s1890 = smul.addr %s1889, 4
          %s1891 = scalar_lea.vmem [#allocation5], %s1890
          %1892 = vst [vmem:[%s1891] sm:$0xf] %v1761
          %1893 = vst [vmem:[%s1891 + $0x4] sm:$0xf] %v1762
          %1894 = vst [vmem:[%s1891 + $0x8] sm:$0xf] %v1763
          %1895 = vst [vmem:[%s1891 + $0xc] sm:$0xf] %v1764
          %1896 = vst [vmem:[%s1891 + $0x10] sm:$0xf] %v1765
          %1897 = vst [vmem:[%s1891 + $0x14] sm:$0xf] %v1766
          %1898 = vst [vmem:[%s1891 + $0x18] sm:$0xf] %v1767
          %1899 = vst [vmem:[%s1891 + $0x1c] sm:$0xf] %v1768
          %1900 = vst [vmem:[%s1891 + $0x20] sm:$0xf] %v1769
          %1901 = vst [vmem:[%s1891 + $0x24] sm:$0xf] %v1770
          %1902 = vst [vmem:[%s1891 + $0x28] sm:$0xf] %v1771
          %1903 = vst [vmem:[%s1891 + $0x2c] sm:$0xf] %v1772
          %1904 = vst [vmem:[%s1891 + $0x30] sm:$0xf] %v1773
          %1905 = vst [vmem:[%s1891 + $0x34] sm:$0xf] %v1774
          %1906 = vst [vmem:[%s1891 + $0x38] sm:$0xf] %v1775
          %1907 = vst [vmem:[%s1891 + $0x3c] sm:$0xf] %v1776
          %1908 = vst [vmem:[%s1891 + $0x40] sm:$0xf] %v1777
          %1909 = vst [vmem:[%s1891 + $0x44] sm:$0xf] %v1778
          %1910 = vst [vmem:[%s1891 + $0x48] sm:$0xf] %v1779
          %1911 = vst [vmem:[%s1891 + $0x4c] sm:$0xf] %v1780
          %1912 = vst [vmem:[%s1891 + $0x50] sm:$0xf] %v1781
          %1913 = vst [vmem:[%s1891 + $0x54] sm:$0xf] %v1782
          %1914 = vst [vmem:[%s1891 + $0x58] sm:$0xf] %v1783
          %1915 = vst [vmem:[%s1891 + $0x5c] sm:$0xf] %v1784
          %1916 = vst [vmem:[%s1891 + $0x60] sm:$0xf] %v1785
          %1917 = vst [vmem:[%s1891 + $0x64] sm:$0xf] %v1786
          %1918 = vst [vmem:[%s1891 + $0x68] sm:$0xf] %v1787
          %1919 = vst [vmem:[%s1891 + $0x6c] sm:$0xf] %v1788
          %1920 = vst [vmem:[%s1891 + $0x70] sm:$0xf] %v1789
          %1921 = vst [vmem:[%s1891 + $0x74] sm:$0xf] %v1790
          %1922 = vst [vmem:[%s1891 + $0x78] sm:$0xf] %v1791
          %1923 = vst [vmem:[%s1891 + $0x7c] sm:$0xf] %v1792
          %1924 = vst [vmem:[%s1891 + $0x80] sm:$0xf] %v1793
          %1925 = vst [vmem:[%s1891 + $0x84] sm:$0xf] %v1794
          %1926 = vst [vmem:[%s1891 + $0x88] sm:$0xf] %v1795
          %1927 = vst [vmem:[%s1891 + $0x8c] sm:$0xf] %v1796
          %1928 = vst [vmem:[%s1891 + $0x90] sm:$0xf] %v1797
          %1929 = vst [vmem:[%s1891 + $0x94] sm:$0xf] %v1798
          %1930 = vst [vmem:[%s1891 + $0x98] sm:$0xf] %v1799
          %1931 = vst [vmem:[%s1891 + $0x9c] sm:$0xf] %v1800
          %1932 = vst [vmem:[%s1891 + $0xa0] sm:$0xf] %v1801
          %1933 = vst [vmem:[%s1891 + $0xa4] sm:$0xf] %v1802
          %1934 = vst [vmem:[%s1891 + $0xa8] sm:$0xf] %v1803
          %1935 = vst [vmem:[%s1891 + $0xac] sm:$0xf] %v1804
          %1936 = vst [vmem:[%s1891 + $0xb0] sm:$0xf] %v1805
          %1937 = vst [vmem:[%s1891 + $0xb4] sm:$0xf] %v1806
          %1938 = vst [vmem:[%s1891 + $0xb8] sm:$0xf] %v1807
          %1939 = vst [vmem:[%s1891 + $0xbc] sm:$0xf] %v1808
          %1940 = vst [vmem:[%s1891 + $0xc0] sm:$0xf] %v1809
          %1941 = vst [vmem:[%s1891 + $0xc4] sm:$0xf] %v1810
          %1942 = vst [vmem:[%s1891 + $0xc8] sm:$0xf] %v1811
          %1943 = vst [vmem:[%s1891 + $0xcc] sm:$0xf] %v1812
          %1944 = vst [vmem:[%s1891 + $0xd0] sm:$0xf] %v1813
          %1945 = vst [vmem:[%s1891 + $0xd4] sm:$0xf] %v1814
          %1946 = vst [vmem:[%s1891 + $0xd8] sm:$0xf] %v1815
          %1947 = vst [vmem:[%s1891 + $0xdc] sm:$0xf] %v1816
          %1948 = vst [vmem:[%s1891 + $0xe0] sm:$0xf] %v1817
          %1949 = vst [vmem:[%s1891 + $0xe4] sm:$0xf] %v1818
          %1950 = vst [vmem:[%s1891 + $0xe8] sm:$0xf] %v1819
          %1951 = vst [vmem:[%s1891 + $0xec] sm:$0xf] %v1820
          %1952 = vst [vmem:[%s1891 + $0xf0] sm:$0xf] %v1821
          %1953 = vst [vmem:[%s1891 + $0xf4] sm:$0xf] %v1822
          %1954 = vst [vmem:[%s1891 + $0xf8] sm:$0xf] %v1823
          %1955 = vst [vmem:[%s1891 + $0xfc] sm:$0xf] %v1824
          %v1956 = vld [vmem:[%s232] sm:$0xff]
          %v1957 = vld [vmem:[%s232 + $0x8] sm:$0xff]
          %v1958 = vld [vmem:[%s232 + $0x10] sm:$0xff]
          %v1959 = vld [vmem:[%s232 + $0x18] sm:$0xff]
          %v1960 = vld [vmem:[%s232 + $0x20] sm:$0xff]
          %v1961 = vld [vmem:[%s232 + $0x28] sm:$0xff]
          %v1962 = vld [vmem:[%s232 + $0x30] sm:$0xff]
          %v1963 = vld [vmem:[%s232 + $0x38] sm:$0xff]
          %v1964 = vld [vmem:[%s232 + $0x40] sm:$0xff]
          %v1965 = vld [vmem:[%s232 + $0x48] sm:$0xff]
          %v1966 = vld [vmem:[%s232 + $0x50] sm:$0xff]
          %v1967 = vld [vmem:[%s232 + $0x58] sm:$0xff]
          %v1968 = vld [vmem:[%s232 + $0x60] sm:$0xff]
          %v1969 = vld [vmem:[%s232 + $0x68] sm:$0xff]
          %v1970 = vld [vmem:[%s232 + $0x70] sm:$0xff]
          %v1971 = vld [vmem:[%s232 + $0x78] sm:$0xff]
          %v1972 = vld [vmem:[%s232 + $0x80] sm:$0xff]
          %v1973 = vld [vmem:[%s232 + $0x88] sm:$0xff]
          %v1974 = vld [vmem:[%s232 + $0x90] sm:$0xff]
          %v1975 = vld [vmem:[%s232 + $0x98] sm:$0xff]
          %v1976 = vld [vmem:[%s232 + $0xa0] sm:$0xff]
          %v1977 = vld [vmem:[%s232 + $0xa8] sm:$0xff]
          %v1978 = vld [vmem:[%s232 + $0xb0] sm:$0xff]
          %v1979 = vld [vmem:[%s232 + $0xb8] sm:$0xff]
          %v1980 = vld [vmem:[%s232 + $0xc0] sm:$0xff]
          %v1981 = vld [vmem:[%s232 + $0xc8] sm:$0xff]
          %v1982 = vld [vmem:[%s232 + $0xd0] sm:$0xff]
          %v1983 = vld [vmem:[%s232 + $0xd8] sm:$0xff]
          %v1984 = vld [vmem:[%s232 + $0xe0] sm:$0xff]
          %v1985 = vld [vmem:[%s232 + $0xe8] sm:$0xff]
          %v1986 = vld [vmem:[%s232 + $0xf0] sm:$0xff]
          %v1987 = vld [vmem:[%s232 + $0xf8] sm:$0xff]
          %v1988 = vld [vmem:[%s232 + $0x100] sm:$0xff]
          %v1989 = vld [vmem:[%s232 + $0x108] sm:$0xff]
          %v1990 = vld [vmem:[%s232 + $0x110] sm:$0xff]
          %v1991 = vld [vmem:[%s232 + $0x118] sm:$0xff]
          %v1992 = vld [vmem:[%s232 + $0x120] sm:$0xff]
          %v1993 = vld [vmem:[%s232 + $0x128] sm:$0xff]
          %v1994 = vld [vmem:[%s232 + $0x130] sm:$0xff]
          %v1995 = vld [vmem:[%s232 + $0x138] sm:$0xff]
          %v1996 = vld [vmem:[%s232 + $0x140] sm:$0xff]
          %v1997 = vld [vmem:[%s232 + $0x148] sm:$0xff]
          %v1998 = vld [vmem:[%s232 + $0x150] sm:$0xff]
          %v1999 = vld [vmem:[%s232 + $0x158] sm:$0xff]
          %v2000 = vld [vmem:[%s232 + $0x160] sm:$0xff]
          %v2001 = vld [vmem:[%s232 + $0x168] sm:$0xff]
          %v2002 = vld [vmem:[%s232 + $0x170] sm:$0xff]
          %v2003 = vld [vmem:[%s232 + $0x178] sm:$0xff]
          %v2004 = vld [vmem:[%s232 + $0x180] sm:$0xff]
          %v2005 = vld [vmem:[%s232 + $0x188] sm:$0xff]
          %v2006 = vld [vmem:[%s232 + $0x190] sm:$0xff]
          %v2007 = vld [vmem:[%s232 + $0x198] sm:$0xff]
          %v2008 = vld [vmem:[%s232 + $0x1a0] sm:$0xff]
          %v2009 = vld [vmem:[%s232 + $0x1a8] sm:$0xff]
          %v2010 = vld [vmem:[%s232 + $0x1b0] sm:$0xff]
          %v2011 = vld [vmem:[%s232 + $0x1b8] sm:$0xff]
          %v2012 = vld [vmem:[%s232 + $0x1c0] sm:$0xff]
          %v2013 = vld [vmem:[%s232 + $0x1c8] sm:$0xff]
          %v2014 = vld [vmem:[%s232 + $0x1d0] sm:$0xff]
          %v2015 = vld [vmem:[%s232 + $0x1d8] sm:$0xff]
          %v2016 = vld [vmem:[%s232 + $0x1e0] sm:$0xff]
          %v2017 = vld [vmem:[%s232 + $0x1e8] sm:$0xff]
          %v2018 = vld [vmem:[%s232 + $0x1f0] sm:$0xff]
          %v2019 = vld [vmem:[%s232 + $0x1f8] sm:$0xff]
          %2020 = vset.pattern.permute.xlu0 0
          %2021 = vperm.xlu0 %2020, %v1956
          %v2022 = vpop.permute.xlu0 %2021
          %2023 = vset.pattern.permute.xlu0 0
          %2024 = vperm.xlu0 %2023, %v1957
          %v2025 = vpop.permute.xlu0 %2024
          %2026 = vset.pattern.permute.xlu0 0
          %2027 = vperm.xlu0 %2026, %v1958
          %v2028 = vpop.permute.xlu0 %2027
          %2029 = vset.pattern.permute.xlu0 0
          %2030 = vperm.xlu0 %2029, %v1959
          %v2031 = vpop.permute.xlu0 %2030
          %2032 = vset.pattern.permute.xlu0 0
          %2033 = vperm.xlu0 %2032, %v1960
          %v2034 = vpop.permute.xlu0 %2033
          %2035 = vset.pattern.permute.xlu0 0
          %2036 = vperm.xlu0 %2035, %v1961
          %v2037 = vpop.permute.xlu0 %2036
          %2038 = vset.pattern.permute.xlu0 0
          %2039 = vperm.xlu0 %2038, %v1962
          %v2040 = vpop.permute.xlu0 %2039
          %2041 = vset.pattern.permute.xlu0 0
          %2042 = vperm.xlu0 %2041, %v1963
          %v2043 = vpop.permute.xlu0 %2042
          %2044 = vset.pattern.permute.xlu0 0
          %2045 = vperm.xlu0 %2044, %v1964
          %v2046 = vpop.permute.xlu0 %2045
          %2047 = vset.pattern.permute.xlu0 0
          %2048 = vperm.xlu0 %2047, %v1965
          %v2049 = vpop.permute.xlu0 %2048
          %2050 = vset.pattern.permute.xlu0 0
          %2051 = vperm.xlu0 %2050, %v1966
          %v2052 = vpop.permute.xlu0 %2051
          %2053 = vset.pattern.permute.xlu0 0
          %2054 = vperm.xlu0 %2053, %v1967
          %v2055 = vpop.permute.xlu0 %2054
          %2056 = vset.pattern.permute.xlu0 0
          %2057 = vperm.xlu0 %2056, %v1968
          %v2058 = vpop.permute.xlu0 %2057
          %2059 = vset.pattern.permute.xlu0 0
          %2060 = vperm.xlu0 %2059, %v1969
          %v2061 = vpop.permute.xlu0 %2060
          %2062 = vset.pattern.permute.xlu0 0
          %2063 = vperm.xlu0 %2062, %v1970
          %v2064 = vpop.permute.xlu0 %2063
          %2065 = vset.pattern.permute.xlu0 0
          %2066 = vperm.xlu0 %2065, %v1971
          %v2067 = vpop.permute.xlu0 %2066
          %2068 = vset.pattern.permute.xlu0 0
          %2069 = vperm.xlu0 %2068, %v1972
          %v2070 = vpop.permute.xlu0 %2069
          %2071 = vset.pattern.permute.xlu0 0
          %2072 = vperm.xlu0 %2071, %v1973
          %v2073 = vpop.permute.xlu0 %2072
          %2074 = vset.pattern.permute.xlu0 0
          %2075 = vperm.xlu0 %2074, %v1974
          %v2076 = vpop.permute.xlu0 %2075
          %2077 = vset.pattern.permute.xlu0 0
          %2078 = vperm.xlu0 %2077, %v1975
          %v2079 = vpop.permute.xlu0 %2078
          %2080 = vset.pattern.permute.xlu0 0
          %2081 = vperm.xlu0 %2080, %v1976
          %v2082 = vpop.permute.xlu0 %2081
          %2083 = vset.pattern.permute.xlu0 0
          %2084 = vperm.xlu0 %2083, %v1977
          %v2085 = vpop.permute.xlu0 %2084
          %2086 = vset.pattern.permute.xlu0 0
          %2087 = vperm.xlu0 %2086, %v1978
          %v2088 = vpop.permute.xlu0 %2087
          %2089 = vset.pattern.permute.xlu0 0
          %2090 = vperm.xlu0 %2089, %v1979
          %v2091 = vpop.permute.xlu0 %2090
          %2092 = vset.pattern.permute.xlu0 0
          %2093 = vperm.xlu0 %2092, %v1980
          %v2094 = vpop.permute.xlu0 %2093
          %2095 = vset.pattern.permute.xlu0 0
          %2096 = vperm.xlu0 %2095, %v1981
          %v2097 = vpop.permute.xlu0 %2096
          %2098 = vset.pattern.permute.xlu0 0
          %2099 = vperm.xlu0 %2098, %v1982
          %v2100 = vpop.permute.xlu0 %2099
          %2101 = vset.pattern.permute.xlu0 0
          %2102 = vperm.xlu0 %2101, %v1983
          %v2103 = vpop.permute.xlu0 %2102
          %2104 = vset.pattern.permute.xlu0 0
          %2105 = vperm.xlu0 %2104, %v1984
          %v2106 = vpop.permute.xlu0 %2105
          %2107 = vset.pattern.permute.xlu0 0
          %2108 = vperm.xlu0 %2107, %v1985
          %v2109 = vpop.permute.xlu0 %2108
          %2110 = vset.pattern.permute.xlu0 0
          %2111 = vperm.xlu0 %2110, %v1986
          %v2112 = vpop.permute.xlu0 %2111
          %2113 = vset.pattern.permute.xlu0 0
          %2114 = vperm.xlu0 %2113, %v1987
          %v2115 = vpop.permute.xlu0 %2114
          %2116 = vset.pattern.permute.xlu0 0
          %2117 = vperm.xlu0 %2116, %v1988
          %v2118 = vpop.permute.xlu0 %2117
          %2119 = vset.pattern.permute.xlu0 0
          %2120 = vperm.xlu0 %2119, %v1989
          %v2121 = vpop.permute.xlu0 %2120
          %2122 = vset.pattern.permute.xlu0 0
          %2123 = vperm.xlu0 %2122, %v1990
          %v2124 = vpop.permute.xlu0 %2123
          %2125 = vset.pattern.permute.xlu0 0
          %2126 = vperm.xlu0 %2125, %v1991
          %v2127 = vpop.permute.xlu0 %2126
          %2128 = vset.pattern.permute.xlu0 0
          %2129 = vperm.xlu0 %2128, %v1992
          %v2130 = vpop.permute.xlu0 %2129
          %2131 = vset.pattern.permute.xlu0 0
          %2132 = vperm.xlu0 %2131, %v1993
          %v2133 = vpop.permute.xlu0 %2132
          %2134 = vset.pattern.permute.xlu0 0
          %2135 = vperm.xlu0 %2134, %v1994
          %v2136 = vpop.permute.xlu0 %2135
          %2137 = vset.pattern.permute.xlu0 0
          %2138 = vperm.xlu0 %2137, %v1995
          %v2139 = vpop.permute.xlu0 %2138
          %2140 = vset.pattern.permute.xlu0 0
          %2141 = vperm.xlu0 %2140, %v1996
          %v2142 = vpop.permute.xlu0 %2141
          %2143 = vset.pattern.permute.xlu0 0
          %2144 = vperm.xlu0 %2143, %v1997
          %v2145 = vpop.permute.xlu0 %2144
          %2146 = vset.pattern.permute.xlu0 0
          %2147 = vperm.xlu0 %2146, %v1998
          %v2148 = vpop.permute.xlu0 %2147
          %2149 = vset.pattern.permute.xlu0 0
          %2150 = vperm.xlu0 %2149, %v1999
          %v2151 = vpop.permute.xlu0 %2150
          %2152 = vset.pattern.permute.xlu0 0
          %2153 = vperm.xlu0 %2152, %v2000
          %v2154 = vpop.permute.xlu0 %2153
          %2155 = vset.pattern.permute.xlu0 0
          %2156 = vperm.xlu0 %2155, %v2001
          %v2157 = vpop.permute.xlu0 %2156
          %2158 = vset.pattern.permute.xlu0 0
          %2159 = vperm.xlu0 %2158, %v2002
          %v2160 = vpop.permute.xlu0 %2159
          %2161 = vset.pattern.permute.xlu0 0
          %2162 = vperm.xlu0 %2161, %v2003
          %v2163 = vpop.permute.xlu0 %2162
          %2164 = vset.pattern.permute.xlu0 0
          %2165 = vperm.xlu0 %2164, %v2004
          %v2166 = vpop.permute.xlu0 %2165
          %2167 = vset.pattern.permute.xlu0 0
          %2168 = vperm.xlu0 %2167, %v2005
          %v2169 = vpop.permute.xlu0 %2168
          %2170 = vset.pattern.permute.xlu0 0
          %2171 = vperm.xlu0 %2170, %v2006
          %v2172 = vpop.permute.xlu0 %2171
          %2173 = vset.pattern.permute.xlu0 0
          %2174 = vperm.xlu0 %2173, %v2007
          %v2175 = vpop.permute.xlu0 %2174
          %2176 = vset.pattern.permute.xlu0 0
          %2177 = vperm.xlu0 %2176, %v2008
          %v2178 = vpop.permute.xlu0 %2177
          %2179 = vset.pattern.permute.xlu0 0
          %2180 = vperm.xlu0 %2179, %v2009
          %v2181 = vpop.permute.xlu0 %2180
          %2182 = vset.pattern.permute.xlu0 0
          %2183 = vperm.xlu0 %2182, %v2010
          %v2184 = vpop.permute.xlu0 %2183
          %2185 = vset.pattern.permute.xlu0 0
          %2186 = vperm.xlu0 %2185, %v2011
          %v2187 = vpop.permute.xlu0 %2186
          %2188 = vset.pattern.permute.xlu0 0
          %2189 = vperm.xlu0 %2188, %v2012
          %v2190 = vpop.permute.xlu0 %2189
          %2191 = vset.pattern.permute.xlu0 0
          %2192 = vperm.xlu0 %2191, %v2013
          %v2193 = vpop.permute.xlu0 %2192
          %2194 = vset.pattern.permute.xlu0 0
          %2195 = vperm.xlu0 %2194, %v2014
          %v2196 = vpop.permute.xlu0 %2195
          %2197 = vset.pattern.permute.xlu0 0
          %2198 = vperm.xlu0 %2197, %v2015
          %v2199 = vpop.permute.xlu0 %2198
          %2200 = vset.pattern.permute.xlu0 0
          %2201 = vperm.xlu0 %2200, %v2016
          %v2202 = vpop.permute.xlu0 %2201
          %2203 = vset.pattern.permute.xlu0 0
          %2204 = vperm.xlu0 %2203, %v2017
          %v2205 = vpop.permute.xlu0 %2204
          %2206 = vset.pattern.permute.xlu0 0
          %2207 = vperm.xlu0 %2206, %v2018
          %v2208 = vpop.permute.xlu0 %2207
          %2209 = vset.pattern.permute.xlu0 0
          %2210 = vperm.xlu0 %2209, %v2019
          %v2211 = vpop.permute.xlu0 %2210
          %vm2212 = vcmp.eq.s32.totalorder %v258, %v2022
          %vm2213 = vcmp.eq.s32.totalorder %v258, %v2025
          %vm2214 = vcmp.eq.s32.totalorder %v258, %v2028
          %vm2215 = vcmp.eq.s32.totalorder %v258, %v2031
          %vm2216 = vcmp.eq.s32.totalorder %v258, %v2034
          %vm2217 = vcmp.eq.s32.totalorder %v258, %v2037
          %vm2218 = vcmp.eq.s32.totalorder %v258, %v2040
          %vm2219 = vcmp.eq.s32.totalorder %v258, %v2043
          %vm2220 = vcmp.eq.s32.totalorder %v258, %v2046
          %vm2221 = vcmp.eq.s32.totalorder %v258, %v2049
          %vm2222 = vcmp.eq.s32.totalorder %v258, %v2052
          %vm2223 = vcmp.eq.s32.totalorder %v258, %v2055
          %vm2224 = vcmp.eq.s32.totalorder %v258, %v2058
          %vm2225 = vcmp.eq.s32.totalorder %v258, %v2061
          %vm2226 = vcmp.eq.s32.totalorder %v258, %v2064
          %vm2227 = vcmp.eq.s32.totalorder %v258, %v2067
          %vm2228 = vcmp.eq.s32.totalorder %v258, %v2070
          %vm2229 = vcmp.eq.s32.totalorder %v258, %v2073
          %vm2230 = vcmp.eq.s32.totalorder %v258, %v2076
          %vm2231 = vcmp.eq.s32.totalorder %v258, %v2079
          %vm2232 = vcmp.eq.s32.totalorder %v258, %v2082
          %vm2233 = vcmp.eq.s32.totalorder %v258, %v2085
          %vm2234 = vcmp.eq.s32.totalorder %v258, %v2088
          %vm2235 = vcmp.eq.s32.totalorder %v258, %v2091
          %vm2236 = vcmp.eq.s32.totalorder %v258, %v2094
          %vm2237 = vcmp.eq.s32.totalorder %v258, %v2097
          %vm2238 = vcmp.eq.s32.totalorder %v258, %v2100
          %vm2239 = vcmp.eq.s32.totalorder %v258, %v2103
          %vm2240 = vcmp.eq.s32.totalorder %v258, %v2106
          %vm2241 = vcmp.eq.s32.totalorder %v258, %v2109
          %vm2242 = vcmp.eq.s32.totalorder %v258, %v2112
          %vm2243 = vcmp.eq.s32.totalorder %v258, %v2115
          %vm2244 = vcmp.eq.s32.totalorder %v258, %v2118
          %vm2245 = vcmp.eq.s32.totalorder %v258, %v2121
          %vm2246 = vcmp.eq.s32.totalorder %v258, %v2124
          %vm2247 = vcmp.eq.s32.totalorder %v258, %v2127
          %vm2248 = vcmp.eq.s32.totalorder %v258, %v2130
          %vm2249 = vcmp.eq.s32.totalorder %v258, %v2133
          %vm2250 = vcmp.eq.s32.totalorder %v258, %v2136
          %vm2251 = vcmp.eq.s32.totalorder %v258, %v2139
          %vm2252 = vcmp.eq.s32.totalorder %v258, %v2142
          %vm2253 = vcmp.eq.s32.totalorder %v258, %v2145
          %vm2254 = vcmp.eq.s32.totalorder %v258, %v2148
          %vm2255 = vcmp.eq.s32.totalorder %v258, %v2151
          %vm2256 = vcmp.eq.s32.totalorder %v258, %v2154
          %vm2257 = vcmp.eq.s32.totalorder %v258, %v2157
          %vm2258 = vcmp.eq.s32.totalorder %v258, %v2160
          %vm2259 = vcmp.eq.s32.totalorder %v258, %v2163
          %vm2260 = vcmp.eq.s32.totalorder %v258, %v2166
          %vm2261 = vcmp.eq.s32.totalorder %v258, %v2169
          %vm2262 = vcmp.eq.s32.totalorder %v258, %v2172
          %vm2263 = vcmp.eq.s32.totalorder %v258, %v2175
          %vm2264 = vcmp.eq.s32.totalorder %v258, %v2178
          %vm2265 = vcmp.eq.s32.totalorder %v258, %v2181
          %vm2266 = vcmp.eq.s32.totalorder %v258, %v2184
          %vm2267 = vcmp.eq.s32.totalorder %v258, %v2187
          %vm2268 = vcmp.eq.s32.totalorder %v258, %v2190
          %vm2269 = vcmp.eq.s32.totalorder %v258, %v2193
          %vm2270 = vcmp.eq.s32.totalorder %v258, %v2196
          %vm2271 = vcmp.eq.s32.totalorder %v258, %v2199
          %vm2272 = vcmp.eq.s32.totalorder %v258, %v2202
          %vm2273 = vcmp.eq.s32.totalorder %v258, %v2205
          %vm2274 = vcmp.eq.s32.totalorder %v258, %v2208
          %vm2275 = vcmp.eq.s32.totalorder %v258, %v2211
          %v2276 = vsel %vm2212, 1, 0
          %v2277 = vsel %vm2213, 1, 0
          %v2278 = vsel %vm2214, 1, 0
          %v2279 = vsel %vm2215, 1, 0
          %v2280 = vsel %vm2216, 1, 0
          %v2281 = vsel %vm2217, 1, 0
          %v2282 = vsel %vm2218, 1, 0
          %v2283 = vsel %vm2219, 1, 0
          %v2284 = vsel %vm2220, 1, 0
          %v2285 = vsel %vm2221, 1, 0
          %v2286 = vsel %vm2222, 1, 0
          %v2287 = vsel %vm2223, 1, 0
          %v2288 = vsel %vm2224, 1, 0
          %v2289 = vsel %vm2225, 1, 0
          %v2290 = vsel %vm2226, 1, 0
          %v2291 = vsel %vm2227, 1, 0
          %v2292 = vsel %vm2228, 1, 0
          %v2293 = vsel %vm2229, 1, 0
          %v2294 = vsel %vm2230, 1, 0
          %v2295 = vsel %vm2231, 1, 0
          %v2296 = vsel %vm2232, 1, 0
          %v2297 = vsel %vm2233, 1, 0
          %v2298 = vsel %vm2234, 1, 0
          %v2299 = vsel %vm2235, 1, 0
          %v2300 = vsel %vm2236, 1, 0
          %v2301 = vsel %vm2237, 1, 0
          %v2302 = vsel %vm2238, 1, 0
          %v2303 = vsel %vm2239, 1, 0
          %v2304 = vsel %vm2240, 1, 0
          %v2305 = vsel %vm2241, 1, 0
          %v2306 = vsel %vm2242, 1, 0
          %v2307 = vsel %vm2243, 1, 0
          %v2308 = vsel %vm2244, 1, 0
          %v2309 = vsel %vm2245, 1, 0
          %v2310 = vsel %vm2246, 1, 0
          %v2311 = vsel %vm2247, 1, 0
          %v2312 = vsel %vm2248, 1, 0
          %v2313 = vsel %vm2249, 1, 0
          %v2314 = vsel %vm2250, 1, 0
          %v2315 = vsel %vm2251, 1, 0
          %v2316 = vsel %vm2252, 1, 0
          %v2317 = vsel %vm2253, 1, 0
          %v2318 = vsel %vm2254, 1, 0
          %v2319 = vsel %vm2255, 1, 0
          %v2320 = vsel %vm2256, 1, 0
          %v2321 = vsel %vm2257, 1, 0
          %v2322 = vsel %vm2258, 1, 0
          %v2323 = vsel %vm2259, 1, 0
          %v2324 = vsel %vm2260, 1, 0
          %v2325 = vsel %vm2261, 1, 0
          %v2326 = vsel %vm2262, 1, 0
          %v2327 = vsel %vm2263, 1, 0
          %v2328 = vsel %vm2264, 1, 0
          %v2329 = vsel %vm2265, 1, 0
          %v2330 = vsel %vm2266, 1, 0
          %v2331 = vsel %vm2267, 1, 0
          %v2332 = vsel %vm2268, 1, 0
          %v2333 = vsel %vm2269, 1, 0
          %v2334 = vsel %vm2270, 1, 0
          %v2335 = vsel %vm2271, 1, 0
          %v2336 = vsel %vm2272, 1, 0
          %v2337 = vsel %vm2273, 1, 0
          %v2338 = vsel %vm2274, 1, 0
          %v2339 = vsel %vm2275, 1, 0
          %v2340 = vcvt.s32.f32 %v2276
          %v2341 = vcvt.s32.f32 %v2277
          %v2342 = vcvt.s32.f32 %v2278
          %v2343 = vcvt.s32.f32 %v2279
          %v2344 = vcvt.s32.f32 %v2280
          %v2345 = vcvt.s32.f32 %v2281
          %v2346 = vcvt.s32.f32 %v2282
          %v2347 = vcvt.s32.f32 %v2283
          %v2348 = vcvt.s32.f32 %v2284
          %v2349 = vcvt.s32.f32 %v2285
          %v2350 = vcvt.s32.f32 %v2286
          %v2351 = vcvt.s32.f32 %v2287
          %v2352 = vcvt.s32.f32 %v2288
          %v2353 = vcvt.s32.f32 %v2289
          %v2354 = vcvt.s32.f32 %v2290
          %v2355 = vcvt.s32.f32 %v2291
          %v2356 = vcvt.s32.f32 %v2292
          %v2357 = vcvt.s32.f32 %v2293
          %v2358 = vcvt.s32.f32 %v2294
          %v2359 = vcvt.s32.f32 %v2295
          %v2360 = vcvt.s32.f32 %v2296
          %v2361 = vcvt.s32.f32 %v2297
          %v2362 = vcvt.s32.f32 %v2298
          %v2363 = vcvt.s32.f32 %v2299
          %v2364 = vcvt.s32.f32 %v2300
          %v2365 = vcvt.s32.f32 %v2301
          %v2366 = vcvt.s32.f32 %v2302
          %v2367 = vcvt.s32.f32 %v2303
          %v2368 = vcvt.s32.f32 %v2304
          %v2369 = vcvt.s32.f32 %v2305
          %v2370 = vcvt.s32.f32 %v2306
          %v2371 = vcvt.s32.f32 %v2307
          %v2372 = vcvt.s32.f32 %v2308
          %v2373 = vcvt.s32.f32 %v2309
          %v2374 = vcvt.s32.f32 %v2310
          %v2375 = vcvt.s32.f32 %v2311
          %v2376 = vcvt.s32.f32 %v2312
          %v2377 = vcvt.s32.f32 %v2313
          %v2378 = vcvt.s32.f32 %v2314
          %v2379 = vcvt.s32.f32 %v2315
          %v2380 = vcvt.s32.f32 %v2316
          %v2381 = vcvt.s32.f32 %v2317
          %v2382 = vcvt.s32.f32 %v2318
          %v2383 = vcvt.s32.f32 %v2319
          %v2384 = vcvt.s32.f32 %v2320
          %v2385 = vcvt.s32.f32 %v2321
          %v2386 = vcvt.s32.f32 %v2322
          %v2387 = vcvt.s32.f32 %v2323
          %v2388 = vcvt.s32.f32 %v2324
          %v2389 = vcvt.s32.f32 %v2325
          %v2390 = vcvt.s32.f32 %v2326
          %v2391 = vcvt.s32.f32 %v2327
          %v2392 = vcvt.s32.f32 %v2328
          %v2393 = vcvt.s32.f32 %v2329
          %v2394 = vcvt.s32.f32 %v2330
          %v2395 = vcvt.s32.f32 %v2331
          %v2396 = vcvt.s32.f32 %v2332
          %v2397 = vcvt.s32.f32 %v2333
          %v2398 = vcvt.s32.f32 %v2334
          %v2399 = vcvt.s32.f32 %v2335
          %v2400 = vcvt.s32.f32 %v2336
          %v2401 = vcvt.s32.f32 %v2337
          %v2402 = vcvt.s32.f32 %v2338
          %v2403 = vcvt.s32.f32 %v2339
          %v2404 = vpack.c.bf16 %v2341, %v2340
          %v2405 = vpack.c.bf16 %v2343, %v2342
          %v2406 = vpack.c.bf16 %v2345, %v2344
          %v2407 = vpack.c.bf16 %v2347, %v2346
          %v2408 = vpack.c.bf16 %v2349, %v2348
          %v2409 = vpack.c.bf16 %v2351, %v2350
          %v2410 = vpack.c.bf16 %v2353, %v2352
          %v2411 = vpack.c.bf16 %v2355, %v2354
          %v2412 = vpack.c.bf16 %v2357, %v2356
          %v2413 = vpack.c.bf16 %v2359, %v2358
          %v2414 = vpack.c.bf16 %v2361, %v2360
          %v2415 = vpack.c.bf16 %v2363, %v2362
          %v2416 = vpack.c.bf16 %v2365, %v2364
          %v2417 = vpack.c.bf16 %v2367, %v2366
          %v2418 = vpack.c.bf16 %v2369, %v2368
          %v2419 = vpack.c.bf16 %v2371, %v2370
          %v2420 = vpack.c.bf16 %v2373, %v2372
          %v2421 = vpack.c.bf16 %v2375, %v2374
          %v2422 = vpack.c.bf16 %v2377, %v2376
          %v2423 = vpack.c.bf16 %v2379, %v2378
          %v2424 = vpack.c.bf16 %v2381, %v2380
          %v2425 = vpack.c.bf16 %v2383, %v2382
          %v2426 = vpack.c.bf16 %v2385, %v2384
          %v2427 = vpack.c.bf16 %v2387, %v2386
          %v2428 = vpack.c.bf16 %v2389, %v2388
          %v2429 = vpack.c.bf16 %v2391, %v2390
          %v2430 = vpack.c.bf16 %v2393, %v2392
          %v2431 = vpack.c.bf16 %v2395, %v2394
          %v2432 = vpack.c.bf16 %v2397, %v2396
          %v2433 = vpack.c.bf16 %v2399, %v2398
          %v2434 = vpack.c.bf16 %v2401, %v2400
          %v2435 = vpack.c.bf16 %v2403, %v2402
          %v2436 = vld [vmem:[%s237] sm:$0xf]
          %v2437 = vlaneseq
          %v2438 = vshrl.u32 %v2437, 7
          %v2439 = vsub.s32 0, %v2438
          %v2440 = vrot.slane %v2436, %v2439
          %v2441 = vlaneseq
          %v2442 = vshrl.u32 %v2441, 7
          %v2443 = vsub.s32 1, %v2442
          %v2444 = vrot.slane %v2436, %v2443
          %v2445 = vlaneseq
          %v2446 = vshrl.u32 %v2445, 7
          %v2447 = vsub.s32 2, %v2446
          %v2448 = vrot.slane %v2436, %v2447
          %v2449 = vlaneseq
          %v2450 = vshrl.u32 %v2449, 7
          %v2451 = vsub.s32 3, %v2450
          %v2452 = vrot.slane %v2436, %v2451
          %vm2453 = vcmp.eq.s32.totalorder %v241, %v2440
          %vm2454 = vcmp.eq.s32.totalorder %v241, %v2444
          %vm2455 = vcmp.eq.s32.totalorder %v241, %v2448
          %vm2456 = vcmp.eq.s32.totalorder %v241, %v2452
          %vm2457 = vcmp.eq.s32.totalorder %v242, %v2440
          %vm2458 = vcmp.eq.s32.totalorder %v242, %v2444
          %vm2459 = vcmp.eq.s32.totalorder %v242, %v2448
          %vm2460 = vcmp.eq.s32.totalorder %v242, %v2452
          %vm2461 = vcmp.eq.s32.totalorder %v243, %v2440
          %vm2462 = vcmp.eq.s32.totalorder %v243, %v2444
          %vm2463 = vcmp.eq.s32.totalorder %v243, %v2448
          %vm2464 = vcmp.eq.s32.totalorder %v243, %v2452
          %vm2465 = vcmp.eq.s32.totalorder %v244, %v2440
          %vm2466 = vcmp.eq.s32.totalorder %v244, %v2444
          %vm2467 = vcmp.eq.s32.totalorder %v244, %v2448
          %vm2468 = vcmp.eq.s32.totalorder %v244, %v2452
          %vm2469 = vcmp.eq.s32.totalorder %v245, %v2440
          %vm2470 = vcmp.eq.s32.totalorder %v245, %v2444
          %vm2471 = vcmp.eq.s32.totalorder %v245, %v2448
          %vm2472 = vcmp.eq.s32.totalorder %v245, %v2452
          %vm2473 = vcmp.eq.s32.totalorder %v246, %v2440
          %vm2474 = vcmp.eq.s32.totalorder %v246, %v2444
          %vm2475 = vcmp.eq.s32.totalorder %v246, %v2448
          %vm2476 = vcmp.eq.s32.totalorder %v246, %v2452
          %vm2477 = vcmp.eq.s32.totalorder %v247, %v2440
          %vm2478 = vcmp.eq.s32.totalorder %v247, %v2444
          %vm2479 = vcmp.eq.s32.totalorder %v247, %v2448
          %vm2480 = vcmp.eq.s32.totalorder %v247, %v2452
          %vm2481 = vcmp.eq.s32.totalorder %v248, %v2440
          %vm2482 = vcmp.eq.s32.totalorder %v248, %v2444
          %vm2483 = vcmp.eq.s32.totalorder %v248, %v2448
          %vm2484 = vcmp.eq.s32.totalorder %v248, %v2452
          %vm2485 = vcmp.eq.s32.totalorder %v249, %v2440
          %vm2486 = vcmp.eq.s32.totalorder %v249, %v2444
          %vm2487 = vcmp.eq.s32.totalorder %v249, %v2448
          %vm2488 = vcmp.eq.s32.totalorder %v249, %v2452
          %vm2489 = vcmp.eq.s32.totalorder %v250, %v2440
          %vm2490 = vcmp.eq.s32.totalorder %v250, %v2444
          %vm2491 = vcmp.eq.s32.totalorder %v250, %v2448
          %vm2492 = vcmp.eq.s32.totalorder %v250, %v2452
          %vm2493 = vcmp.eq.s32.totalorder %v251, %v2440
          %vm2494 = vcmp.eq.s32.totalorder %v251, %v2444
          %vm2495 = vcmp.eq.s32.totalorder %v251, %v2448
          %vm2496 = vcmp.eq.s32.totalorder %v251, %v2452
          %vm2497 = vcmp.eq.s32.totalorder %v252, %v2440
          %vm2498 = vcmp.eq.s32.totalorder %v252, %v2444
          %vm2499 = vcmp.eq.s32.totalorder %v252, %v2448
          %vm2500 = vcmp.eq.s32.totalorder %v252, %v2452
          %vm2501 = vcmp.eq.s32.totalorder %v253, %v2440
          %vm2502 = vcmp.eq.s32.totalorder %v253, %v2444
          %vm2503 = vcmp.eq.s32.totalorder %v253, %v2448
          %vm2504 = vcmp.eq.s32.totalorder %v253, %v2452
          %vm2505 = vcmp.eq.s32.totalorder %v254, %v2440
          %vm2506 = vcmp.eq.s32.totalorder %v254, %v2444
          %vm2507 = vcmp.eq.s32.totalorder %v254, %v2448
          %vm2508 = vcmp.eq.s32.totalorder %v254, %v2452
          %vm2509 = vcmp.eq.s32.totalorder %v255, %v2440
          %vm2510 = vcmp.eq.s32.totalorder %v255, %v2444
          %vm2511 = vcmp.eq.s32.totalorder %v255, %v2448
          %vm2512 = vcmp.eq.s32.totalorder %v255, %v2452
          %vm2513 = vcmp.eq.s32.totalorder %v256, %v2440
          %vm2514 = vcmp.eq.s32.totalorder %v256, %v2444
          %vm2515 = vcmp.eq.s32.totalorder %v256, %v2448
          %vm2516 = vcmp.eq.s32.totalorder %v256, %v2452
          %v2517 = vsel %vm2453, 1, 0
          %v2518 = vsel %vm2454, 1, 0
          %v2519 = vsel %vm2455, 1, 0
          %v2520 = vsel %vm2456, 1, 0
          %v2521 = vsel %vm2457, 1, 0
          %v2522 = vsel %vm2458, 1, 0
          %v2523 = vsel %vm2459, 1, 0
          %v2524 = vsel %vm2460, 1, 0
          %v2525 = vsel %vm2461, 1, 0
          %v2526 = vsel %vm2462, 1, 0
          %v2527 = vsel %vm2463, 1, 0
          %v2528 = vsel %vm2464, 1, 0
          %v2529 = vsel %vm2465, 1, 0
          %v2530 = vsel %vm2466, 1, 0
          %v2531 = vsel %vm2467, 1, 0
          %v2532 = vsel %vm2468, 1, 0
          %v2533 = vsel %vm2469, 1, 0
          %v2534 = vsel %vm2470, 1, 0
          %v2535 = vsel %vm2471, 1, 0
          %v2536 = vsel %vm2472, 1, 0
          %v2537 = vsel %vm2473, 1, 0
          %v2538 = vsel %vm2474, 1, 0
          %v2539 = vsel %vm2475, 1, 0
          %v2540 = vsel %vm2476, 1, 0
          %v2541 = vsel %vm2477, 1, 0
          %v2542 = vsel %vm2478, 1, 0
          %v2543 = vsel %vm2479, 1, 0
          %v2544 = vsel %vm2480, 1, 0
          %v2545 = vsel %vm2481, 1, 0
          %v2546 = vsel %vm2482, 1, 0
          %v2547 = vsel %vm2483, 1, 0
          %v2548 = vsel %vm2484, 1, 0
          %v2549 = vsel %vm2485, 1, 0
          %v2550 = vsel %vm2486, 1, 0
          %v2551 = vsel %vm2487, 1, 0
          %v2552 = vsel %vm2488, 1, 0
          %v2553 = vsel %vm2489, 1, 0
          %v2554 = vsel %vm2490, 1, 0
          %v2555 = vsel %vm2491, 1, 0
          %v2556 = vsel %vm2492, 1, 0
          %v2557 = vsel %vm2493, 1, 0
          %v2558 = vsel %vm2494, 1, 0
          %v2559 = vsel %vm2495, 1, 0
          %v2560 = vsel %vm2496, 1, 0
          %v2561 = vsel %vm2497, 1, 0
          %v2562 = vsel %vm2498, 1, 0
          %v2563 = vsel %vm2499, 1, 0
          %v2564 = vsel %vm2500, 1, 0
          %v2565 = vsel %vm2501, 1, 0
          %v2566 = vsel %vm2502, 1, 0
          %v2567 = vsel %vm2503, 1, 0
          %v2568 = vsel %vm2504, 1, 0
          %v2569 = vsel %vm2505, 1, 0
          %v2570 = vsel %vm2506, 1, 0
          %v2571 = vsel %vm2507, 1, 0
          %v2572 = vsel %vm2508, 1, 0
          %v2573 = vsel %vm2509, 1, 0
          %v2574 = vsel %vm2510, 1, 0
          %v2575 = vsel %vm2511, 1, 0
          %v2576 = vsel %vm2512, 1, 0
          %v2577 = vsel %vm2513, 1, 0
          %v2578 = vsel %vm2514, 1, 0
          %v2579 = vsel %vm2515, 1, 0
          %v2580 = vsel %vm2516, 1, 0
          %v2581 = vcvt.s32.f32 %v2517
          %v2582 = vcvt.s32.f32 %v2518
          %v2583 = vcvt.s32.f32 %v2519
          %v2584 = vcvt.s32.f32 %v2520
          %v2585 = vcvt.s32.f32 %v2521
          %v2586 = vcvt.s32.f32 %v2522
          %v2587 = vcvt.s32.f32 %v2523
          %v2588 = vcvt.s32.f32 %v2524
          %v2589 = vcvt.s32.f32 %v2525
          %v2590 = vcvt.s32.f32 %v2526
          %v2591 = vcvt.s32.f32 %v2527
          %v2592 = vcvt.s32.f32 %v2528
          %v2593 = vcvt.s32.f32 %v2529
          %v2594 = vcvt.s32.f32 %v2530
          %v2595 = vcvt.s32.f32 %v2531
          %v2596 = vcvt.s32.f32 %v2532
          %v2597 = vcvt.s32.f32 %v2533
          %v2598 = vcvt.s32.f32 %v2534
          %v2599 = vcvt.s32.f32 %v2535
          %v2600 = vcvt.s32.f32 %v2536
          %v2601 = vcvt.s32.f32 %v2537
          %v2602 = vcvt.s32.f32 %v2538
          %v2603 = vcvt.s32.f32 %v2539
          %v2604 = vcvt.s32.f32 %v2540
          %v2605 = vcvt.s32.f32 %v2541
          %v2606 = vcvt.s32.f32 %v2542
          %v2607 = vcvt.s32.f32 %v2543
          %v2608 = vcvt.s32.f32 %v2544
          %v2609 = vcvt.s32.f32 %v2545
          %v2610 = vcvt.s32.f32 %v2546
          %v2611 = vcvt.s32.f32 %v2547
          %v2612 = vcvt.s32.f32 %v2548
          %v2613 = vcvt.s32.f32 %v2549
          %v2614 = vcvt.s32.f32 %v2550
          %v2615 = vcvt.s32.f32 %v2551
          %v2616 = vcvt.s32.f32 %v2552
          %v2617 = vcvt.s32.f32 %v2553
          %v2618 = vcvt.s32.f32 %v2554
          %v2619 = vcvt.s32.f32 %v2555
          %v2620 = vcvt.s32.f32 %v2556
          %v2621 = vcvt.s32.f32 %v2557
          %v2622 = vcvt.s32.f32 %v2558
          %v2623 = vcvt.s32.f32 %v2559
          %v2624 = vcvt.s32.f32 %v2560
          %v2625 = vcvt.s32.f32 %v2561
          %v2626 = vcvt.s32.f32 %v2562
          %v2627 = vcvt.s32.f32 %v2563
          %v2628 = vcvt.s32.f32 %v2564
          %v2629 = vcvt.s32.f32 %v2565
          %v2630 = vcvt.s32.f32 %v2566
          %v2631 = vcvt.s32.f32 %v2567
          %v2632 = vcvt.s32.f32 %v2568
          %v2633 = vcvt.s32.f32 %v2569
          %v2634 = vcvt.s32.f32 %v2570
          %v2635 = vcvt.s32.f32 %v2571
          %v2636 = vcvt.s32.f32 %v2572
          %v2637 = vcvt.s32.f32 %v2573
          %v2638 = vcvt.s32.f32 %v2574
          %v2639 = vcvt.s32.f32 %v2575
          %v2640 = vcvt.s32.f32 %v2576
          %v2641 = vcvt.s32.f32 %v2577
          %v2642 = vcvt.s32.f32 %v2578
          %v2643 = vcvt.s32.f32 %v2579
          %v2644 = vcvt.s32.f32 %v2580
          %v2645 = vpack.c.bf16 %v2585, %v2581
          %v2646 = vpack.c.bf16 %v2586, %v2582
          %v2647 = vpack.c.bf16 %v2587, %v2583
          %v2648 = vpack.c.bf16 %v2588, %v2584
          %v2649 = vpack.c.bf16 %v2593, %v2589
          %v2650 = vpack.c.bf16 %v2594, %v2590
          %v2651 = vpack.c.bf16 %v2595, %v2591
          %v2652 = vpack.c.bf16 %v2596, %v2592
          %v2653 = vpack.c.bf16 %v2601, %v2597
          %v2654 = vpack.c.bf16 %v2602, %v2598
          %v2655 = vpack.c.bf16 %v2603, %v2599
          %v2656 = vpack.c.bf16 %v2604, %v2600
          %v2657 = vpack.c.bf16 %v2609, %v2605
          %v2658 = vpack.c.bf16 %v2610, %v2606
          %v2659 = vpack.c.bf16 %v2611, %v2607
          %v2660 = vpack.c.bf16 %v2612, %v2608
          %v2661 = vpack.c.bf16 %v2617, %v2613
          %v2662 = vpack.c.bf16 %v2618, %v2614
          %v2663 = vpack.c.bf16 %v2619, %v2615
          %v2664 = vpack.c.bf16 %v2620, %v2616
          %v2665 = vpack.c.bf16 %v2625, %v2621
          %v2666 = vpack.c.bf16 %v2626, %v2622
          %v2667 = vpack.c.bf16 %v2627, %v2623
          %v2668 = vpack.c.bf16 %v2628, %v2624
          %v2669 = vpack.c.bf16 %v2633, %v2629
          %v2670 = vpack.c.bf16 %v2634, %v2630
          %v2671 = vpack.c.bf16 %v2635, %v2631
          %v2672 = vpack.c.bf16 %v2636, %v2632
          %v2673 = vpack.c.bf16 %v2641, %v2637
          %v2674 = vpack.c.bf16 %v2642, %v2638
          %v2675 = vpack.c.bf16 %v2643, %v2639
          %v2676 = vpack.c.bf16 %v2644, %v2640
          %v2709 = vunpack.c.l.b16 %v2404
          %v2710 = vunpack.c.h.b16 %v2404
          %v2711 = vunpack.c.l.b16 %v2405
          %v2712 = vunpack.c.h.b16 %v2405
          %v2713 = vunpack.c.l.b16 %v2406
          %v2714 = vunpack.c.h.b16 %v2406
          %v2715 = vunpack.c.l.b16 %v2407
          %v2716 = vunpack.c.h.b16 %v2407
          %v2717 = vunpack.c.l.b16 %v2408
          %v2718 = vunpack.c.h.b16 %v2408
          %v2719 = vunpack.c.l.b16 %v2409
          %v2720 = vunpack.c.h.b16 %v2409
          %v2721 = vunpack.c.l.b16 %v2410
          %v2722 = vunpack.c.h.b16 %v2410
          %v2723 = vunpack.c.l.b16 %v2411
          %v2724 = vunpack.c.h.b16 %v2411
          %v2725 = vunpack.c.l.b16 %v2412
          %v2726 = vunpack.c.h.b16 %v2412
          %v2727 = vunpack.c.l.b16 %v2413
          %v2728 = vunpack.c.h.b16 %v2413
          %v2729 = vunpack.c.l.b16 %v2414
          %v2730 = vunpack.c.h.b16 %v2414
          %v2731 = vunpack.c.l.b16 %v2415
          %v2732 = vunpack.c.h.b16 %v2415
          %v2733 = vunpack.c.l.b16 %v2416
          %v2734 = vunpack.c.h.b16 %v2416
          %v2735 = vunpack.c.l.b16 %v2417
          %v2736 = vunpack.c.h.b16 %v2417
          %v2737 = vunpack.c.l.b16 %v2418
          %v2738 = vunpack.c.h.b16 %v2418
          %v2739 = vunpack.c.l.b16 %v2419
          %v2740 = vunpack.c.h.b16 %v2419
          %v2741 = vunpack.c.l.b16 %v2420
          %v2742 = vunpack.c.h.b16 %v2420
          %v2743 = vunpack.c.l.b16 %v2421
          %v2744 = vunpack.c.h.b16 %v2421
          %v2745 = vunpack.c.l.b16 %v2422
          %v2746 = vunpack.c.h.b16 %v2422
          %v2747 = vunpack.c.l.b16 %v2423
          %v2748 = vunpack.c.h.b16 %v2423
          %v2749 = vunpack.c.l.b16 %v2424
          %v2750 = vunpack.c.h.b16 %v2424
          %v2751 = vunpack.c.l.b16 %v2425
          %v2752 = vunpack.c.h.b16 %v2425
          %v2753 = vunpack.c.l.b16 %v2426
          %v2754 = vunpack.c.h.b16 %v2426
          %v2755 = vunpack.c.l.b16 %v2427
          %v2756 = vunpack.c.h.b16 %v2427
          %v2757 = vunpack.c.l.b16 %v2428
          %v2758 = vunpack.c.h.b16 %v2428
          %v2759 = vunpack.c.l.b16 %v2429
          %v2760 = vunpack.c.h.b16 %v2429
          %v2761 = vunpack.c.l.b16 %v2430
          %v2762 = vunpack.c.h.b16 %v2430
          %v2763 = vunpack.c.l.b16 %v2431
          %v2764 = vunpack.c.h.b16 %v2431
          %v2765 = vunpack.c.l.b16 %v2432
          %v2766 = vunpack.c.h.b16 %v2432
          %v2767 = vunpack.c.l.b16 %v2433
          %v2768 = vunpack.c.h.b16 %v2433
          %v2769 = vunpack.c.l.b16 %v2434
          %v2770 = vunpack.c.h.b16 %v2434
          %v2771 = vunpack.c.l.b16 %v2435
          %v2772 = vunpack.c.h.b16 %v2435
          %v2773 = vpack.c.b16 %v2709, %v2709
          %v2774 = vpack.c.b16 %v2710, %v2710
          %v2775 = vpack.c.b16 %v2711, %v2711
          %v2776 = vpack.c.b16 %v2712, %v2712
          %v2777 = vpack.c.b16 %v2713, %v2713
          %v2778 = vpack.c.b16 %v2714, %v2714
          %v2779 = vpack.c.b16 %v2715, %v2715
          %v2780 = vpack.c.b16 %v2716, %v2716
          %v2781 = vpack.c.b16 %v2717, %v2717
          %v2782 = vpack.c.b16 %v2718, %v2718
          %v2783 = vpack.c.b16 %v2719, %v2719
          %v2784 = vpack.c.b16 %v2720, %v2720
          %v2785 = vpack.c.b16 %v2721, %v2721
          %v2786 = vpack.c.b16 %v2722, %v2722
          %v2787 = vpack.c.b16 %v2723, %v2723
          %v2788 = vpack.c.b16 %v2724, %v2724
          %v2789 = vpack.c.b16 %v2725, %v2725
          %v2790 = vpack.c.b16 %v2726, %v2726
          %v2791 = vpack.c.b16 %v2727, %v2727
          %v2792 = vpack.c.b16 %v2728, %v2728
          %v2793 = vpack.c.b16 %v2729, %v2729
          %v2794 = vpack.c.b16 %v2730, %v2730
          %v2795 = vpack.c.b16 %v2731, %v2731
          %v2796 = vpack.c.b16 %v2732, %v2732
          %v2797 = vpack.c.b16 %v2733, %v2733
          %v2798 = vpack.c.b16 %v2734, %v2734
          %v2799 = vpack.c.b16 %v2735, %v2735
          %v2800 = vpack.c.b16 %v2736, %v2736
          %v2801 = vpack.c.b16 %v2737, %v2737
          %v2802 = vpack.c.b16 %v2738, %v2738
          %v2803 = vpack.c.b16 %v2739, %v2739
          %v2804 = vpack.c.b16 %v2740, %v2740
          %v2805 = vpack.c.b16 %v2741, %v2741
          %v2806 = vpack.c.b16 %v2742, %v2742
          %v2807 = vpack.c.b16 %v2743, %v2743
          %v2808 = vpack.c.b16 %v2744, %v2744
          %v2809 = vpack.c.b16 %v2745, %v2745
          %v2810 = vpack.c.b16 %v2746, %v2746
          %v2811 = vpack.c.b16 %v2747, %v2747
          %v2812 = vpack.c.b16 %v2748, %v2748
          %v2813 = vpack.c.b16 %v2749, %v2749
          %v2814 = vpack.c.b16 %v2750, %v2750
          %v2815 = vpack.c.b16 %v2751, %v2751
          %v2816 = vpack.c.b16 %v2752, %v2752
          %v2817 = vpack.c.b16 %v2753, %v2753
          %v2818 = vpack.c.b16 %v2754, %v2754
          %v2819 = vpack.c.b16 %v2755, %v2755
          %v2820 = vpack.c.b16 %v2756, %v2756
          %v2821 = vpack.c.b16 %v2757, %v2757
          %v2822 = vpack.c.b16 %v2758, %v2758
          %v2823 = vpack.c.b16 %v2759, %v2759
          %v2824 = vpack.c.b16 %v2760, %v2760
          %v2825 = vpack.c.b16 %v2761, %v2761
          %v2826 = vpack.c.b16 %v2762, %v2762
          %v2827 = vpack.c.b16 %v2763, %v2763
          %v2828 = vpack.c.b16 %v2764, %v2764
          %v2829 = vpack.c.b16 %v2765, %v2765
          %v2830 = vpack.c.b16 %v2766, %v2766
          %v2831 = vpack.c.b16 %v2767, %v2767
          %v2832 = vpack.c.b16 %v2768, %v2768
          %v2833 = vpack.c.b16 %v2769, %v2769
          %v2834 = vpack.c.b16 %v2770, %v2770
          %v2835 = vpack.c.b16 %v2771, %v2771
          %v2836 = vpack.c.b16 %v2772, %v2772
          %s2901 = smul.addr %s1889, 4
          %s2902 = scalar_lea.vmem [#allocation6], %s2901
          %2903 = vst [vmem:[%s2902] sm:$0xf] %v2773
          %2904 = vst [vmem:[%s2902 + $0x4] sm:$0xf] %v2774
          %2905 = vst [vmem:[%s2902 + $0x8] sm:$0xf] %v2775
          %2906 = vst [vmem:[%s2902 + $0xc] sm:$0xf] %v2776
          %2907 = vst [vmem:[%s2902 + $0x10] sm:$0xf] %v2777
          %2908 = vst [vmem:[%s2902 + $0x14] sm:$0xf] %v2778
          %2909 = vst [vmem:[%s2902 + $0x18] sm:$0xf] %v2779
          %2910 = vst [vmem:[%s2902 + $0x1c] sm:$0xf] %v2780
          %2911 = vst [vmem:[%s2902 + $0x20] sm:$0xf] %v2781
          %2912 = vst [vmem:[%s2902 + $0x24] sm:$0xf] %v2782
          %2913 = vst [vmem:[%s2902 + $0x28] sm:$0xf] %v2783
          %2914 = vst [vmem:[%s2902 + $0x2c] sm:$0xf] %v2784
          %2915 = vst [vmem:[%s2902 + $0x30] sm:$0xf] %v2785
          %2916 = vst [vmem:[%s2902 + $0x34] sm:$0xf] %v2786
          %2917 = vst [vmem:[%s2902 + $0x38] sm:$0xf] %v2787
          %2918 = vst [vmem:[%s2902 + $0x3c] sm:$0xf] %v2788
          %2919 = vst [vmem:[%s2902 + $0x40] sm:$0xf] %v2789
          %2920 = vst [vmem:[%s2902 + $0x44] sm:$0xf] %v2790
          %2921 = vst [vmem:[%s2902 + $0x48] sm:$0xf] %v2791
          %2922 = vst [vmem:[%s2902 + $0x4c] sm:$0xf] %v2792
          %2923 = vst [vmem:[%s2902 + $0x50] sm:$0xf] %v2793
          %2924 = vst [vmem:[%s2902 + $0x54] sm:$0xf] %v2794
          %2925 = vst [vmem:[%s2902 + $0x58] sm:$0xf] %v2795
          %2926 = vst [vmem:[%s2902 + $0x5c] sm:$0xf] %v2796
          %2927 = vst [vmem:[%s2902 + $0x60] sm:$0xf] %v2797
          %2928 = vst [vmem:[%s2902 + $0x64] sm:$0xf] %v2798
          %2929 = vst [vmem:[%s2902 + $0x68] sm:$0xf] %v2799
          %2930 = vst [vmem:[%s2902 + $0x6c] sm:$0xf] %v2800
          %2931 = vst [vmem:[%s2902 + $0x70] sm:$0xf] %v2801
          %2932 = vst [vmem:[%s2902 + $0x74] sm:$0xf] %v2802
          %2933 = vst [vmem:[%s2902 + $0x78] sm:$0xf] %v2803
          %2934 = vst [vmem:[%s2902 + $0x7c] sm:$0xf] %v2804
          %2935 = vst [vmem:[%s2902 + $0x80] sm:$0xf] %v2805
          %2936 = vst [vmem:[%s2902 + $0x84] sm:$0xf] %v2806
          %2937 = vst [vmem:[%s2902 + $0x88] sm:$0xf] %v2807
          %2938 = vst [vmem:[%s2902 + $0x8c] sm:$0xf] %v2808
          %2939 = vst [vmem:[%s2902 + $0x90] sm:$0xf] %v2809
          %2940 = vst [vmem:[%s2902 + $0x94] sm:$0xf] %v2810
          %2941 = vst [vmem:[%s2902 + $0x98] sm:$0xf] %v2811
          %2942 = vst [vmem:[%s2902 + $0x9c] sm:$0xf] %v2812
          %2943 = vst [vmem:[%s2902 + $0xa0] sm:$0xf] %v2813
          %2944 = vst [vmem:[%s2902 + $0xa4] sm:$0xf] %v2814
          %2945 = vst [vmem:[%s2902 + $0xa8] sm:$0xf] %v2815
          %2946 = vst [vmem:[%s2902 + $0xac] sm:$0xf] %v2816
          %2947 = vst [vmem:[%s2902 + $0xb0] sm:$0xf] %v2817
          %2948 = vst [vmem:[%s2902 + $0xb4] sm:$0xf] %v2818
          %2949 = vst [vmem:[%s2902 + $0xb8] sm:$0xf] %v2819
          %2950 = vst [vmem:[%s2902 + $0xbc] sm:$0xf] %v2820
          %2951 = vst [vmem:[%s2902 + $0xc0] sm:$0xf] %v2821
          %2952 = vst [vmem:[%s2902 + $0xc4] sm:$0xf] %v2822
          %2953 = vst [vmem:[%s2902 + $0xc8] sm:$0xf] %v2823
          %2954 = vst [vmem:[%s2902 + $0xcc] sm:$0xf] %v2824
          %2955 = vst [vmem:[%s2902 + $0xd0] sm:$0xf] %v2825
          %2956 = vst [vmem:[%s2902 + $0xd4] sm:$0xf] %v2826
          %2957 = vst [vmem:[%s2902 + $0xd8] sm:$0xf] %v2827
          %2958 = vst [vmem:[%s2902 + $0xdc] sm:$0xf] %v2828
          %2959 = vst [vmem:[%s2902 + $0xe0] sm:$0xf] %v2829
          %2960 = vst [vmem:[%s2902 + $0xe4] sm:$0xf] %v2830
          %2961 = vst [vmem:[%s2902 + $0xe8] sm:$0xf] %v2831
          %2962 = vst [vmem:[%s2902 + $0xec] sm:$0xf] %v2832
          %2963 = vst [vmem:[%s2902 + $0xf0] sm:$0xf] %v2833
          %2964 = vst [vmem:[%s2902 + $0xf4] sm:$0xf] %v2834
          %2965 = vst [vmem:[%s2902 + $0xf8] sm:$0xf] %v2835
          %2966 = vst [vmem:[%s2902 + $0xfc] sm:$0xf] %v2836
          %v2999 = vunpack.c.l.b16 %v2645
          %v3000 = vunpack.c.l.b16 %v2646
          %v3001 = vunpack.c.l.b16 %v2647
          %v3002 = vunpack.c.l.b16 %v2648
          %v3003 = vunpack.c.h.b16 %v2645
          %v3004 = vunpack.c.h.b16 %v2646
          %v3005 = vunpack.c.h.b16 %v2647
          %v3006 = vunpack.c.h.b16 %v2648
          %v3007 = vunpack.c.l.b16 %v2649
          %v3008 = vunpack.c.l.b16 %v2650
          %v3009 = vunpack.c.l.b16 %v2651
          %v3010 = vunpack.c.l.b16 %v2652
          %v3011 = vunpack.c.h.b16 %v2649
          %v3012 = vunpack.c.h.b16 %v2650
          %v3013 = vunpack.c.h.b16 %v2651
          %v3014 = vunpack.c.h.b16 %v2652
          %v3015 = vunpack.c.l.b16 %v2653
          %v3016 = vunpack.c.l.b16 %v2654
          %v3017 = vunpack.c.l.b16 %v2655
          %v3018 = vunpack.c.l.b16 %v2656
          %v3019 = vunpack.c.h.b16 %v2653
          %v3020 = vunpack.c.h.b16 %v2654
          %v3021 = vunpack.c.h.b16 %v2655
          %v3022 = vunpack.c.h.b16 %v2656
          %v3023 = vunpack.c.l.b16 %v2657
          %v3024 = vunpack.c.l.b16 %v2658
          %v3025 = vunpack.c.l.b16 %v2659
          %v3026 = vunpack.c.l.b16 %v2660
          %v3027 = vunpack.c.h.b16 %v2657
          %v3028 = vunpack.c.h.b16 %v2658
          %v3029 = vunpack.c.h.b16 %v2659
          %v3030 = vunpack.c.h.b16 %v2660
          %v3031 = vunpack.c.l.b16 %v2661
          %v3032 = vunpack.c.l.b16 %v2662
          %v3033 = vunpack.c.l.b16 %v2663
          %v3034 = vunpack.c.l.b16 %v2664
          %v3035 = vunpack.c.h.b16 %v2661
          %v3036 = vunpack.c.h.b16 %v2662
          %v3037 = vunpack.c.h.b16 %v2663
          %v3038 = vunpack.c.h.b16 %v2664
          %v3039 = vunpack.c.l.b16 %v2665
          %v3040 = vunpack.c.l.b16 %v2666
          %v3041 = vunpack.c.l.b16 %v2667
          %v3042 = vunpack.c.l.b16 %v2668
          %v3043 = vunpack.c.h.b16 %v2665
          %v3044 = vunpack.c.h.b16 %v2666
          %v3045 = vunpack.c.h.b16 %v2667
          %v3046 = vunpack.c.h.b16 %v2668
          %v3047 = vunpack.c.l.b16 %v2669
          %v3048 = vunpack.c.l.b16 %v2670
          %v3049 = vunpack.c.l.b16 %v2671
          %v3050 = vunpack.c.l.b16 %v2672
          %v3051 = vunpack.c.h.b16 %v2669
          %v3052 = vunpack.c.h.b16 %v2670
          %v3053 = vunpack.c.h.b16 %v2671
          %v3054 = vunpack.c.h.b16 %v2672
          %v3055 = vunpack.c.l.b16 %v2673
          %v3056 = vunpack.c.l.b16 %v2674
          %v3057 = vunpack.c.l.b16 %v2675
          %v3058 = vunpack.c.l.b16 %v2676
          %v3059 = vunpack.c.h.b16 %v2673
          %v3060 = vunpack.c.h.b16 %v2674
          %v3061 = vunpack.c.h.b16 %v2675
          %v3062 = vunpack.c.h.b16 %v2676
          %v3063 = vpack.c.b16 %v3000, %v2999
          %v3064 = vpack.c.b16 %v3002, %v3001
          %v3065 = vpack.c.b16 %v3004, %v3003
          %v3066 = vpack.c.b16 %v3006, %v3005
          %v3067 = vpack.c.b16 %v3008, %v3007
          %v3068 = vpack.c.b16 %v3010, %v3009
          %v3069 = vpack.c.b16 %v3012, %v3011
          %v3070 = vpack.c.b16 %v3014, %v3013
          %v3071 = vpack.c.b16 %v3016, %v3015
          %v3072 = vpack.c.b16 %v3018, %v3017
          %v3073 = vpack.c.b16 %v3020, %v3019
          %v3074 = vpack.c.b16 %v3022, %v3021
          %v3075 = vpack.c.b16 %v3024, %v3023
          %v3076 = vpack.c.b16 %v3026, %v3025
          %v3077 = vpack.c.b16 %v3028, %v3027
          %v3078 = vpack.c.b16 %v3030, %v3029
          %v3079 = vpack.c.b16 %v3032, %v3031
          %v3080 = vpack.c.b16 %v3034, %v3033
          %v3081 = vpack.c.b16 %v3036, %v3035
          %v3082 = vpack.c.b16 %v3038, %v3037
          %v3083 = vpack.c.b16 %v3040, %v3039
          %v3084 = vpack.c.b16 %v3042, %v3041
          %v3085 = vpack.c.b16 %v3044, %v3043
          %v3086 = vpack.c.b16 %v3046, %v3045
          %v3087 = vpack.c.b16 %v3048, %v3047
          %v3088 = vpack.c.b16 %v3050, %v3049
          %v3089 = vpack.c.b16 %v3052, %v3051
          %v3090 = vpack.c.b16 %v3054, %v3053
          %v3091 = vpack.c.b16 %v3056, %v3055
          %v3092 = vpack.c.b16 %v3058, %v3057
          %v3093 = vpack.c.b16 %v3060, %v3059
          %v3094 = vpack.c.b16 %v3062, %v3061
          %s3127 = smul.addr %s1889, 4
          %s3128 = scalar_lea.vmem [#allocation7], %s3127
          %3129 = vst [vmem:[%s3128] sm:$0xff] %v3063
          %3130 = vst [vmem:[%s3128 + $0x8] sm:$0xff] %v3064
          %3131 = vst [vmem:[%s3128 + $0x10] sm:$0xff] %v3065
          %3132 = vst [vmem:[%s3128 + $0x18] sm:$0xff] %v3066
          %3133 = vst [vmem:[%s3128 + $0x20] sm:$0xff] %v3067
          %3134 = vst [vmem:[%s3128 + $0x28] sm:$0xff] %v3068
          %3135 = vst [vmem:[%s3128 + $0x30] sm:$0xff] %v3069
          %3136 = vst [vmem:[%s3128 + $0x38] sm:$0xff] %v3070
          %3137 = vst [vmem:[%s3128 + $0x40] sm:$0xff] %v3071
          %3138 = vst [vmem:[%s3128 + $0x48] sm:$0xff] %v3072
          %3139 = vst [vmem:[%s3128 + $0x50] sm:$0xff] %v3073
          %3140 = vst [vmem:[%s3128 + $0x58] sm:$0xff] %v3074
          %3141 = vst [vmem:[%s3128 + $0x60] sm:$0xff] %v3075
          %3142 = vst [vmem:[%s3128 + $0x68] sm:$0xff] %v3076
          %3143 = vst [vmem:[%s3128 + $0x70] sm:$0xff] %v3077
          %3144 = vst [vmem:[%s3128 + $0x78] sm:$0xff] %v3078
          %3145 = vst [vmem:[%s3128 + $0x80] sm:$0xff] %v3079
          %3146 = vst [vmem:[%s3128 + $0x88] sm:$0xff] %v3080
          %3147 = vst [vmem:[%s3128 + $0x90] sm:$0xff] %v3081
          %3148 = vst [vmem:[%s3128 + $0x98] sm:$0xff] %v3082
          %3149 = vst [vmem:[%s3128 + $0xa0] sm:$0xff] %v3083
          %3150 = vst [vmem:[%s3128 + $0xa8] sm:$0xff] %v3084
          %3151 = vst [vmem:[%s3128 + $0xb0] sm:$0xff] %v3085
          %3152 = vst [vmem:[%s3128 + $0xb8] sm:$0xff] %v3086
          %3153 = vst [vmem:[%s3128 + $0xc0] sm:$0xff] %v3087
          %3154 = vst [vmem:[%s3128 + $0xc8] sm:$0xff] %v3088
          %3155 = vst [vmem:[%s3128 + $0xd0] sm:$0xff] %v3089
          %3156 = vst [vmem:[%s3128 + $0xd8] sm:$0xff] %v3090
          %3157 = vst [vmem:[%s3128 + $0xe0] sm:$0xff] %v3091
          %3158 = vst [vmem:[%s3128 + $0xe8] sm:$0xff] %v3092
          %3159 = vst [vmem:[%s3128 + $0xf0] sm:$0xff] %v3093
          %3160 = vst [vmem:[%s3128 + $0xf8] sm:$0xff] %v3094
        $region48: #{tpu_custom_call.1} parent=35 // pred_fallthru
          _
        %s3161 = smul.u32 %s21, 64
        %s3162 = smul.addr %s3161, 4
        %s3163 = scalar_lea.vmem [#allocation6], %s3162
        %v3164 = vld [vmem:[%s3163] sm:$0xf]
        %v3165 = vld [vmem:[%s3163 + $0x4] sm:$0xf]
        %v3166 = vld [vmem:[%s3163 + $0x8] sm:$0xf]
        %v3167 = vld [vmem:[%s3163 + $0xc] sm:$0xf]
        %v3168 = vld [vmem:[%s3163 + $0x10] sm:$0xf]
        %v3169 = vld [vmem:[%s3163 + $0x14] sm:$0xf]
        %v3170 = vld [vmem:[%s3163 + $0x18] sm:$0xf]
        %v3171 = vld [vmem:[%s3163 + $0x1c] sm:$0xf]
        %v3172 = vld [vmem:[%s3163 + $0x20] sm:$0xf]
        %v3173 = vld [vmem:[%s3163 + $0x24] sm:$0xf]
        %v3174 = vld [vmem:[%s3163 + $0x28] sm:$0xf]
        %v3175 = vld [vmem:[%s3163 + $0x2c] sm:$0xf]
        %v3176 = vld [vmem:[%s3163 + $0x30] sm:$0xf]
        %v3177 = vld [vmem:[%s3163 + $0x34] sm:$0xf]
        %v3178 = vld [vmem:[%s3163 + $0x38] sm:$0xf]
        %v3179 = vld [vmem:[%s3163 + $0x3c] sm:$0xf]
        %v3180 = vld [vmem:[%s3163 + $0x40] sm:$0xf]
        %v3181 = vld [vmem:[%s3163 + $0x44] sm:$0xf]
        %v3182 = vld [vmem:[%s3163 + $0x48] sm:$0xf]
        %v3183 = vld [vmem:[%s3163 + $0x4c] sm:$0xf]
        %v3184 = vld [vmem:[%s3163 + $0x50] sm:$0xf]
        %v3185 = vld [vmem:[%s3163 + $0x54] sm:$0xf]
        %v3186 = vld [vmem:[%s3163 + $0x58] sm:$0xf]
        %v3187 = vld [vmem:[%s3163 + $0x5c] sm:$0xf]
        %v3188 = vld [vmem:[%s3163 + $0x60] sm:$0xf]
        %v3189 = vld [vmem:[%s3163 + $0x64] sm:$0xf]
        %v3190 = vld [vmem:[%s3163 + $0x68] sm:$0xf]
        %v3191 = vld [vmem:[%s3163 + $0x6c] sm:$0xf]
        %v3192 = vld [vmem:[%s3163 + $0x70] sm:$0xf]
        %v3193 = vld [vmem:[%s3163 + $0x74] sm:$0xf]
        %v3194 = vld [vmem:[%s3163 + $0x78] sm:$0xf]
        %v3195 = vld [vmem:[%s3163 + $0x7c] sm:$0xf]
        %v3196 = vld [vmem:[%s3163 + $0x80] sm:$0xf]
        %v3197 = vld [vmem:[%s3163 + $0x84] sm:$0xf]
        %v3198 = vld [vmem:[%s3163 + $0x88] sm:$0xf]
        %v3199 = vld [vmem:[%s3163 + $0x8c] sm:$0xf]
        %v3200 = vld [vmem:[%s3163 + $0x90] sm:$0xf]
        %v3201 = vld [vmem:[%s3163 + $0x94] sm:$0xf]
        %v3202 = vld [vmem:[%s3163 + $0x98] sm:$0xf]
        %v3203 = vld [vmem:[%s3163 + $0x9c] sm:$0xf]
        %v3204 = vld [vmem:[%s3163 + $0xa0] sm:$0xf]
        %v3205 = vld [vmem:[%s3163 + $0xa4] sm:$0xf]
        %v3206 = vld [vmem:[%s3163 + $0xa8] sm:$0xf]
        %v3207 = vld [vmem:[%s3163 + $0xac] sm:$0xf]
        %v3208 = vld [vmem:[%s3163 + $0xb0] sm:$0xf]
        %v3209 = vld [vmem:[%s3163 + $0xb4] sm:$0xf]
        %v3210 = vld [vmem:[%s3163 + $0xb8] sm:$0xf]
        %v3211 = vld [vmem:[%s3163 + $0xbc] sm:$0xf]
        %v3212 = vld [vmem:[%s3163 + $0xc0] sm:$0xf]
        %v3213 = vld [vmem:[%s3163 + $0xc4] sm:$0xf]
        %v3214 = vld [vmem:[%s3163 + $0xc8] sm:$0xf]
        %v3215 = vld [vmem:[%s3163 + $0xcc] sm:$0xf]
        %v3216 = vld [vmem:[%s3163 + $0xd0] sm:$0xf]
        %v3217 = vld [vmem:[%s3163 + $0xd4] sm:$0xf]
        %v3218 = vld [vmem:[%s3163 + $0xd8] sm:$0xf]
        %v3219 = vld [vmem:[%s3163 + $0xdc] sm:$0xf]
        %v3220 = vld [vmem:[%s3163 + $0xe0] sm:$0xf]
        %v3221 = vld [vmem:[%s3163 + $0xe4] sm:$0xf]
        %v3222 = vld [vmem:[%s3163 + $0xe8] sm:$0xf]
        %v3223 = vld [vmem:[%s3163 + $0xec] sm:$0xf]
        %v3224 = vld [vmem:[%s3163 + $0xf0] sm:$0xf]
        %v3225 = vld [vmem:[%s3163 + $0xf4] sm:$0xf]
        %v3226 = vld [vmem:[%s3163 + $0xf8] sm:$0xf]
        %v3227 = vld [vmem:[%s3163 + $0xfc] sm:$0xf]
        %s3228 = smul.addr %s3161, 4
        %s3229 = scalar_lea.vmem [#allocation7], %s3228
        %v3230 = vld [vmem:[%s3229] sm:$0xff]
        %v3231 = vld [vmem:[%s3229 + $0x8] sm:$0xff]
        %v3232 = vld [vmem:[%s3229 + $0x10] sm:$0xff]
        %v3233 = vld [vmem:[%s3229 + $0x18] sm:$0xff]
        %v3234 = vld [vmem:[%s3229 + $0x20] sm:$0xff]
        %v3235 = vld [vmem:[%s3229 + $0x28] sm:$0xff]
        %v3236 = vld [vmem:[%s3229 + $0x30] sm:$0xff]
        %v3237 = vld [vmem:[%s3229 + $0x38] sm:$0xff]
        %v3238 = vld [vmem:[%s3229 + $0x40] sm:$0xff]
        %v3239 = vld [vmem:[%s3229 + $0x48] sm:$0xff]
        %v3240 = vld [vmem:[%s3229 + $0x50] sm:$0xff]
        %v3241 = vld [vmem:[%s3229 + $0x58] sm:$0xff]
        %v3242 = vld [vmem:[%s3229 + $0x60] sm:$0xff]
        %v3243 = vld [vmem:[%s3229 + $0x68] sm:$0xff]
        %v3244 = vld [vmem:[%s3229 + $0x70] sm:$0xff]
        %v3245 = vld [vmem:[%s3229 + $0x78] sm:$0xff]
        %v3246 = vld [vmem:[%s3229 + $0x80] sm:$0xff]
        %v3247 = vld [vmem:[%s3229 + $0x88] sm:$0xff]
        %v3248 = vld [vmem:[%s3229 + $0x90] sm:$0xff]
        %v3249 = vld [vmem:[%s3229 + $0x98] sm:$0xff]
        %v3250 = vld [vmem:[%s3229 + $0xa0] sm:$0xff]
        %v3251 = vld [vmem:[%s3229 + $0xa8] sm:$0xff]
        %v3252 = vld [vmem:[%s3229 + $0xb0] sm:$0xff]
        %v3253 = vld [vmem:[%s3229 + $0xb8] sm:$0xff]
        %v3254 = vld [vmem:[%s3229 + $0xc0] sm:$0xff]
        %v3255 = vld [vmem:[%s3229 + $0xc8] sm:$0xff]
        %v3256 = vld [vmem:[%s3229 + $0xd0] sm:$0xff]
        %v3257 = vld [vmem:[%s3229 + $0xd8] sm:$0xff]
        %v3258 = vld [vmem:[%s3229 + $0xe0] sm:$0xff]
        %v3259 = vld [vmem:[%s3229 + $0xe8] sm:$0xff]
        %v3260 = vld [vmem:[%s3229 + $0xf0] sm:$0xff]
        %v3261 = vld [vmem:[%s3229 + $0xf8] sm:$0xff]
        %s3262 = smul.addr %s3161, 4
        %s3263 = scalar_lea.vmem [#allocation5], %s3262
        %v3264 = vld [vmem:[%s3263] sm:$0xf]
        %v3265 = vld [vmem:[%s3263 + $0x4] sm:$0xf]
        %v3266 = vld [vmem:[%s3263 + $0x8] sm:$0xf]
        %v3267 = vld [vmem:[%s3263 + $0xc] sm:$0xf]
        %v3268 = vld [vmem:[%s3263 + $0x10] sm:$0xf]
        %v3269 = vld [vmem:[%s3263 + $0x14] sm:$0xf]
        %v3270 = vld [vmem:[%s3263 + $0x18] sm:$0xf]
        %v3271 = vld [vmem:[%s3263 + $0x1c] sm:$0xf]
        %v3272 = vld [vmem:[%s3263 + $0x20] sm:$0xf]
        %v3273 = vld [vmem:[%s3263 + $0x24] sm:$0xf]
        %v3274 = vld [vmem:[%s3263 + $0x28] sm:$0xf]
        %v3275 = vld [vmem:[%s3263 + $0x2c] sm:$0xf]
        %v3276 = vld [vmem:[%s3263 + $0x30] sm:$0xf]
        %v3277 = vld [vmem:[%s3263 + $0x34] sm:$0xf]
        %v3278 = vld [vmem:[%s3263 + $0x38] sm:$0xf]
        %v3279 = vld [vmem:[%s3263 + $0x3c] sm:$0xf]
        %v3280 = vld [vmem:[%s3263 + $0x40] sm:$0xf]
        %v3281 = vld [vmem:[%s3263 + $0x44] sm:$0xf]
        %v3282 = vld [vmem:[%s3263 + $0x48] sm:$0xf]
        %v3283 = vld [vmem:[%s3263 + $0x4c] sm:$0xf]
        %v3284 = vld [vmem:[%s3263 + $0x50] sm:$0xf]
        %v3285 = vld [vmem:[%s3263 + $0x54] sm:$0xf]
        %v3286 = vld [vmem:[%s3263 + $0x58] sm:$0xf]
        %v3287 = vld [vmem:[%s3263 + $0x5c] sm:$0xf]
        %v3288 = vld [vmem:[%s3263 + $0x60] sm:$0xf]
        %v3289 = vld [vmem:[%s3263 + $0x64] sm:$0xf]
        %v3290 = vld [vmem:[%s3263 + $0x68] sm:$0xf]
        %v3291 = vld [vmem:[%s3263 + $0x6c] sm:$0xf]
        %v3292 = vld [vmem:[%s3263 + $0x70] sm:$0xf]
        %v3293 = vld [vmem:[%s3263 + $0x74] sm:$0xf]
        %v3294 = vld [vmem:[%s3263 + $0x78] sm:$0xf]
        %v3295 = vld [vmem:[%s3263 + $0x7c] sm:$0xf]
        %v3296 = vld [vmem:[%s3263 + $0x80] sm:$0xf]
        %v3297 = vld [vmem:[%s3263 + $0x84] sm:$0xf]
        %v3298 = vld [vmem:[%s3263 + $0x88] sm:$0xf]
        %v3299 = vld [vmem:[%s3263 + $0x8c] sm:$0xf]
        %v3300 = vld [vmem:[%s3263 + $0x90] sm:$0xf]
        %v3301 = vld [vmem:[%s3263 + $0x94] sm:$0xf]
        %v3302 = vld [vmem:[%s3263 + $0x98] sm:$0xf]
        %v3303 = vld [vmem:[%s3263 + $0x9c] sm:$0xf]
        %v3304 = vld [vmem:[%s3263 + $0xa0] sm:$0xf]
        %v3305 = vld [vmem:[%s3263 + $0xa4] sm:$0xf]
        %v3306 = vld [vmem:[%s3263 + $0xa8] sm:$0xf]
        %v3307 = vld [vmem:[%s3263 + $0xac] sm:$0xf]
        %v3308 = vld [vmem:[%s3263 + $0xb0] sm:$0xf]
        %v3309 = vld [vmem:[%s3263 + $0xb4] sm:$0xf]
        %v3310 = vld [vmem:[%s3263 + $0xb8] sm:$0xf]
        %v3311 = vld [vmem:[%s3263 + $0xbc] sm:$0xf]
        %v3312 = vld [vmem:[%s3263 + $0xc0] sm:$0xf]
        %v3313 = vld [vmem:[%s3263 + $0xc4] sm:$0xf]
        %v3314 = vld [vmem:[%s3263 + $0xc8] sm:$0xf]
        %v3315 = vld [vmem:[%s3263 + $0xcc] sm:$0xf]
        %v3316 = vld [vmem:[%s3263 + $0xd0] sm:$0xf]
        %v3317 = vld [vmem:[%s3263 + $0xd4] sm:$0xf]
        %v3318 = vld [vmem:[%s3263 + $0xd8] sm:$0xf]
        %v3319 = vld [vmem:[%s3263 + $0xdc] sm:$0xf]
        %v3320 = vld [vmem:[%s3263 + $0xe0] sm:$0xf]
        %v3321 = vld [vmem:[%s3263 + $0xe4] sm:$0xf]
        %v3322 = vld [vmem:[%s3263 + $0xe8] sm:$0xf]
        %v3323 = vld [vmem:[%s3263 + $0xec] sm:$0xf]
        %v3324 = vld [vmem:[%s3263 + $0xf0] sm:$0xf]
        %v3325 = vld [vmem:[%s3263 + $0xf4] sm:$0xf]
        %v3326 = vld [vmem:[%s3263 + $0xf8] sm:$0xf]
        %v3327 = vld [vmem:[%s3263 + $0xfc] sm:$0xf]
        %v3328 = vunpack.c.l.bf16 %v3264
        %v3329 = vunpack.c.l.bf16 %v3265
        %v3330 = vunpack.c.l.bf16 %v3266
        %v3331 = vunpack.c.l.bf16 %v3267
        %v3332 = vunpack.c.l.bf16 %v3268
        %v3333 = vunpack.c.l.bf16 %v3269
        %v3334 = vunpack.c.l.bf16 %v3270
        %v3335 = vunpack.c.l.bf16 %v3271
        %v3336 = vunpack.c.l.bf16 %v3272
        %v3337 = vunpack.c.l.bf16 %v3273
        %v3338 = vunpack.c.l.bf16 %v3274
        %v3339 = vunpack.c.l.bf16 %v3275
        %v3340 = vunpack.c.l.bf16 %v3276
        %v3341 = vunpack.c.l.bf16 %v3277
        %v3342 = vunpack.c.l.bf16 %v3278
        %v3343 = vunpack.c.l.bf16 %v3279
        %v3344 = vunpack.c.l.bf16 %v3280
        %v3345 = vunpack.c.l.bf16 %v3281
        %v3346 = vunpack.c.l.bf16 %v3282
        %v3347 = vunpack.c.l.bf16 %v3283
        %v3348 = vunpack.c.l.bf16 %v3284
        %v3349 = vunpack.c.l.bf16 %v3285
        %v3350 = vunpack.c.l.bf16 %v3286
        %v3351 = vunpack.c.l.bf16 %v3287
        %v3352 = vunpack.c.l.bf16 %v3288
        %v3353 = vunpack.c.l.bf16 %v3289
        %v3354 = vunpack.c.l.bf16 %v3290
        %v3355 = vunpack.c.l.bf16 %v3291
        %v3356 = vunpack.c.l.bf16 %v3292
        %v3357 = vunpack.c.l.bf16 %v3293
        %v3358 = vunpack.c.l.bf16 %v3294
        %v3359 = vunpack.c.l.bf16 %v3295
        %v3360 = vunpack.c.l.bf16 %v3296
        %v3361 = vunpack.c.l.bf16 %v3297
        %v3362 = vunpack.c.l.bf16 %v3298
        %v3363 = vunpack.c.l.bf16 %v3299
        %v3364 = vunpack.c.l.bf16 %v3300
        %v3365 = vunpack.c.l.bf16 %v3301
        %v3366 = vunpack.c.l.bf16 %v3302
        %v3367 = vunpack.c.l.bf16 %v3303
        %v3368 = vunpack.c.l.bf16 %v3304
        %v3369 = vunpack.c.l.bf16 %v3305
        %v3370 = vunpack.c.l.bf16 %v3306
        %v3371 = vunpack.c.l.bf16 %v3307
        %v3372 = vunpack.c.l.bf16 %v3308
        %v3373 = vunpack.c.l.bf16 %v3309
        %v3374 = vunpack.c.l.bf16 %v3310
        %v3375 = vunpack.c.l.bf16 %v3311
        %v3376 = vunpack.c.l.bf16 %v3312
        %v3377 = vunpack.c.l.bf16 %v3313
        %v3378 = vunpack.c.l.bf16 %v3314
        %v3379 = vunpack.c.l.bf16 %v3315
        %v3380 = vunpack.c.l.bf16 %v3316
        %v3381 = vunpack.c.l.bf16 %v3317
        %v3382 = vunpack.c.l.bf16 %v3318
        %v3383 = vunpack.c.l.bf16 %v3319
        %v3384 = vunpack.c.l.bf16 %v3320
        %v3385 = vunpack.c.l.bf16 %v3321
        %v3386 = vunpack.c.l.bf16 %v3322
        %v3387 = vunpack.c.l.bf16 %v3323
        %v3388 = vunpack.c.l.bf16 %v3324
        %v3389 = vunpack.c.l.bf16 %v3325
        %v3390 = vunpack.c.l.bf16 %v3326
        %v3391 = vunpack.c.l.bf16 %v3327
        %v3392 = vld [vmem:[#allocation3] sm:$0xff]
        %v3393 = vld [vmem:[#allocation3 + $0x8] sm:$0xff]
        %v3394 = vld [vmem:[#allocation3 + $0x10] sm:$0xff]
        %v3395 = vld [vmem:[#allocation3 + $0x18] sm:$0xff]
        %v3396 = vld [vmem:[#allocation3 + $0x20] sm:$0xff]
        %v3397 = vld [vmem:[#allocation3 + $0x28] sm:$0xff]
        %v3398 = vld [vmem:[#allocation3 + $0x30] sm:$0xff]
        %v3399 = vld [vmem:[#allocation3 + $0x38] sm:$0xff]
        %v3400 = vld [vmem:[#allocation3 + $0x40] sm:$0xff]
        %v3401 = vld [vmem:[#allocation3 + $0x48] sm:$0xff]
        %v3402 = vld [vmem:[#allocation3 + $0x50] sm:$0xff]
        %v3403 = vld [vmem:[#allocation3 + $0x58] sm:$0xff]
        %v3404 = vld [vmem:[#allocation3 + $0x60] sm:$0xff]
        %v3405 = vld [vmem:[#allocation3 + $0x68] sm:$0xff]
        %v3406 = vld [vmem:[#allocation3 + $0x70] sm:$0xff]
        %v3407 = vld [vmem:[#allocation3 + $0x78] sm:$0xff]
        %v3408 = vpack.c.bf16 %v3393, %v3392
        %v3409 = vpack.c.bf16 %v3395, %v3394
        %v3410 = vpack.c.bf16 %v3397, %v3396
        %v3411 = vpack.c.bf16 %v3399, %v3398
        %v3412 = vpack.c.bf16 %v3401, %v3400
        %v3413 = vpack.c.bf16 %v3403, %v3402
        %v3414 = vpack.c.bf16 %v3405, %v3404
        %v3415 = vpack.c.bf16 %v3407, %v3406
        %v3480 = vunpack.c.l.b16 %v3164
        %v3481 = vunpack.c.l.b16 %v3165
        %v3482 = vunpack.c.l.b16 %v3166
        %v3483 = vunpack.c.l.b16 %v3167
        %v3484 = vunpack.c.l.b16 %v3168
        %v3485 = vunpack.c.l.b16 %v3169
        %v3486 = vunpack.c.l.b16 %v3170
        %v3487 = vunpack.c.l.b16 %v3171
        %v3488 = vunpack.c.l.b16 %v3172
        %v3489 = vunpack.c.l.b16 %v3173
        %v3490 = vunpack.c.l.b16 %v3174
        %v3491 = vunpack.c.l.b16 %v3175
        %v3492 = vunpack.c.l.b16 %v3176
        %v3493 = vunpack.c.l.b16 %v3177
        %v3494 = vunpack.c.l.b16 %v3178
        %v3495 = vunpack.c.l.b16 %v3179
        %v3496 = vunpack.c.l.b16 %v3180
        %v3497 = vunpack.c.l.b16 %v3181
        %v3498 = vunpack.c.l.b16 %v3182
        %v3499 = vunpack.c.l.b16 %v3183
        %v3500 = vunpack.c.l.b16 %v3184
        %v3501 = vunpack.c.l.b16 %v3185
        %v3502 = vunpack.c.l.b16 %v3186
        %v3503 = vunpack.c.l.b16 %v3187
        %v3504 = vunpack.c.l.b16 %v3188
        %v3505 = vunpack.c.l.b16 %v3189
        %v3506 = vunpack.c.l.b16 %v3190
        %v3507 = vunpack.c.l.b16 %v3191
        %v3508 = vunpack.c.l.b16 %v3192
        %v3509 = vunpack.c.l.b16 %v3193
        %v3510 = vunpack.c.l.b16 %v3194
        %v3511 = vunpack.c.l.b16 %v3195
        %v3512 = vunpack.c.l.b16 %v3196
        %v3513 = vunpack.c.l.b16 %v3197
        %v3514 = vunpack.c.l.b16 %v3198
        %v3515 = vunpack.c.l.b16 %v3199
        %v3516 = vunpack.c.l.b16 %v3200
        %v3517 = vunpack.c.l.b16 %v3201
        %v3518 = vunpack.c.l.b16 %v3202
        %v3519 = vunpack.c.l.b16 %v3203
        %v3520 = vunpack.c.l.b16 %v3204
        %v3521 = vunpack.c.l.b16 %v3205
        %v3522 = vunpack.c.l.b16 %v3206
        %v3523 = vunpack.c.l.b16 %v3207
        %v3524 = vunpack.c.l.b16 %v3208
        %v3525 = vunpack.c.l.b16 %v3209
        %v3526 = vunpack.c.l.b16 %v3210
        %v3527 = vunpack.c.l.b16 %v3211
        %v3528 = vunpack.c.l.b16 %v3212
        %v3529 = vunpack.c.l.b16 %v3213
        %v3530 = vunpack.c.l.b16 %v3214
        %v3531 = vunpack.c.l.b16 %v3215
        %v3532 = vunpack.c.l.b16 %v3216
        %v3533 = vunpack.c.l.b16 %v3217
        %v3534 = vunpack.c.l.b16 %v3218
        %v3535 = vunpack.c.l.b16 %v3219
        %v3536 = vunpack.c.l.b16 %v3220
        %v3537 = vunpack.c.l.b16 %v3221
        %v3538 = vunpack.c.l.b16 %v3222
        %v3539 = vunpack.c.l.b16 %v3223
        %v3540 = vunpack.c.l.b16 %v3224
        %v3541 = vunpack.c.l.b16 %v3225
        %v3542 = vunpack.c.l.b16 %v3226
        %v3543 = vunpack.c.l.b16 %v3227
        %v3544 = vpack.c.b16 %v3481, %v3480
        %v3545 = vpack.c.b16 %v3483, %v3482
        %v3546 = vpack.c.b16 %v3485, %v3484
        %v3547 = vpack.c.b16 %v3487, %v3486
        %v3548 = vpack.c.b16 %v3489, %v3488
        %v3549 = vpack.c.b16 %v3491, %v3490
        %v3550 = vpack.c.b16 %v3493, %v3492
        %v3551 = vpack.c.b16 %v3495, %v3494
        %v3552 = vpack.c.b16 %v3497, %v3496
        %v3553 = vpack.c.b16 %v3499, %v3498
        %v3554 = vpack.c.b16 %v3501, %v3500
        %v3555 = vpack.c.b16 %v3503, %v3502
        %v3556 = vpack.c.b16 %v3505, %v3504
        %v3557 = vpack.c.b16 %v3507, %v3506
        %v3558 = vpack.c.b16 %v3509, %v3508
        %v3559 = vpack.c.b16 %v3511, %v3510
        %v3560 = vpack.c.b16 %v3513, %v3512
        %v3561 = vpack.c.b16 %v3515, %v3514
        %v3562 = vpack.c.b16 %v3517, %v3516
        %v3563 = vpack.c.b16 %v3519, %v3518
        %v3564 = vpack.c.b16 %v3521, %v3520
        %v3565 = vpack.c.b16 %v3523, %v3522
        %v3566 = vpack.c.b16 %v3525, %v3524
        %v3567 = vpack.c.b16 %v3527, %v3526
        %v3568 = vpack.c.b16 %v3529, %v3528
        %v3569 = vpack.c.b16 %v3531, %v3530
        %v3570 = vpack.c.b16 %v3533, %v3532
        %v3571 = vpack.c.b16 %v3535, %v3534
        %v3572 = vpack.c.b16 %v3537, %v3536
        %v3573 = vpack.c.b16 %v3539, %v3538
        %v3574 = vpack.c.b16 %v3541, %v3540
        %v3575 = vpack.c.b16 %v3543, %v3542
        %3608 = vmatprep.subr.bf16.mxu0 0
        %3609 = vmatpush1.bf16.msra.mxu0 %v3415
        %3610 = vmatprep.subr.bf16.mxu0 0
        %3611 = vmatpush1.bf16.msra.mxu0 %v3414
        %3612 = vmatprep.subr.bf16.mxu0 0
        %3613 = vmatpush1.bf16.msra.mxu0 %v3413
        %3614 = vmatprep.subr.bf16.mxu0 0
        %3615 = vmatpush1.bf16.msra.mxu0 %v3412
        %3616 = vmatprep.subr.bf16.mxu0 0
        %3617 = vmatpush1.bf16.msra.mxu0 %v3411
        %3618 = vmatprep.subr.bf16.mxu0 0
        %3619 = vmatpush1.bf16.msra.mxu0 %v3410
        %3620 = vmatprep.subr.bf16.mxu0 0
        %3621 = vmatpush1.bf16.msra.mxu0 %v3409
        %3622 = vmatprep.subr.bf16.mxu0 0
        %3623 = vmatpush1.bf16.msra.mxu0 %v3408
        %3624 = vmatprep.subr.bf16.mxu0 0
        %3625 = vmatpush2.bf16.msra.mxu0 0
        %3626 = vmatprep.subr.bf16.mxu0 0
        %3627 = vmatpush2.bf16.msra.mxu0 0
        %3628 = vmatprep.subr.bf16.mxu0 0
        %3629 = vmatpush2.bf16.msra.mxu0 0
        %3630 = vmatprep.subr.bf16.mxu0 0
        %3631 = vmatpush2.bf16.msra.mxu0 0
        %3632 = vmatprep.subr.bf16.mxu0 0
        %3633 = vmatpush2.bf16.msra.mxu0 0
        %3634 = vmatprep.subr.bf16.mxu0 0
        %3635 = vmatpush2.bf16.msra.mxu0 0
        %3636 = vmatprep.subr.bf16.mxu0 0
        %3637 = vmatpush2.bf16.msra.mxu0 0
        %3638 = vmatprep.subr.bf16.mxu0 0
        %3639 = vmatpush2.bf16.msra.mxu0 0
        %3640 = vmatprep.mubr.bf16.mxu0 0
        %3641 = vmatmul.mubr.bf16.gmra.mxu0 %v3544
        %v3642 = vpop.f32.mrf.mxu0
        %v3643 = vadd.f32 0.0, %v3642
        %v3644 = vpop.f32.mrf.mxu0
        %v3645 = vpop.f32.mrf.mxu0
        %v3646 = vadd.f32 0.0, %v3645
        %v3647 = vpop.f32.mrf.mxu0
        %3648 = vmatprep.mubr.bf16.mxu0 0
        %3649 = vmatmul.mubr.bf16.gmra.mxu0 %v3545
        %v3650 = vpop.f32.mrf.mxu0
        %v3651 = vadd.f32 0.0, %v3650
        %v3652 = vpop.f32.mrf.mxu0
        %v3653 = vpop.f32.mrf.mxu0
        %v3654 = vadd.f32 0.0, %v3653
        %v3655 = vpop.f32.mrf.mxu0
        %3656 = vmatprep.mubr.bf16.mxu0 0
        %3657 = vmatmul.mubr.bf16.gmra.mxu0 %v3546
        %v3658 = vpop.f32.mrf.mxu0
        %v3659 = vadd.f32 0.0, %v3658
        %v3660 = vpop.f32.mrf.mxu0
        %v3661 = vpop.f32.mrf.mxu0
        %v3662 = vadd.f32 0.0, %v3661
        %v3663 = vpop.f32.mrf.mxu0
        %3664 = vmatprep.mubr.bf16.mxu0 0
        %3665 = vmatmul.mubr.bf16.gmra.mxu0 %v3547
        %v3666 = vpop.f32.mrf.mxu0
        %v3667 = vadd.f32 0.0, %v3666
        %v3668 = vpop.f32.mrf.mxu0
        %v3669 = vpop.f32.mrf.mxu0
        %v3670 = vadd.f32 0.0, %v3669
        %v3671 = vpop.f32.mrf.mxu0
        %3672 = vmatprep.mubr.bf16.mxu0 0
        %3673 = vmatmul.mubr.bf16.gmra.mxu0 %v3548
        %v3674 = vpop.f32.mrf.mxu0
        %v3675 = vadd.f32 0.0, %v3674
        %v3676 = vpop.f32.mrf.mxu0
        %v3677 = vpop.f32.mrf.mxu0
        %v3678 = vadd.f32 0.0, %v3677
        %v3679 = vpop.f32.mrf.mxu0
        %3680 = vmatprep.mubr.bf16.mxu0 0
        %3681 = vmatmul.mubr.bf16.gmra.mxu0 %v3549
        %v3682 = vpop.f32.mrf.mxu0
        %v3683 = vadd.f32 0.0, %v3682
        %v3684 = vpop.f32.mrf.mxu0
        %v3685 = vpop.f32.mrf.mxu0
        %v3686 = vadd.f32 0.0, %v3685
        %v3687 = vpop.f32.mrf.mxu0
        %3688 = vmatprep.mubr.bf16.mxu0 0
        %3689 = vmatmul.mubr.bf16.gmra.mxu0 %v3550
        %v3690 = vpop.f32.mrf.mxu0
        %v3691 = vadd.f32 0.0, %v3690
        %v3692 = vpop.f32.mrf.mxu0
        %v3693 = vpop.f32.mrf.mxu0
        %v3694 = vadd.f32 0.0, %v3693
        %v3695 = vpop.f32.mrf.mxu0
        %3696 = vmatprep.mubr.bf16.mxu0 0
        %3697 = vmatmul.mubr.bf16.gmra.mxu0 %v3551
        %v3698 = vpop.f32.mrf.mxu0
        %v3699 = vadd.f32 0.0, %v3698
        %v3700 = vpop.f32.mrf.mxu0
        %v3701 = vpop.f32.mrf.mxu0
        %v3702 = vadd.f32 0.0, %v3701
        %v3703 = vpop.f32.mrf.mxu0
        %3704 = vmatprep.mubr.bf16.mxu0 0
        %3705 = vmatmul.mubr.bf16.gmra.mxu0 %v3552
        %v3706 = vpop.f32.mrf.mxu0
        %v3707 = vadd.f32 0.0, %v3706
        %v3708 = vpop.f32.mrf.mxu0
        %v3709 = vpop.f32.mrf.mxu0
        %v3710 = vadd.f32 0.0, %v3709
        %v3711 = vpop.f32.mrf.mxu0
        %3712 = vmatprep.mubr.bf16.mxu0 0
        %3713 = vmatmul.mubr.bf16.gmra.mxu0 %v3553
        %v3714 = vpop.f32.mrf.mxu0
        %v3715 = vadd.f32 0.0, %v3714
        %v3716 = vpop.f32.mrf.mxu0
        %v3717 = vpop.f32.mrf.mxu0
        %v3718 = vadd.f32 0.0, %v3717
        %v3719 = vpop.f32.mrf.mxu0
        %3720 = vmatprep.mubr.bf16.mxu0 0
        %3721 = vmatmul.mubr.bf16.gmra.mxu0 %v3554
        %v3722 = vpop.f32.mrf.mxu0
        %v3723 = vadd.f32 0.0, %v3722
        %v3724 = vpop.f32.mrf.mxu0
        %v3725 = vpop.f32.mrf.mxu0
        %v3726 = vadd.f32 0.0, %v3725
        %v3727 = vpop.f32.mrf.mxu0
        %3728 = vmatprep.mubr.bf16.mxu0 0
        %3729 = vmatmul.mubr.bf16.gmra.mxu0 %v3555
        %v3730 = vpop.f32.mrf.mxu0
        %v3731 = vadd.f32 0.0, %v3730
        %v3732 = vpop.f32.mrf.mxu0
        %v3733 = vpop.f32.mrf.mxu0
        %v3734 = vadd.f32 0.0, %v3733
        %v3735 = vpop.f32.mrf.mxu0
        %3736 = vmatprep.mubr.bf16.mxu0 0
        %3737 = vmatmul.mubr.bf16.gmra.mxu0 %v3556
        %v3738 = vpop.f32.mrf.mxu0
        %v3739 = vadd.f32 0.0, %v3738
        %v3740 = vpop.f32.mrf.mxu0
        %v3741 = vpop.f32.mrf.mxu0
        %v3742 = vadd.f32 0.0, %v3741
        %v3743 = vpop.f32.mrf.mxu0
        %3744 = vmatprep.mubr.bf16.mxu0 0
        %3745 = vmatmul.mubr.bf16.gmra.mxu0 %v3557
        %v3746 = vpop.f32.mrf.mxu0
        %v3747 = vadd.f32 0.0, %v3746
        %v3748 = vpop.f32.mrf.mxu0
        %v3749 = vpop.f32.mrf.mxu0
        %v3750 = vadd.f32 0.0, %v3749
        %v3751 = vpop.f32.mrf.mxu0
        %3752 = vmatprep.mubr.bf16.mxu0 0
        %3753 = vmatmul.mubr.bf16.gmra.mxu0 %v3558
        %v3754 = vpop.f32.mrf.mxu0
        %v3755 = vadd.f32 0.0, %v3754
        %v3756 = vpop.f32.mrf.mxu0
        %v3757 = vpop.f32.mrf.mxu0
        %v3758 = vadd.f32 0.0, %v3757
        %v3759 = vpop.f32.mrf.mxu0
        %3760 = vmatprep.mubr.bf16.mxu0 0
        %3761 = vmatmul.mubr.bf16.gmra.mxu0 %v3559
        %v3762 = vpop.f32.mrf.mxu0
        %v3763 = vadd.f32 0.0, %v3762
        %v3764 = vpop.f32.mrf.mxu0
        %v3765 = vpop.f32.mrf.mxu0
        %v3766 = vadd.f32 0.0, %v3765
        %v3767 = vpop.f32.mrf.mxu0
        %3768 = vmatprep.mubr.bf16.mxu0 0
        %3769 = vmatmul.mubr.bf16.gmra.mxu0 %v3560
        %v3770 = vpop.f32.mrf.mxu0
        %v3771 = vadd.f32 0.0, %v3770
        %v3772 = vpop.f32.mrf.mxu0
        %v3773 = vpop.f32.mrf.mxu0
        %v3774 = vadd.f32 0.0, %v3773
        %v3775 = vpop.f32.mrf.mxu0
        %3776 = vmatprep.mubr.bf16.mxu0 0
        %3777 = vmatmul.mubr.bf16.gmra.mxu0 %v3561
        %v3778 = vpop.f32.mrf.mxu0
        %v3779 = vadd.f32 0.0, %v3778
        %v3780 = vpop.f32.mrf.mxu0
        %v3781 = vpop.f32.mrf.mxu0
        %v3782 = vadd.f32 0.0, %v3781
        %v3783 = vpop.f32.mrf.mxu0
        %3784 = vmatprep.mubr.bf16.mxu0 0
        %3785 = vmatmul.mubr.bf16.gmra.mxu0 %v3562
        %v3786 = vpop.f32.mrf.mxu0
        %v3787 = vadd.f32 0.0, %v3786
        %v3788 = vpop.f32.mrf.mxu0
        %v3789 = vpop.f32.mrf.mxu0
        %v3790 = vadd.f32 0.0, %v3789
        %v3791 = vpop.f32.mrf.mxu0
        %3792 = vmatprep.mubr.bf16.mxu0 0
        %3793 = vmatmul.mubr.bf16.gmra.mxu0 %v3563
        %v3794 = vpop.f32.mrf.mxu0
        %v3795 = vadd.f32 0.0, %v3794
        %v3796 = vpop.f32.mrf.mxu0
        %v3797 = vpop.f32.mrf.mxu0
        %v3798 = vadd.f32 0.0, %v3797
        %v3799 = vpop.f32.mrf.mxu0
        %3800 = vmatprep.mubr.bf16.mxu0 0
        %3801 = vmatmul.mubr.bf16.gmra.mxu0 %v3564
        %v3802 = vpop.f32.mrf.mxu0
        %v3803 = vadd.f32 0.0, %v3802
        %v3804 = vpop.f32.mrf.mxu0
        %v3805 = vpop.f32.mrf.mxu0
        %v3806 = vadd.f32 0.0, %v3805
        %v3807 = vpop.f32.mrf.mxu0
        %3808 = vmatprep.mubr.bf16.mxu0 0
        %3809 = vmatmul.mubr.bf16.gmra.mxu0 %v3565
        %v3810 = vpop.f32.mrf.mxu0
        %v3811 = vadd.f32 0.0, %v3810
        %v3812 = vpop.f32.mrf.mxu0
        %v3813 = vpop.f32.mrf.mxu0
        %v3814 = vadd.f32 0.0, %v3813
        %v3815 = vpop.f32.mrf.mxu0
        %3816 = vmatprep.mubr.bf16.mxu0 0
        %3817 = vmatmul.mubr.bf16.gmra.mxu0 %v3566
        %v3818 = vpop.f32.mrf.mxu0
        %v3819 = vadd.f32 0.0, %v3818
        %v3820 = vpop.f32.mrf.mxu0
        %v3821 = vpop.f32.mrf.mxu0
        %v3822 = vadd.f32 0.0, %v3821
        %v3823 = vpop.f32.mrf.mxu0
        %3824 = vmatprep.mubr.bf16.mxu0 0
        %3825 = vmatmul.mubr.bf16.gmra.mxu0 %v3567
        %v3826 = vpop.f32.mrf.mxu0
        %v3827 = vadd.f32 0.0, %v3826
        %v3828 = vpop.f32.mrf.mxu0
        %v3829 = vpop.f32.mrf.mxu0
        %v3830 = vadd.f32 0.0, %v3829
        %v3831 = vpop.f32.mrf.mxu0
        %3832 = vmatprep.mubr.bf16.mxu0 0
        %3833 = vmatmul.mubr.bf16.gmra.mxu0 %v3568
        %v3834 = vpop.f32.mrf.mxu0
        %v3835 = vadd.f32 0.0, %v3834
        %v3836 = vpop.f32.mrf.mxu0
        %v3837 = vpop.f32.mrf.mxu0
        %v3838 = vadd.f32 0.0, %v3837
        %v3839 = vpop.f32.mrf.mxu0
        %3840 = vmatprep.mubr.bf16.mxu0 0
        %3841 = vmatmul.mubr.bf16.gmra.mxu0 %v3569
        %v3842 = vpop.f32.mrf.mxu0
        %v3843 = vadd.f32 0.0, %v3842
        %v3844 = vpop.f32.mrf.mxu0
        %v3845 = vpop.f32.mrf.mxu0
        %v3846 = vadd.f32 0.0, %v3845
        %v3847 = vpop.f32.mrf.mxu0
        %3848 = vmatprep.mubr.bf16.mxu0 0
        %3849 = vmatmul.mubr.bf16.gmra.mxu0 %v3570
        %v3850 = vpop.f32.mrf.mxu0
        %v3851 = vadd.f32 0.0, %v3850
        %v3852 = vpop.f32.mrf.mxu0
        %v3853 = vpop.f32.mrf.mxu0
        %v3854 = vadd.f32 0.0, %v3853
        %v3855 = vpop.f32.mrf.mxu0
        %3856 = vmatprep.mubr.bf16.mxu0 0
        %3857 = vmatmul.mubr.bf16.gmra.mxu0 %v3571
        %v3858 = vpop.f32.mrf.mxu0
        %v3859 = vadd.f32 0.0, %v3858
        %v3860 = vpop.f32.mrf.mxu0
        %v3861 = vpop.f32.mrf.mxu0
        %v3862 = vadd.f32 0.0, %v3861
        %v3863 = vpop.f32.mrf.mxu0
        %3864 = vmatprep.mubr.bf16.mxu0 0
        %3865 = vmatmul.mubr.bf16.gmra.mxu0 %v3572
        %v3866 = vpop.f32.mrf.mxu0
        %v3867 = vadd.f32 0.0, %v3866
        %v3868 = vpop.f32.mrf.mxu0
        %v3869 = vpop.f32.mrf.mxu0
        %v3870 = vadd.f32 0.0, %v3869
        %v3871 = vpop.f32.mrf.mxu0
        %3872 = vmatprep.mubr.bf16.mxu0 0
        %3873 = vmatmul.mubr.bf16.gmra.mxu0 %v3573
        %v3874 = vpop.f32.mrf.mxu0
        %v3875 = vadd.f32 0.0, %v3874
        %v3876 = vpop.f32.mrf.mxu0
        %v3877 = vpop.f32.mrf.mxu0
        %v3878 = vadd.f32 0.0, %v3877
        %v3879 = vpop.f32.mrf.mxu0
        %3880 = vmatprep.mubr.bf16.mxu0 0
        %3881 = vmatmul.mubr.bf16.gmra.mxu0 %v3574
        %v3882 = vpop.f32.mrf.mxu0
        %v3883 = vadd.f32 0.0, %v3882
        %v3884 = vpop.f32.mrf.mxu0
        %v3885 = vpop.f32.mrf.mxu0
        %v3886 = vadd.f32 0.0, %v3885
        %v3887 = vpop.f32.mrf.mxu0
        %3888 = vmatprep.mubr.bf16.mxu0 0
        %3889 = vmatmul.mubr.bf16.gmra.mxu0 %v3575
        %v3890 = vpop.f32.mrf.mxu0
        %v3891 = vadd.f32 0.0, %v3890
        %v3892 = vpop.f32.mrf.mxu0
        %v3893 = vpop.f32.mrf.mxu0
        %v3894 = vadd.f32 0.0, %v3893
        %v3895 = vpop.f32.mrf.mxu0
        %3896 = vdwg.mxu0
        %v3897 = vmul.f32 %v3328, %v3643
        %v3898 = vmul.f32 %v3329, %v3646
        %v3899 = vmul.f32 %v3330, %v3651
        %v3900 = vmul.f32 %v3331, %v3654
        %v3901 = vmul.f32 %v3332, %v3659
        %v3902 = vmul.f32 %v3333, %v3662
        %v3903 = vmul.f32 %v3334, %v3667
        %v3904 = vmul.f32 %v3335, %v3670
        %v3905 = vmul.f32 %v3336, %v3675
        %v3906 = vmul.f32 %v3337, %v3678
        %v3907 = vmul.f32 %v3338, %v3683
        %v3908 = vmul.f32 %v3339, %v3686
        %v3909 = vmul.f32 %v3340, %v3691
        %v3910 = vmul.f32 %v3341, %v3694
        %v3911 = vmul.f32 %v3342, %v3699
        %v3912 = vmul.f32 %v3343, %v3702
        %v3913 = vmul.f32 %v3344, %v3707
        %v3914 = vmul.f32 %v3345, %v3710
        %v3915 = vmul.f32 %v3346, %v3715
        %v3916 = vmul.f32 %v3347, %v3718
        %v3917 = vmul.f32 %v3348, %v3723
        %v3918 = vmul.f32 %v3349, %v3726
        %v3919 = vmul.f32 %v3350, %v3731
        %v3920 = vmul.f32 %v3351, %v3734
        %v3921 = vmul.f32 %v3352, %v3739
        %v3922 = vmul.f32 %v3353, %v3742
        %v3923 = vmul.f32 %v3354, %v3747
        %v3924 = vmul.f32 %v3355, %v3750
        %v3925 = vmul.f32 %v3356, %v3755
        %v3926 = vmul.f32 %v3357, %v3758
        %v3927 = vmul.f32 %v3358, %v3763
        %v3928 = vmul.f32 %v3359, %v3766
        %v3929 = vmul.f32 %v3360, %v3771
        %v3930 = vmul.f32 %v3361, %v3774
        %v3931 = vmul.f32 %v3362, %v3779
        %v3932 = vmul.f32 %v3363, %v3782
        %v3933 = vmul.f32 %v3364, %v3787
        %v3934 = vmul.f32 %v3365, %v3790
        %v3935 = vmul.f32 %v3366, %v3795
        %v3936 = vmul.f32 %v3367, %v3798
        %v3937 = vmul.f32 %v3368, %v3803
        %v3938 = vmul.f32 %v3369, %v3806
        %v3939 = vmul.f32 %v3370, %v3811
        %v3940 = vmul.f32 %v3371, %v3814
        %v3941 = vmul.f32 %v3372, %v3819
        %v3942 = vmul.f32 %v3373, %v3822
        %v3943 = vmul.f32 %v3374, %v3827
        %v3944 = vmul.f32 %v3375, %v3830
        %v3945 = vmul.f32 %v3376, %v3835
        %v3946 = vmul.f32 %v3377, %v3838
        %v3947 = vmul.f32 %v3378, %v3843
        %v3948 = vmul.f32 %v3379, %v3846
        %v3949 = vmul.f32 %v3380, %v3851
        %v3950 = vmul.f32 %v3381, %v3854
        %v3951 = vmul.f32 %v3382, %v3859
        %v3952 = vmul.f32 %v3383, %v3862
        %v3953 = vmul.f32 %v3384, %v3867
        %v3954 = vmul.f32 %v3385, %v3870
        %v3955 = vmul.f32 %v3386, %v3875
        %v3956 = vmul.f32 %v3387, %v3878
        %v3957 = vmul.f32 %v3388, %v3883
        %v3958 = vmul.f32 %v3389, %v3886
        %v3959 = vmul.f32 %v3390, %v3891
        %v3960 = vmul.f32 %v3391, %v3894
        %v3961 = vpack.c.bf16 %v3898, %v3897
        %v3962 = vpack.c.bf16 %v3900, %v3899
        %v3963 = vpack.c.bf16 %v3902, %v3901
        %v3964 = vpack.c.bf16 %v3904, %v3903
        %v3965 = vpack.c.bf16 %v3906, %v3905
        %v3966 = vpack.c.bf16 %v3908, %v3907
        %v3967 = vpack.c.bf16 %v3910, %v3909
        %v3968 = vpack.c.bf16 %v3912, %v3911
        %v3969 = vpack.c.bf16 %v3914, %v3913
        %v3970 = vpack.c.bf16 %v3916, %v3915
        %v3971 = vpack.c.bf16 %v3918, %v3917
        %v3972 = vpack.c.bf16 %v3920, %v3919
        %v3973 = vpack.c.bf16 %v3922, %v3921
        %v3974 = vpack.c.bf16 %v3924, %v3923
        %v3975 = vpack.c.bf16 %v3926, %v3925
        %v3976 = vpack.c.bf16 %v3928, %v3927
        %v3977 = vpack.c.bf16 %v3930, %v3929
        %v3978 = vpack.c.bf16 %v3932, %v3931
        %v3979 = vpack.c.bf16 %v3934, %v3933
        %v3980 = vpack.c.bf16 %v3936, %v3935
        %v3981 = vpack.c.bf16 %v3938, %v3937
        %v3982 = vpack.c.bf16 %v3940, %v3939
        %v3983 = vpack.c.bf16 %v3942, %v3941
        %v3984 = vpack.c.bf16 %v3944, %v3943
        %v3985 = vpack.c.bf16 %v3946, %v3945
        %v3986 = vpack.c.bf16 %v3948, %v3947
        %v3987 = vpack.c.bf16 %v3950, %v3949
        %v3988 = vpack.c.bf16 %v3952, %v3951
        %v3989 = vpack.c.bf16 %v3954, %v3953
        %v3990 = vpack.c.bf16 %v3956, %v3955
        %v3991 = vpack.c.bf16 %v3958, %v3957
        %v3992 = vpack.c.bf16 %v3960, %v3959
        %3993 = vmatprep.subr.bf16.mxu0 0
        %3994 = vmatpush1.bf16.msra.mxu0 %v355
        %3995 = vmatprep.subr.bf16.mxu0 0
        %3996 = vmatpush1.bf16.msra.mxu0 %v354
        %3997 = vmatprep.subr.bf16.mxu0 0
        %3998 = vmatpush1.bf16.msra.mxu0 %v353
        %3999 = vmatprep.subr.bf16.mxu0 0
        %4000 = vmatpush1.bf16.msra.mxu0 %v352
        %4001 = vmatprep.subr.bf16.mxu0 0
        %4002 = vmatpush1.bf16.msra.mxu0 %v351
        %4003 = vmatprep.subr.bf16.mxu0 0
        %4004 = vmatpush1.bf16.msra.mxu0 %v350
        %4005 = vmatprep.subr.bf16.mxu0 0
        %4006 = vmatpush1.bf16.msra.mxu0 %v349
        %4007 = vmatprep.subr.bf16.mxu0 0
        %4008 = vmatpush1.bf16.msra.mxu0 %v348
        %4009 = vmatprep.subr.bf16.mxu0 0
        %4010 = vmatpush2.bf16.msra.mxu0 0
        %4011 = vmatprep.subr.bf16.mxu0 0
        %4012 = vmatpush2.bf16.msra.mxu0 0
        %4013 = vmatprep.subr.bf16.mxu0 0
        %4014 = vmatpush2.bf16.msra.mxu0 0
        %4015 = vmatprep.subr.bf16.mxu0 0
        %4016 = vmatpush2.bf16.msra.mxu0 0
        %4017 = vmatprep.subr.bf16.mxu0 0
        %4018 = vmatpush2.bf16.msra.mxu0 0
        %4019 = vmatprep.subr.bf16.mxu0 0
        %4020 = vmatpush2.bf16.msra.mxu0 0
        %4021 = vmatprep.subr.bf16.mxu0 0
        %4022 = vmatpush2.bf16.msra.mxu0 0
        %4023 = vmatprep.subr.bf16.mxu0 0
        %4024 = vmatpush2.bf16.msra.mxu0 0
        %4025 = vmatprep.mubr.bf16.mxu0 0
        %4026 = vmatmul.mubr.bf16.gmra.mxu0 %v3961
        %v4027 = vpop.f32.mrf.mxu0
        %v4028 = vadd.f32 0.0, %v4027
        %v4029 = vpop.f32.mrf.mxu0
        %v4030 = vpop.f32.mrf.mxu0
        %v4031 = vadd.f32 0.0, %v4030
        %v4032 = vpop.f32.mrf.mxu0
        %4033 = vmatprep.mubr.bf16.mxu0 0
        %4034 = vmatmul.mubr.bf16.gmra.mxu0 %v3962
        %v4035 = vpop.f32.mrf.mxu0
        %v4036 = vadd.f32 0.0, %v4035
        %v4037 = vpop.f32.mrf.mxu0
        %v4038 = vpop.f32.mrf.mxu0
        %v4039 = vadd.f32 0.0, %v4038
        %v4040 = vpop.f32.mrf.mxu0
        %4041 = vmatprep.mubr.bf16.mxu0 0
        %4042 = vmatmul.mubr.bf16.gmra.mxu0 %v3963
        %v4043 = vpop.f32.mrf.mxu0
        %v4044 = vadd.f32 0.0, %v4043
        %v4045 = vpop.f32.mrf.mxu0
        %v4046 = vpop.f32.mrf.mxu0
        %v4047 = vadd.f32 0.0, %v4046
        %v4048 = vpop.f32.mrf.mxu0
        %4049 = vmatprep.mubr.bf16.mxu0 0
        %4050 = vmatmul.mubr.bf16.gmra.mxu0 %v3964
        %v4051 = vpop.f32.mrf.mxu0
        %v4052 = vadd.f32 0.0, %v4051
        %v4053 = vpop.f32.mrf.mxu0
        %v4054 = vpop.f32.mrf.mxu0
        %v4055 = vadd.f32 0.0, %v4054
        %v4056 = vpop.f32.mrf.mxu0
        %4057 = vmatprep.mubr.bf16.mxu0 0
        %4058 = vmatmul.mubr.bf16.gmra.mxu0 %v3965
        %v4059 = vpop.f32.mrf.mxu0
        %v4060 = vadd.f32 0.0, %v4059
        %v4061 = vpop.f32.mrf.mxu0
        %v4062 = vpop.f32.mrf.mxu0
        %v4063 = vadd.f32 0.0, %v4062
        %v4064 = vpop.f32.mrf.mxu0
        %4065 = vmatprep.mubr.bf16.mxu0 0
        %4066 = vmatmul.mubr.bf16.gmra.mxu0 %v3966
        %v4067 = vpop.f32.mrf.mxu0
        %v4068 = vadd.f32 0.0, %v4067
        %v4069 = vpop.f32.mrf.mxu0
        %v4070 = vpop.f32.mrf.mxu0
        %v4071 = vadd.f32 0.0, %v4070
        %v4072 = vpop.f32.mrf.mxu0
        %4073 = vmatprep.mubr.bf16.mxu0 0
        %4074 = vmatmul.mubr.bf16.gmra.mxu0 %v3967
        %v4075 = vpop.f32.mrf.mxu0
        %v4076 = vadd.f32 0.0, %v4075
        %v4077 = vpop.f32.mrf.mxu0
        %v4078 = vpop.f32.mrf.mxu0
        %v4079 = vadd.f32 0.0, %v4078
        %v4080 = vpop.f32.mrf.mxu0
        %4081 = vmatprep.mubr.bf16.mxu0 0
        %4082 = vmatmul.mubr.bf16.gmra.mxu0 %v3968
        %v4083 = vpop.f32.mrf.mxu0
        %v4084 = vadd.f32 0.0, %v4083
        %v4085 = vpop.f32.mrf.mxu0
        %v4086 = vpop.f32.mrf.mxu0
        %v4087 = vadd.f32 0.0, %v4086
        %v4088 = vpop.f32.mrf.mxu0
        %4089 = vmatprep.mubr.bf16.mxu0 0
        %4090 = vmatmul.mubr.bf16.gmra.mxu0 %v3969
        %v4091 = vpop.f32.mrf.mxu0
        %v4092 = vadd.f32 0.0, %v4091
        %v4093 = vpop.f32.mrf.mxu0
        %v4094 = vpop.f32.mrf.mxu0
        %v4095 = vadd.f32 0.0, %v4094
        %v4096 = vpop.f32.mrf.mxu0
        %4097 = vmatprep.mubr.bf16.mxu0 0
        %4098 = vmatmul.mubr.bf16.gmra.mxu0 %v3970
        %v4099 = vpop.f32.mrf.mxu0
        %v4100 = vadd.f32 0.0, %v4099
        %v4101 = vpop.f32.mrf.mxu0
        %v4102 = vpop.f32.mrf.mxu0
        %v4103 = vadd.f32 0.0, %v4102
        %v4104 = vpop.f32.mrf.mxu0
        %4105 = vmatprep.mubr.bf16.mxu0 0
        %4106 = vmatmul.mubr.bf16.gmra.mxu0 %v3971
        %v4107 = vpop.f32.mrf.mxu0
        %v4108 = vadd.f32 0.0, %v4107
        %v4109 = vpop.f32.mrf.mxu0
        %v4110 = vpop.f32.mrf.mxu0
        %v4111 = vadd.f32 0.0, %v4110
        %v4112 = vpop.f32.mrf.mxu0
        %4113 = vmatprep.mubr.bf16.mxu0 0
        %4114 = vmatmul.mubr.bf16.gmra.mxu0 %v3972
        %v4115 = vpop.f32.mrf.mxu0
        %v4116 = vadd.f32 0.0, %v4115
        %v4117 = vpop.f32.mrf.mxu0
        %v4118 = vpop.f32.mrf.mxu0
        %v4119 = vadd.f32 0.0, %v4118
        %v4120 = vpop.f32.mrf.mxu0
        %4121 = vmatprep.mubr.bf16.mxu0 0
        %4122 = vmatmul.mubr.bf16.gmra.mxu0 %v3973
        %v4123 = vpop.f32.mrf.mxu0
        %v4124 = vadd.f32 0.0, %v4123
        %v4125 = vpop.f32.mrf.mxu0
        %v4126 = vpop.f32.mrf.mxu0
        %v4127 = vadd.f32 0.0, %v4126
        %v4128 = vpop.f32.mrf.mxu0
        %4129 = vmatprep.mubr.bf16.mxu0 0
        %4130 = vmatmul.mubr.bf16.gmra.mxu0 %v3974
        %v4131 = vpop.f32.mrf.mxu0
        %v4132 = vadd.f32 0.0, %v4131
        %v4133 = vpop.f32.mrf.mxu0
        %v4134 = vpop.f32.mrf.mxu0
        %v4135 = vadd.f32 0.0, %v4134
        %v4136 = vpop.f32.mrf.mxu0
        %4137 = vmatprep.mubr.bf16.mxu0 0
        %4138 = vmatmul.mubr.bf16.gmra.mxu0 %v3975
        %v4139 = vpop.f32.mrf.mxu0
        %v4140 = vadd.f32 0.0, %v4139
        %v4141 = vpop.f32.mrf.mxu0
        %v4142 = vpop.f32.mrf.mxu0
        %v4143 = vadd.f32 0.0, %v4142
        %v4144 = vpop.f32.mrf.mxu0
        %4145 = vmatprep.mubr.bf16.mxu0 0
        %4146 = vmatmul.mubr.bf16.gmra.mxu0 %v3976
        %v4147 = vpop.f32.mrf.mxu0
        %v4148 = vadd.f32 0.0, %v4147
        %v4149 = vpop.f32.mrf.mxu0
        %v4150 = vpop.f32.mrf.mxu0
        %v4151 = vadd.f32 0.0, %v4150
        %v4152 = vpop.f32.mrf.mxu0
        %4153 = vmatprep.mubr.bf16.mxu0 0
        %4154 = vmatmul.mubr.bf16.gmra.mxu0 %v3977
        %v4155 = vpop.f32.mrf.mxu0
        %v4156 = vadd.f32 0.0, %v4155
        %v4157 = vpop.f32.mrf.mxu0
        %v4158 = vpop.f32.mrf.mxu0
        %v4159 = vadd.f32 0.0, %v4158
        %v4160 = vpop.f32.mrf.mxu0
        %4161 = vmatprep.mubr.bf16.mxu0 0
        %4162 = vmatmul.mubr.bf16.gmra.mxu0 %v3978
        %v4163 = vpop.f32.mrf.mxu0
        %v4164 = vadd.f32 0.0, %v4163
        %v4165 = vpop.f32.mrf.mxu0
        %v4166 = vpop.f32.mrf.mxu0
        %v4167 = vadd.f32 0.0, %v4166
        %v4168 = vpop.f32.mrf.mxu0
        %4169 = vmatprep.mubr.bf16.mxu0 0
        %4170 = vmatmul.mubr.bf16.gmra.mxu0 %v3979
        %v4171 = vpop.f32.mrf.mxu0
        %v4172 = vadd.f32 0.0, %v4171
        %v4173 = vpop.f32.mrf.mxu0
        %v4174 = vpop.f32.mrf.mxu0
        %v4175 = vadd.f32 0.0, %v4174
        %v4176 = vpop.f32.mrf.mxu0
        %4177 = vmatprep.mubr.bf16.mxu0 0
        %4178 = vmatmul.mubr.bf16.gmra.mxu0 %v3980
        %v4179 = vpop.f32.mrf.mxu0
        %v4180 = vadd.f32 0.0, %v4179
        %v4181 = vpop.f32.mrf.mxu0
        %v4182 = vpop.f32.mrf.mxu0
        %v4183 = vadd.f32 0.0, %v4182
        %v4184 = vpop.f32.mrf.mxu0
        %4185 = vmatprep.mubr.bf16.mxu0 0
        %4186 = vmatmul.mubr.bf16.gmra.mxu0 %v3981
        %v4187 = vpop.f32.mrf.mxu0
        %v4188 = vadd.f32 0.0, %v4187
        %v4189 = vpop.f32.mrf.mxu0
        %v4190 = vpop.f32.mrf.mxu0
        %v4191 = vadd.f32 0.0, %v4190
        %v4192 = vpop.f32.mrf.mxu0
        %4193 = vmatprep.mubr.bf16.mxu0 0
        %4194 = vmatmul.mubr.bf16.gmra.mxu0 %v3982
        %v4195 = vpop.f32.mrf.mxu0
        %v4196 = vadd.f32 0.0, %v4195
        %v4197 = vpop.f32.mrf.mxu0
        %v4198 = vpop.f32.mrf.mxu0
        %v4199 = vadd.f32 0.0, %v4198
        %v4200 = vpop.f32.mrf.mxu0
        %4201 = vmatprep.mubr.bf16.mxu0 0
        %4202 = vmatmul.mubr.bf16.gmra.mxu0 %v3983
        %v4203 = vpop.f32.mrf.mxu0
        %v4204 = vadd.f32 0.0, %v4203
        %v4205 = vpop.f32.mrf.mxu0
        %v4206 = vpop.f32.mrf.mxu0
        %v4207 = vadd.f32 0.0, %v4206
        %v4208 = vpop.f32.mrf.mxu0
        %4209 = vmatprep.mubr.bf16.mxu0 0
        %4210 = vmatmul.mubr.bf16.gmra.mxu0 %v3984
        %v4211 = vpop.f32.mrf.mxu0
        %v4212 = vadd.f32 0.0, %v4211
        %v4213 = vpop.f32.mrf.mxu0
        %v4214 = vpop.f32.mrf.mxu0
        %v4215 = vadd.f32 0.0, %v4214
        %v4216 = vpop.f32.mrf.mxu0
        %4217 = vmatprep.mubr.bf16.mxu0 0
        %4218 = vmatmul.mubr.bf16.gmra.mxu0 %v3985
        %v4219 = vpop.f32.mrf.mxu0
        %v4220 = vadd.f32 0.0, %v4219
        %v4221 = vpop.f32.mrf.mxu0
        %v4222 = vpop.f32.mrf.mxu0
        %v4223 = vadd.f32 0.0, %v4222
        %v4224 = vpop.f32.mrf.mxu0
        %4225 = vmatprep.mubr.bf16.mxu0 0
        %4226 = vmatmul.mubr.bf16.gmra.mxu0 %v3986
        %v4227 = vpop.f32.mrf.mxu0
        %v4228 = vadd.f32 0.0, %v4227
        %v4229 = vpop.f32.mrf.mxu0
        %v4230 = vpop.f32.mrf.mxu0
        %v4231 = vadd.f32 0.0, %v4230
        %v4232 = vpop.f32.mrf.mxu0
        %4233 = vmatprep.mubr.bf16.mxu0 0
        %4234 = vmatmul.mubr.bf16.gmra.mxu0 %v3987
        %v4235 = vpop.f32.mrf.mxu0
        %v4236 = vadd.f32 0.0, %v4235
        %v4237 = vpop.f32.mrf.mxu0
        %v4238 = vpop.f32.mrf.mxu0
        %v4239 = vadd.f32 0.0, %v4238
        %v4240 = vpop.f32.mrf.mxu0
        %4241 = vmatprep.mubr.bf16.mxu0 0
        %4242 = vmatmul.mubr.bf16.gmra.mxu0 %v3988
        %v4243 = vpop.f32.mrf.mxu0
        %v4244 = vadd.f32 0.0, %v4243
        %v4245 = vpop.f32.mrf.mxu0
        %v4246 = vpop.f32.mrf.mxu0
        %v4247 = vadd.f32 0.0, %v4246
        %v4248 = vpop.f32.mrf.mxu0
        %4249 = vmatprep.mubr.bf16.mxu0 0
        %4250 = vmatmul.mubr.bf16.gmra.mxu0 %v3989
        %v4251 = vpop.f32.mrf.mxu0
        %v4252 = vadd.f32 0.0, %v4251
        %v4253 = vpop.f32.mrf.mxu0
        %v4254 = vpop.f32.mrf.mxu0
        %v4255 = vadd.f32 0.0, %v4254
        %v4256 = vpop.f32.mrf.mxu0
        %4257 = vmatprep.mubr.bf16.mxu0 0
        %4258 = vmatmul.mubr.bf16.gmra.mxu0 %v3990
        %v4259 = vpop.f32.mrf.mxu0
        %v4260 = vadd.f32 0.0, %v4259
        %v4261 = vpop.f32.mrf.mxu0
        %v4262 = vpop.f32.mrf.mxu0
        %v4263 = vadd.f32 0.0, %v4262
        %v4264 = vpop.f32.mrf.mxu0
        %4265 = vmatprep.mubr.bf16.mxu0 0
        %4266 = vmatmul.mubr.bf16.gmra.mxu0 %v3991
        %v4267 = vpop.f32.mrf.mxu0
        %v4268 = vadd.f32 0.0, %v4267
        %v4269 = vpop.f32.mrf.mxu0
        %v4270 = vpop.f32.mrf.mxu0
        %v4271 = vadd.f32 0.0, %v4270
        %v4272 = vpop.f32.mrf.mxu0
        %4273 = vmatprep.mubr.bf16.mxu0 0
        %4274 = vmatmul.mubr.bf16.gmra.mxu0 %v3992
        %v4275 = vpop.f32.mrf.mxu0
        %v4276 = vadd.f32 0.0, %v4275
        %v4277 = vpop.f32.mrf.mxu0
        %v4278 = vpop.f32.mrf.mxu0
        %v4279 = vadd.f32 0.0, %v4278
        %v4280 = vpop.f32.mrf.mxu0
        %4281 = vdwg.mxu0
        %v4282 = vmul.f32 %v4028, 1.442695
        %v4283 = vpow.pop %v4282
        %v4284 = vmul.f32 %v4031, 1.442695
        %v4285 = vpow.pop %v4284
        %v4286 = vmul.f32 %v4036, 1.442695
        %v4287 = vpow.pop %v4286
        %v4288 = vmul.f32 %v4039, 1.442695
        %v4289 = vpow.pop %v4288
        %v4290 = vmul.f32 %v4044, 1.442695
        %v4291 = vpow.pop %v4290
        %v4292 = vmul.f32 %v4047, 1.442695
        %v4293 = vpow.pop %v4292
        %v4294 = vmul.f32 %v4052, 1.442695
        %v4295 = vpow.pop %v4294
        %v4296 = vmul.f32 %v4055, 1.442695
        %v4297 = vpow.pop %v4296
        %v4298 = vmul.f32 %v4060, 1.442695
        %v4299 = vpow.pop %v4298
        %v4300 = vmul.f32 %v4063, 1.442695
        %v4301 = vpow.pop %v4300
        %v4302 = vmul.f32 %v4068, 1.442695
        %v4303 = vpow.pop %v4302
        %v4304 = vmul.f32 %v4071, 1.442695
        %v4305 = vpow.pop %v4304
        %v4306 = vmul.f32 %v4076, 1.442695
        %v4307 = vpow.pop %v4306
        %v4308 = vmul.f32 %v4079, 1.442695
        %v4309 = vpow.pop %v4308
        %v4310 = vmul.f32 %v4084, 1.442695
        %v4311 = vpow.pop %v4310
        %v4312 = vmul.f32 %v4087, 1.442695
        %v4313 = vpow.pop %v4312
        %v4314 = vmul.f32 %v4092, 1.442695
        %v4315 = vpow.pop %v4314
        %v4316 = vmul.f32 %v4095, 1.442695
        %v4317 = vpow.pop %v4316
        %v4318 = vmul.f32 %v4100, 1.442695
        %v4319 = vpow.pop %v4318
        %v4320 = vmul.f32 %v4103, 1.442695
        %v4321 = vpow.pop %v4320
        %v4322 = vmul.f32 %v4108, 1.442695
        %v4323 = vpow.pop %v4322
        %v4324 = vmul.f32 %v4111, 1.442695
        %v4325 = vpow.pop %v4324
        %v4326 = vmul.f32 %v4116, 1.442695
        %v4327 = vpow.pop %v4326
        %v4328 = vmul.f32 %v4119, 1.442695
        %v4329 = vpow.pop %v4328
        %v4330 = vmul.f32 %v4124, 1.442695
        %v4331 = vpow.pop %v4330
        %v4332 = vmul.f32 %v4127, 1.442695
        %v4333 = vpow.pop %v4332
        %v4334 = vmul.f32 %v4132, 1.442695
        %v4335 = vpow.pop %v4334
        %v4336 = vmul.f32 %v4135, 1.442695
        %v4337 = vpow.pop %v4336
        %v4338 = vmul.f32 %v4140, 1.442695
        %v4339 = vpow.pop %v4338
        %v4340 = vmul.f32 %v4143, 1.442695
        %v4341 = vpow.pop %v4340
        %v4342 = vmul.f32 %v4148, 1.442695
        %v4343 = vpow.pop %v4342
        %v4344 = vmul.f32 %v4151, 1.442695
        %v4345 = vpow.pop %v4344
        %v4346 = vmul.f32 %v4156, 1.442695
        %v4347 = vpow.pop %v4346
        %v4348 = vmul.f32 %v4159, 1.442695
        %v4349 = vpow.pop %v4348
        %v4350 = vmul.f32 %v4164, 1.442695
        %v4351 = vpow.pop %v4350
        %v4352 = vmul.f32 %v4167, 1.442695
        %v4353 = vpow.pop %v4352
        %v4354 = vmul.f32 %v4172, 1.442695
        %v4355 = vpow.pop %v4354
        %v4356 = vmul.f32 %v4175, 1.442695
        %v4357 = vpow.pop %v4356
        %v4358 = vmul.f32 %v4180, 1.442695
        %v4359 = vpow.pop %v4358
        %v4360 = vmul.f32 %v4183, 1.442695
        %v4361 = vpow.pop %v4360
        %v4362 = vmul.f32 %v4188, 1.442695
        %v4363 = vpow.pop %v4362
        %v4364 = vmul.f32 %v4191, 1.442695
        %v4365 = vpow.pop %v4364
        %v4366 = vmul.f32 %v4196, 1.442695
        %v4367 = vpow.pop %v4366
        %v4368 = vmul.f32 %v4199, 1.442695
        %v4369 = vpow.pop %v4368
        %v4370 = vmul.f32 %v4204, 1.442695
        %v4371 = vpow.pop %v4370
        %v4372 = vmul.f32 %v4207, 1.442695
        %v4373 = vpow.pop %v4372
        %v4374 = vmul.f32 %v4212, 1.442695
        %v4375 = vpow.pop %v4374
        %v4376 = vmul.f32 %v4215, 1.442695
        %v4377 = vpow.pop %v4376
        %v4378 = vmul.f32 %v4220, 1.442695
        %v4379 = vpow.pop %v4378
        %v4380 = vmul.f32 %v4223, 1.442695
        %v4381 = vpow.pop %v4380
        %v4382 = vmul.f32 %v4228, 1.442695
        %v4383 = vpow.pop %v4382
        %v4384 = vmul.f32 %v4231, 1.442695
        %v4385 = vpow.pop %v4384
        %v4386 = vmul.f32 %v4236, 1.442695
        %v4387 = vpow.pop %v4386
        %v4388 = vmul.f32 %v4239, 1.442695
        %v4389 = vpow.pop %v4388
        %v4390 = vmul.f32 %v4244, 1.442695
        %v4391 = vpow.pop %v4390
        %v4392 = vmul.f32 %v4247, 1.442695
        %v4393 = vpow.pop %v4392
        %v4394 = vmul.f32 %v4252, 1.442695
        %v4395 = vpow.pop %v4394
        %v4396 = vmul.f32 %v4255, 1.442695
        %v4397 = vpow.pop %v4396
        %v4398 = vmul.f32 %v4260, 1.442695
        %v4399 = vpow.pop %v4398
        %v4400 = vmul.f32 %v4263, 1.442695
        %v4401 = vpow.pop %v4400
        %v4402 = vmul.f32 %v4268, 1.442695
        %v4403 = vpow.pop %v4402
        %v4404 = vmul.f32 %v4271, 1.442695
        %v4405 = vpow.pop %v4404
        %v4406 = vmul.f32 %v4276, 1.442695
        %v4407 = vpow.pop %v4406
        %v4408 = vmul.f32 %v4279, 1.442695
        %v4409 = vpow.pop %v4408
        %vm4410 = vcmask 31744
        %v4411 = vsel %vm4410, %v4283, 0.0
        %4412 = vadd.xlane.f32.xlu0 %v4411
        %v4413 = vpop.xlane.xlu0 %4412
        %v4414 = vsel %vm4410, %v4285, 0.0
        %4415 = vadd.xlane.f32.xlu0 %v4414
        %v4416 = vpop.xlane.xlu0 %4415
        %v4417 = vsel %vm4410, %v4287, 0.0
        %4418 = vadd.xlane.f32.xlu0 %v4417
        %v4419 = vpop.xlane.xlu0 %4418
        %v4420 = vsel %vm4410, %v4289, 0.0
        %4421 = vadd.xlane.f32.xlu0 %v4420
        %v4422 = vpop.xlane.xlu0 %4421
        %v4423 = vsel %vm4410, %v4291, 0.0
        %4424 = vadd.xlane.f32.xlu0 %v4423
        %v4425 = vpop.xlane.xlu0 %4424
        %v4426 = vsel %vm4410, %v4293, 0.0
        %4427 = vadd.xlane.f32.xlu0 %v4426
        %v4428 = vpop.xlane.xlu0 %4427
        %v4429 = vsel %vm4410, %v4295, 0.0
        %4430 = vadd.xlane.f32.xlu0 %v4429
        %v4431 = vpop.xlane.xlu0 %4430
        %v4432 = vsel %vm4410, %v4297, 0.0
        %4433 = vadd.xlane.f32.xlu0 %v4432
        %v4434 = vpop.xlane.xlu0 %4433
        %v4435 = vsel %vm4410, %v4299, 0.0
        %4436 = vadd.xlane.f32.xlu0 %v4435
        %v4437 = vpop.xlane.xlu0 %4436
        %v4438 = vsel %vm4410, %v4301, 0.0
        %4439 = vadd.xlane.f32.xlu0 %v4438
        %v4440 = vpop.xlane.xlu0 %4439
        %v4441 = vsel %vm4410, %v4303, 0.0
        %4442 = vadd.xlane.f32.xlu0 %v4441
        %v4443 = vpop.xlane.xlu0 %4442
        %v4444 = vsel %vm4410, %v4305, 0.0
        %4445 = vadd.xlane.f32.xlu0 %v4444
        %v4446 = vpop.xlane.xlu0 %4445
        %v4447 = vsel %vm4410, %v4307, 0.0
        %4448 = vadd.xlane.f32.xlu0 %v4447
        %v4449 = vpop.xlane.xlu0 %4448
        %v4450 = vsel %vm4410, %v4309, 0.0
        %4451 = vadd.xlane.f32.xlu0 %v4450
        %v4452 = vpop.xlane.xlu0 %4451
        %v4453 = vsel %vm4410, %v4311, 0.0
        %4454 = vadd.xlane.f32.xlu0 %v4453
        %v4455 = vpop.xlane.xlu0 %4454
        %v4456 = vsel %vm4410, %v4313, 0.0
        %4457 = vadd.xlane.f32.xlu0 %v4456
        %v4458 = vpop.xlane.xlu0 %4457
        %v4459 = vsel %vm4410, %v4315, 0.0
        %4460 = vadd.xlane.f32.xlu0 %v4459
        %v4461 = vpop.xlane.xlu0 %4460
        %v4462 = vsel %vm4410, %v4317, 0.0
        %4463 = vadd.xlane.f32.xlu0 %v4462
        %v4464 = vpop.xlane.xlu0 %4463
        %v4465 = vsel %vm4410, %v4319, 0.0
        %4466 = vadd.xlane.f32.xlu0 %v4465
        %v4467 = vpop.xlane.xlu0 %4466
        %v4468 = vsel %vm4410, %v4321, 0.0
        %4469 = vadd.xlane.f32.xlu0 %v4468
        %v4470 = vpop.xlane.xlu0 %4469
        %v4471 = vsel %vm4410, %v4323, 0.0
        %4472 = vadd.xlane.f32.xlu0 %v4471
        %v4473 = vpop.xlane.xlu0 %4472
        %v4474 = vsel %vm4410, %v4325, 0.0
        %4475 = vadd.xlane.f32.xlu0 %v4474
        %v4476 = vpop.xlane.xlu0 %4475
        %v4477 = vsel %vm4410, %v4327, 0.0
        %4478 = vadd.xlane.f32.xlu0 %v4477
        %v4479 = vpop.xlane.xlu0 %4478
        %v4480 = vsel %vm4410, %v4329, 0.0
        %4481 = vadd.xlane.f32.xlu0 %v4480
        %v4482 = vpop.xlane.xlu0 %4481
        %v4483 = vsel %vm4410, %v4331, 0.0
        %4484 = vadd.xlane.f32.xlu0 %v4483
        %v4485 = vpop.xlane.xlu0 %4484
        %v4486 = vsel %vm4410, %v4333, 0.0
        %4487 = vadd.xlane.f32.xlu0 %v4486
        %v4488 = vpop.xlane.xlu0 %4487
        %v4489 = vsel %vm4410, %v4335, 0.0
        %4490 = vadd.xlane.f32.xlu0 %v4489
        %v4491 = vpop.xlane.xlu0 %4490
        %v4492 = vsel %vm4410, %v4337, 0.0
        %4493 = vadd.xlane.f32.xlu0 %v4492
        %v4494 = vpop.xlane.xlu0 %4493
        %v4495 = vsel %vm4410, %v4339, 0.0
        %4496 = vadd.xlane.f32.xlu0 %v4495
        %v4497 = vpop.xlane.xlu0 %4496
        %v4498 = vsel %vm4410, %v4341, 0.0
        %4499 = vadd.xlane.f32.xlu0 %v4498
        %v4500 = vpop.xlane.xlu0 %4499
        %v4501 = vsel %vm4410, %v4343, 0.0
        %4502 = vadd.xlane.f32.xlu0 %v4501
        %v4503 = vpop.xlane.xlu0 %4502
        %v4504 = vsel %vm4410, %v4345, 0.0
        %4505 = vadd.xlane.f32.xlu0 %v4504
        %v4506 = vpop.xlane.xlu0 %4505
        %v4507 = vsel %vm4410, %v4347, 0.0
        %4508 = vadd.xlane.f32.xlu0 %v4507
        %v4509 = vpop.xlane.xlu0 %4508
        %v4510 = vsel %vm4410, %v4349, 0.0
        %4511 = vadd.xlane.f32.xlu0 %v4510
        %v4512 = vpop.xlane.xlu0 %4511
        %v4513 = vsel %vm4410, %v4351, 0.0
        %4514 = vadd.xlane.f32.xlu0 %v4513
        %v4515 = vpop.xlane.xlu0 %4514
        %v4516 = vsel %vm4410, %v4353, 0.0
        %4517 = vadd.xlane.f32.xlu0 %v4516
        %v4518 = vpop.xlane.xlu0 %4517
        %v4519 = vsel %vm4410, %v4355, 0.0
        %4520 = vadd.xlane.f32.xlu0 %v4519
        %v4521 = vpop.xlane.xlu0 %4520
        %v4522 = vsel %vm4410, %v4357, 0.0
        %4523 = vadd.xlane.f32.xlu0 %v4522
        %v4524 = vpop.xlane.xlu0 %4523
        %v4525 = vsel %vm4410, %v4359, 0.0
        %4526 = vadd.xlane.f32.xlu0 %v4525
        %v4527 = vpop.xlane.xlu0 %4526
        %v4528 = vsel %vm4410, %v4361, 0.0
        %4529 = vadd.xlane.f32.xlu0 %v4528
        %v4530 = vpop.xlane.xlu0 %4529
        %v4531 = vsel %vm4410, %v4363, 0.0
        %4532 = vadd.xlane.f32.xlu0 %v4531
        %v4533 = vpop.xlane.xlu0 %4532
        %v4534 = vsel %vm4410, %v4365, 0.0
        %4535 = vadd.xlane.f32.xlu0 %v4534
        %v4536 = vpop.xlane.xlu0 %4535
        %v4537 = vsel %vm4410, %v4367, 0.0
        %4538 = vadd.xlane.f32.xlu0 %v4537
        %v4539 = vpop.xlane.xlu0 %4538
        %v4540 = vsel %vm4410, %v4369, 0.0
        %4541 = vadd.xlane.f32.xlu0 %v4540
        %v4542 = vpop.xlane.xlu0 %4541
        %v4543 = vsel %vm4410, %v4371, 0.0
        %4544 = vadd.xlane.f32.xlu0 %v4543
        %v4545 = vpop.xlane.xlu0 %4544
        %v4546 = vsel %vm4410, %v4373, 0.0
        %4547 = vadd.xlane.f32.xlu0 %v4546
        %v4548 = vpop.xlane.xlu0 %4547
        %v4549 = vsel %vm4410, %v4375, 0.0
        %4550 = vadd.xlane.f32.xlu0 %v4549
        %v4551 = vpop.xlane.xlu0 %4550
        %v4552 = vsel %vm4410, %v4377, 0.0
        %4553 = vadd.xlane.f32.xlu0 %v4552
        %v4554 = vpop.xlane.xlu0 %4553
        %v4555 = vsel %vm4410, %v4379, 0.0
        %4556 = vadd.xlane.f32.xlu0 %v4555
        %v4557 = vpop.xlane.xlu0 %4556
        %v4558 = vsel %vm4410, %v4381, 0.0
        %4559 = vadd.xlane.f32.xlu0 %v4558
        %v4560 = vpop.xlane.xlu0 %4559
        %v4561 = vsel %vm4410, %v4383, 0.0
        %4562 = vadd.xlane.f32.xlu0 %v4561
        %v4563 = vpop.xlane.xlu0 %4562
        %v4564 = vsel %vm4410, %v4385, 0.0
        %4565 = vadd.xlane.f32.xlu0 %v4564
        %v4566 = vpop.xlane.xlu0 %4565
        %v4567 = vsel %vm4410, %v4387, 0.0
        %4568 = vadd.xlane.f32.xlu0 %v4567
        %v4569 = vpop.xlane.xlu0 %4568
        %v4570 = vsel %vm4410, %v4389, 0.0
        %4571 = vadd.xlane.f32.xlu0 %v4570
        %v4572 = vpop.xlane.xlu0 %4571
        %v4573 = vsel %vm4410, %v4391, 0.0
        %4574 = vadd.xlane.f32.xlu0 %v4573
        %v4575 = vpop.xlane.xlu0 %4574
        %v4576 = vsel %vm4410, %v4393, 0.0
        %4577 = vadd.xlane.f32.xlu0 %v4576
        %v4578 = vpop.xlane.xlu0 %4577
        %v4579 = vsel %vm4410, %v4395, 0.0
        %4580 = vadd.xlane.f32.xlu0 %v4579
        %v4581 = vpop.xlane.xlu0 %4580
        %v4582 = vsel %vm4410, %v4397, 0.0
        %4583 = vadd.xlane.f32.xlu0 %v4582
        %v4584 = vpop.xlane.xlu0 %4583
        %v4585 = vsel %vm4410, %v4399, 0.0
        %4586 = vadd.xlane.f32.xlu0 %v4585
        %v4587 = vpop.xlane.xlu0 %4586
        %v4588 = vsel %vm4410, %v4401, 0.0
        %4589 = vadd.xlane.f32.xlu0 %v4588
        %v4590 = vpop.xlane.xlu0 %4589
        %v4591 = vsel %vm4410, %v4403, 0.0
        %4592 = vadd.xlane.f32.xlu0 %v4591
        %v4593 = vpop.xlane.xlu0 %4592
        %v4594 = vsel %vm4410, %v4405, 0.0
        %4595 = vadd.xlane.f32.xlu0 %v4594
        %v4596 = vpop.xlane.xlu0 %4595
        %v4597 = vsel %vm4410, %v4407, 0.0
        %4598 = vadd.xlane.f32.xlu0 %v4597
        %v4599 = vpop.xlane.xlu0 %4598
        %v4600 = vsel %vm4410, %v4409, 0.0
        %4601 = vadd.xlane.f32.xlu0 %v4600
        %v4602 = vpop.xlane.xlu0 %4601
        %v4603 = vrcp.pop %v4413
        %v4604 = vrcp.pop %v4416
        %v4605 = vrcp.pop %v4419
        %v4606 = vrcp.pop %v4422
        %v4607 = vrcp.pop %v4425
        %v4608 = vrcp.pop %v4428
        %v4609 = vrcp.pop %v4431
        %v4610 = vrcp.pop %v4434
        %v4611 = vrcp.pop %v4437
        %v4612 = vrcp.pop %v4440
        %v4613 = vrcp.pop %v4443
        %v4614 = vrcp.pop %v4446
        %v4615 = vrcp.pop %v4449
        %v4616 = vrcp.pop %v4452
        %v4617 = vrcp.pop %v4455
        %v4618 = vrcp.pop %v4458
        %v4619 = vrcp.pop %v4461
        %v4620 = vrcp.pop %v4464
        %v4621 = vrcp.pop %v4467
        %v4622 = vrcp.pop %v4470
        %v4623 = vrcp.pop %v4473
        %v4624 = vrcp.pop %v4476
        %v4625 = vrcp.pop %v4479
        %v4626 = vrcp.pop %v4482
        %v4627 = vrcp.pop %v4485
        %v4628 = vrcp.pop %v4488
        %v4629 = vrcp.pop %v4491
        %v4630 = vrcp.pop %v4494
        %v4631 = vrcp.pop %v4497
        %v4632 = vrcp.pop %v4500
        %v4633 = vrcp.pop %v4503
        %v4634 = vrcp.pop %v4506
        %v4635 = vrcp.pop %v4509
        %v4636 = vrcp.pop %v4512
        %v4637 = vrcp.pop %v4515
        %v4638 = vrcp.pop %v4518
        %v4639 = vrcp.pop %v4521
        %v4640 = vrcp.pop %v4524
        %v4641 = vrcp.pop %v4527
        %v4642 = vrcp.pop %v4530
        %v4643 = vrcp.pop %v4533
        %v4644 = vrcp.pop %v4536
        %v4645 = vrcp.pop %v4539
        %v4646 = vrcp.pop %v4542
        %v4647 = vrcp.pop %v4545
        %v4648 = vrcp.pop %v4548
        %v4649 = vrcp.pop %v4551
        %v4650 = vrcp.pop %v4554
        %v4651 = vrcp.pop %v4557
        %v4652 = vrcp.pop %v4560
        %v4653 = vrcp.pop %v4563
        %v4654 = vrcp.pop %v4566
        %v4655 = vrcp.pop %v4569
        %v4656 = vrcp.pop %v4572
        %v4657 = vrcp.pop %v4575
        %v4658 = vrcp.pop %v4578
        %v4659 = vrcp.pop %v4581
        %v4660 = vrcp.pop %v4584
        %v4661 = vrcp.pop %v4587
        %v4662 = vrcp.pop %v4590
        %v4663 = vrcp.pop %v4593
        %v4664 = vrcp.pop %v4596
        %v4665 = vrcp.pop %v4599
        %v4666 = vrcp.pop %v4602
        %v4667 = vmul.f32 %v4283, %v4603
        %v4668 = vmul.f32 %v4285, %v4604
        %v4669 = vmul.f32 %v4287, %v4605
        %v4670 = vmul.f32 %v4289, %v4606
        %v4671 = vmul.f32 %v4291, %v4607
        %v4672 = vmul.f32 %v4293, %v4608
        %v4673 = vmul.f32 %v4295, %v4609
        %v4674 = vmul.f32 %v4297, %v4610
        %v4675 = vmul.f32 %v4299, %v4611
        %v4676 = vmul.f32 %v4301, %v4612
        %v4677 = vmul.f32 %v4303, %v4613
        %v4678 = vmul.f32 %v4305, %v4614
        %v4679 = vmul.f32 %v4307, %v4615
        %v4680 = vmul.f32 %v4309, %v4616
        %v4681 = vmul.f32 %v4311, %v4617
        %v4682 = vmul.f32 %v4313, %v4618
        %v4683 = vmul.f32 %v4315, %v4619
        %v4684 = vmul.f32 %v4317, %v4620
        %v4685 = vmul.f32 %v4319, %v4621
        %v4686 = vmul.f32 %v4321, %v4622
        %v4687 = vmul.f32 %v4323, %v4623
        %v4688 = vmul.f32 %v4325, %v4624
        %v4689 = vmul.f32 %v4327, %v4625
        %v4690 = vmul.f32 %v4329, %v4626
        %v4691 = vmul.f32 %v4331, %v4627
        %v4692 = vmul.f32 %v4333, %v4628
        %v4693 = vmul.f32 %v4335, %v4629
        %v4694 = vmul.f32 %v4337, %v4630
        %v4695 = vmul.f32 %v4339, %v4631
        %v4696 = vmul.f32 %v4341, %v4632
        %v4697 = vmul.f32 %v4343, %v4633
        %v4698 = vmul.f32 %v4345, %v4634
        %v4699 = vmul.f32 %v4347, %v4635
        %v4700 = vmul.f32 %v4349, %v4636
        %v4701 = vmul.f32 %v4351, %v4637
        %v4702 = vmul.f32 %v4353, %v4638
        %v4703 = vmul.f32 %v4355, %v4639
        %v4704 = vmul.f32 %v4357, %v4640
        %v4705 = vmul.f32 %v4359, %v4641
        %v4706 = vmul.f32 %v4361, %v4642
        %v4707 = vmul.f32 %v4363, %v4643
        %v4708 = vmul.f32 %v4365, %v4644
        %v4709 = vmul.f32 %v4367, %v4645
        %v4710 = vmul.f32 %v4369, %v4646
        %v4711 = vmul.f32 %v4371, %v4647
        %v4712 = vmul.f32 %v4373, %v4648
        %v4713 = vmul.f32 %v4375, %v4649
        %v4714 = vmul.f32 %v4377, %v4650
        %v4715 = vmul.f32 %v4379, %v4651
        %v4716 = vmul.f32 %v4381, %v4652
        %v4717 = vmul.f32 %v4383, %v4653
        %v4718 = vmul.f32 %v4385, %v4654
        %v4719 = vmul.f32 %v4387, %v4655
        %v4720 = vmul.f32 %v4389, %v4656
        %v4721 = vmul.f32 %v4391, %v4657
        %v4722 = vmul.f32 %v4393, %v4658
        %v4723 = vmul.f32 %v4395, %v4659
        %v4724 = vmul.f32 %v4397, %v4660
        %v4725 = vmul.f32 %v4399, %v4661
        %v4726 = vmul.f32 %v4401, %v4662
        %v4727 = vmul.f32 %v4403, %v4663
        %v4728 = vmul.f32 %v4405, %v4664
        %v4729 = vmul.f32 %v4407, %v4665
        %v4730 = vmul.f32 %v4409, %v4666
        %v4731 = vpack.c.bf16 %v4668, %v4667
        %v4732 = vpack.c.bf16 %v4670, %v4669
        %v4733 = vpack.c.bf16 %v4672, %v4671
        %v4734 = vpack.c.bf16 %v4674, %v4673
        %v4735 = vpack.c.bf16 %v4676, %v4675
        %v4736 = vpack.c.bf16 %v4678, %v4677
        %v4737 = vpack.c.bf16 %v4680, %v4679
        %v4738 = vpack.c.bf16 %v4682, %v4681
        %v4739 = vpack.c.bf16 %v4684, %v4683
        %v4740 = vpack.c.bf16 %v4686, %v4685
        %v4741 = vpack.c.bf16 %v4688, %v4687
        %v4742 = vpack.c.bf16 %v4690, %v4689
        %v4743 = vpack.c.bf16 %v4692, %v4691
        %v4744 = vpack.c.bf16 %v4694, %v4693
        %v4745 = vpack.c.bf16 %v4696, %v4695
        %v4746 = vpack.c.bf16 %v4698, %v4697
        %v4747 = vpack.c.bf16 %v4700, %v4699
        %v4748 = vpack.c.bf16 %v4702, %v4701
        %v4749 = vpack.c.bf16 %v4704, %v4703
        %v4750 = vpack.c.bf16 %v4706, %v4705
        %v4751 = vpack.c.bf16 %v4708, %v4707
        %v4752 = vpack.c.bf16 %v4710, %v4709
        %v4753 = vpack.c.bf16 %v4712, %v4711
        %v4754 = vpack.c.bf16 %v4714, %v4713
        %v4755 = vpack.c.bf16 %v4716, %v4715
        %v4756 = vpack.c.bf16 %v4718, %v4717
        %v4757 = vpack.c.bf16 %v4720, %v4719
        %v4758 = vpack.c.bf16 %v4722, %v4721
        %v4759 = vpack.c.bf16 %v4724, %v4723
        %v4760 = vpack.c.bf16 %v4726, %v4725
        %v4761 = vpack.c.bf16 %v4728, %v4727
        %v4762 = vpack.c.bf16 %v4730, %v4729
        %v4764 = vsel %vm4410, %v4731, 0
        %v4767 = vsel %vm4410, %v4732, 0
        %v4770 = vsel %vm4410, %v4733, 0
        %v4773 = vsel %vm4410, %v4734, 0
        %v4776 = vsel %vm4410, %v4735, 0
        %v4779 = vsel %vm4410, %v4736, 0
        %v4782 = vsel %vm4410, %v4737, 0
        %v4785 = vsel %vm4410, %v4738, 0
        %v4788 = vsel %vm4410, %v4739, 0
        %v4791 = vsel %vm4410, %v4740, 0
        %v4794 = vsel %vm4410, %v4741, 0
        %v4797 = vsel %vm4410, %v4742, 0
        %v4800 = vsel %vm4410, %v4743, 0
        %v4803 = vsel %vm4410, %v4744, 0
        %v4806 = vsel %vm4410, %v4745, 0
        %v4809 = vsel %vm4410, %v4746, 0
        %v4812 = vsel %vm4410, %v4747, 0
        %v4815 = vsel %vm4410, %v4748, 0
        %v4818 = vsel %vm4410, %v4749, 0
        %v4821 = vsel %vm4410, %v4750, 0
        %v4824 = vsel %vm4410, %v4751, 0
        %v4827 = vsel %vm4410, %v4752, 0
        %v4830 = vsel %vm4410, %v4753, 0
        %v4833 = vsel %vm4410, %v4754, 0
        %v4836 = vsel %vm4410, %v4755, 0
        %v4839 = vsel %vm4410, %v4756, 0
        %v4842 = vsel %vm4410, %v4757, 0
        %v4845 = vsel %vm4410, %v4758, 0
        %v4848 = vsel %vm4410, %v4759, 0
        %v4851 = vsel %vm4410, %v4760, 0
        %v4854 = vsel %vm4410, %v4761, 0
        %v4857 = vsel %vm4410, %v4762, 0
        %vm4859 = vcmask 1041408
        %v4861 = vsel %vm4859, %v356, 0
        %4863 = vmatprep.subr.bf16.mxu0 0
        %4864 = vmatpush1.bf16.msra.mxu0 0
        %4865 = vmatprep.subr.bf16.mxu0 0
        %4866 = vmatpush1.bf16.msra.mxu0 0
        %4867 = vmatprep.subr.bf16.mxu0 0
        %4868 = vmatpush1.bf16.msra.mxu0 0
        %4869 = vmatprep.subr.bf16.mxu0 0
        %4870 = vmatpush1.bf16.msra.mxu0 0
        %4871 = vmatprep.subr.bf16.mxu0 0
        %4872 = vmatpush1.bf16.msra.mxu0 0
        %4873 = vmatprep.subr.bf16.mxu0 0
        %4874 = vmatpush1.bf16.msra.mxu0 0
        %4875 = vmatprep.subr.bf16.mxu0 0
        %4876 = vmatpush1.bf16.msra.mxu0 0
        %4877 = vmatprep.subr.bf16.mxu0 0
        %4878 = vmatpush1.bf16.msra.mxu0 %v4861
        %4879 = vmatprep.subr.bf16.mxu0 0
        %4880 = vmatpush2.bf16.msra.mxu0 0
        %4881 = vmatprep.subr.bf16.mxu0 0
        %4882 = vmatpush2.bf16.msra.mxu0 0
        %4883 = vmatprep.subr.bf16.mxu0 0
        %4884 = vmatpush2.bf16.msra.mxu0 0
        %4885 = vmatprep.subr.bf16.mxu0 0
        %4886 = vmatpush2.bf16.msra.mxu0 0
        %4887 = vmatprep.subr.bf16.mxu0 0
        %4888 = vmatpush2.bf16.msra.mxu0 0
        %4889 = vmatprep.subr.bf16.mxu0 0
        %4890 = vmatpush2.bf16.msra.mxu0 0
        %4891 = vmatprep.subr.bf16.mxu0 0
        %4892 = vmatpush2.bf16.msra.mxu0 0
        %4893 = vmatprep.subr.bf16.mxu0 0
        %4894 = vmatpush2.bf16.msra.mxu0 0
        %4895 = vmatprep.mubr.bf16.mxu0 0
        %4896 = vmatmul.mubr.bf16.gmra.mxu0 %v4764
        %v4897 = vpop.f32.mrf.mxu0
        %v4898 = vadd.f32 0.0, %v4897
        %v4899 = vpop.f32.mrf.mxu0
        %v4900 = vpop.f32.mrf.mxu0
        %v4901 = vadd.f32 0.0, %v4900
        %v4902 = vpop.f32.mrf.mxu0
        %4903 = vmatprep.mubr.bf16.mxu0 0
        %4904 = vmatmul.mubr.bf16.gmra.mxu0 %v4767
        %v4905 = vpop.f32.mrf.mxu0
        %v4906 = vadd.f32 0.0, %v4905
        %v4907 = vpop.f32.mrf.mxu0
        %v4908 = vpop.f32.mrf.mxu0
        %v4909 = vadd.f32 0.0, %v4908
        %v4910 = vpop.f32.mrf.mxu0
        %4911 = vmatprep.mubr.bf16.mxu0 0
        %4912 = vmatmul.mubr.bf16.gmra.mxu0 %v4770
        %v4913 = vpop.f32.mrf.mxu0
        %v4914 = vadd.f32 0.0, %v4913
        %v4915 = vpop.f32.mrf.mxu0
        %v4916 = vpop.f32.mrf.mxu0
        %v4917 = vadd.f32 0.0, %v4916
        %v4918 = vpop.f32.mrf.mxu0
        %4919 = vmatprep.mubr.bf16.mxu0 0
        %4920 = vmatmul.mubr.bf16.gmra.mxu0 %v4773
        %v4921 = vpop.f32.mrf.mxu0
        %v4922 = vadd.f32 0.0, %v4921
        %v4923 = vpop.f32.mrf.mxu0
        %v4924 = vpop.f32.mrf.mxu0
        %v4925 = vadd.f32 0.0, %v4924
        %v4926 = vpop.f32.mrf.mxu0
        %4927 = vmatprep.mubr.bf16.mxu0 0
        %4928 = vmatmul.mubr.bf16.gmra.mxu0 %v4776
        %v4929 = vpop.f32.mrf.mxu0
        %v4930 = vadd.f32 0.0, %v4929
        %v4931 = vpop.f32.mrf.mxu0
        %v4932 = vpop.f32.mrf.mxu0
        %v4933 = vadd.f32 0.0, %v4932
        %v4934 = vpop.f32.mrf.mxu0
        %4935 = vmatprep.mubr.bf16.mxu0 0
        %4936 = vmatmul.mubr.bf16.gmra.mxu0 %v4779
        %v4937 = vpop.f32.mrf.mxu0
        %v4938 = vadd.f32 0.0, %v4937
        %v4939 = vpop.f32.mrf.mxu0
        %v4940 = vpop.f32.mrf.mxu0
        %v4941 = vadd.f32 0.0, %v4940
        %v4942 = vpop.f32.mrf.mxu0
        %4943 = vmatprep.mubr.bf16.mxu0 0
        %4944 = vmatmul.mubr.bf16.gmra.mxu0 %v4782
        %v4945 = vpop.f32.mrf.mxu0
        %v4946 = vadd.f32 0.0, %v4945
        %v4947 = vpop.f32.mrf.mxu0
        %v4948 = vpop.f32.mrf.mxu0
        %v4949 = vadd.f32 0.0, %v4948
        %v4950 = vpop.f32.mrf.mxu0
        %4951 = vmatprep.mubr.bf16.mxu0 0
        %4952 = vmatmul.mubr.bf16.gmra.mxu0 %v4785
        %v4953 = vpop.f32.mrf.mxu0
        %v4954 = vadd.f32 0.0, %v4953
        %v4955 = vpop.f32.mrf.mxu0
        %v4956 = vpop.f32.mrf.mxu0
        %v4957 = vadd.f32 0.0, %v4956
        %v4958 = vpop.f32.mrf.mxu0
        %4959 = vmatprep.mubr.bf16.mxu0 0
        %4960 = vmatmul.mubr.bf16.gmra.mxu0 %v4788
        %v4961 = vpop.f32.mrf.mxu0
        %v4962 = vadd.f32 0.0, %v4961
        %v4963 = vpop.f32.mrf.mxu0
        %v4964 = vpop.f32.mrf.mxu0
        %v4965 = vadd.f32 0.0, %v4964
        %v4966 = vpop.f32.mrf.mxu0
        %4967 = vmatprep.mubr.bf16.mxu0 0
        %4968 = vmatmul.mubr.bf16.gmra.mxu0 %v4791
        %v4969 = vpop.f32.mrf.mxu0
        %v4970 = vadd.f32 0.0, %v4969
        %v4971 = vpop.f32.mrf.mxu0
        %v4972 = vpop.f32.mrf.mxu0
        %v4973 = vadd.f32 0.0, %v4972
        %v4974 = vpop.f32.mrf.mxu0
        %4975 = vmatprep.mubr.bf16.mxu0 0
        %4976 = vmatmul.mubr.bf16.gmra.mxu0 %v4794
        %v4977 = vpop.f32.mrf.mxu0
        %v4978 = vadd.f32 0.0, %v4977
        %v4979 = vpop.f32.mrf.mxu0
        %v4980 = vpop.f32.mrf.mxu0
        %v4981 = vadd.f32 0.0, %v4980
        %v4982 = vpop.f32.mrf.mxu0
        %4983 = vmatprep.mubr.bf16.mxu0 0
        %4984 = vmatmul.mubr.bf16.gmra.mxu0 %v4797
        %v4985 = vpop.f32.mrf.mxu0
        %v4986 = vadd.f32 0.0, %v4985
        %v4987 = vpop.f32.mrf.mxu0
        %v4988 = vpop.f32.mrf.mxu0
        %v4989 = vadd.f32 0.0, %v4988
        %v4990 = vpop.f32.mrf.mxu0
        %4991 = vmatprep.mubr.bf16.mxu0 0
        %4992 = vmatmul.mubr.bf16.gmra.mxu0 %v4800
        %v4993 = vpop.f32.mrf.mxu0
        %v4994 = vadd.f32 0.0, %v4993
        %v4995 = vpop.f32.mrf.mxu0
        %v4996 = vpop.f32.mrf.mxu0
        %v4997 = vadd.f32 0.0, %v4996
        %v4998 = vpop.f32.mrf.mxu0
        %4999 = vmatprep.mubr.bf16.mxu0 0
        %5000 = vmatmul.mubr.bf16.gmra.mxu0 %v4803
        %v5001 = vpop.f32.mrf.mxu0
        %v5002 = vadd.f32 0.0, %v5001
        %v5003 = vpop.f32.mrf.mxu0
        %v5004 = vpop.f32.mrf.mxu0
        %v5005 = vadd.f32 0.0, %v5004
        %v5006 = vpop.f32.mrf.mxu0
        %5007 = vmatprep.mubr.bf16.mxu0 0
        %5008 = vmatmul.mubr.bf16.gmra.mxu0 %v4806
        %v5009 = vpop.f32.mrf.mxu0
        %v5010 = vadd.f32 0.0, %v5009
        %v5011 = vpop.f32.mrf.mxu0
        %v5012 = vpop.f32.mrf.mxu0
        %v5013 = vadd.f32 0.0, %v5012
        %v5014 = vpop.f32.mrf.mxu0
        %5015 = vmatprep.mubr.bf16.mxu0 0
        %5016 = vmatmul.mubr.bf16.gmra.mxu0 %v4809
        %v5017 = vpop.f32.mrf.mxu0
        %v5018 = vadd.f32 0.0, %v5017
        %v5019 = vpop.f32.mrf.mxu0
        %v5020 = vpop.f32.mrf.mxu0
        %v5021 = vadd.f32 0.0, %v5020
        %v5022 = vpop.f32.mrf.mxu0
        %5023 = vmatprep.mubr.bf16.mxu0 0
        %5024 = vmatmul.mubr.bf16.gmra.mxu0 %v4812
        %v5025 = vpop.f32.mrf.mxu0
        %v5026 = vadd.f32 0.0, %v5025
        %v5027 = vpop.f32.mrf.mxu0
        %v5028 = vpop.f32.mrf.mxu0
        %v5029 = vadd.f32 0.0, %v5028
        %v5030 = vpop.f32.mrf.mxu0
        %5031 = vmatprep.mubr.bf16.mxu0 0
        %5032 = vmatmul.mubr.bf16.gmra.mxu0 %v4815
        %v5033 = vpop.f32.mrf.mxu0
        %v5034 = vadd.f32 0.0, %v5033
        %v5035 = vpop.f32.mrf.mxu0
        %v5036 = vpop.f32.mrf.mxu0
        %v5037 = vadd.f32 0.0, %v5036
        %v5038 = vpop.f32.mrf.mxu0
        %5039 = vmatprep.mubr.bf16.mxu0 0
        %5040 = vmatmul.mubr.bf16.gmra.mxu0 %v4818
        %v5041 = vpop.f32.mrf.mxu0
        %v5042 = vadd.f32 0.0, %v5041
        %v5043 = vpop.f32.mrf.mxu0
        %v5044 = vpop.f32.mrf.mxu0
        %v5045 = vadd.f32 0.0, %v5044
        %v5046 = vpop.f32.mrf.mxu0
        %5047 = vmatprep.mubr.bf16.mxu0 0
        %5048 = vmatmul.mubr.bf16.gmra.mxu0 %v4821
        %v5049 = vpop.f32.mrf.mxu0
        %v5050 = vadd.f32 0.0, %v5049
        %v5051 = vpop.f32.mrf.mxu0
        %v5052 = vpop.f32.mrf.mxu0
        %v5053 = vadd.f32 0.0, %v5052
        %v5054 = vpop.f32.mrf.mxu0
        %5055 = vmatprep.mubr.bf16.mxu0 0
        %5056 = vmatmul.mubr.bf16.gmra.mxu0 %v4824
        %v5057 = vpop.f32.mrf.mxu0
        %v5058 = vadd.f32 0.0, %v5057
        %v5059 = vpop.f32.mrf.mxu0
        %v5060 = vpop.f32.mrf.mxu0
        %v5061 = vadd.f32 0.0, %v5060
        %v5062 = vpop.f32.mrf.mxu0
        %5063 = vmatprep.mubr.bf16.mxu0 0
        %5064 = vmatmul.mubr.bf16.gmra.mxu0 %v4827
        %v5065 = vpop.f32.mrf.mxu0
        %v5066 = vadd.f32 0.0, %v5065
        %v5067 = vpop.f32.mrf.mxu0
        %v5068 = vpop.f32.mrf.mxu0
        %v5069 = vadd.f32 0.0, %v5068
        %v5070 = vpop.f32.mrf.mxu0
        %5071 = vmatprep.mubr.bf16.mxu0 0
        %5072 = vmatmul.mubr.bf16.gmra.mxu0 %v4830
        %v5073 = vpop.f32.mrf.mxu0
        %v5074 = vadd.f32 0.0, %v5073
        %v5075 = vpop.f32.mrf.mxu0
        %v5076 = vpop.f32.mrf.mxu0
        %v5077 = vadd.f32 0.0, %v5076
        %v5078 = vpop.f32.mrf.mxu0
        %5079 = vmatprep.mubr.bf16.mxu0 0
        %5080 = vmatmul.mubr.bf16.gmra.mxu0 %v4833
        %v5081 = vpop.f32.mrf.mxu0
        %v5082 = vadd.f32 0.0, %v5081
        %v5083 = vpop.f32.mrf.mxu0
        %v5084 = vpop.f32.mrf.mxu0
        %v5085 = vadd.f32 0.0, %v5084
        %v5086 = vpop.f32.mrf.mxu0
        %5087 = vmatprep.mubr.bf16.mxu0 0
        %5088 = vmatmul.mubr.bf16.gmra.mxu0 %v4836
        %v5089 = vpop.f32.mrf.mxu0
        %v5090 = vadd.f32 0.0, %v5089
        %v5091 = vpop.f32.mrf.mxu0
        %v5092 = vpop.f32.mrf.mxu0
        %v5093 = vadd.f32 0.0, %v5092
        %v5094 = vpop.f32.mrf.mxu0
        %5095 = vmatprep.mubr.bf16.mxu0 0
        %5096 = vmatmul.mubr.bf16.gmra.mxu0 %v4839
        %v5097 = vpop.f32.mrf.mxu0
        %v5098 = vadd.f32 0.0, %v5097
        %v5099 = vpop.f32.mrf.mxu0
        %v5100 = vpop.f32.mrf.mxu0
        %v5101 = vadd.f32 0.0, %v5100
        %v5102 = vpop.f32.mrf.mxu0
        %5103 = vmatprep.mubr.bf16.mxu0 0
        %5104 = vmatmul.mubr.bf16.gmra.mxu0 %v4842
        %v5105 = vpop.f32.mrf.mxu0
        %v5106 = vadd.f32 0.0, %v5105
        %v5107 = vpop.f32.mrf.mxu0
        %v5108 = vpop.f32.mrf.mxu0
        %v5109 = vadd.f32 0.0, %v5108
        %v5110 = vpop.f32.mrf.mxu0
        %5111 = vmatprep.mubr.bf16.mxu0 0
        %5112 = vmatmul.mubr.bf16.gmra.mxu0 %v4845
        %v5113 = vpop.f32.mrf.mxu0
        %v5114 = vadd.f32 0.0, %v5113
        %v5115 = vpop.f32.mrf.mxu0
        %v5116 = vpop.f32.mrf.mxu0
        %v5117 = vadd.f32 0.0, %v5116
        %v5118 = vpop.f32.mrf.mxu0
        %5119 = vmatprep.mubr.bf16.mxu0 0
        %5120 = vmatmul.mubr.bf16.gmra.mxu0 %v4848
        %v5121 = vpop.f32.mrf.mxu0
        %v5122 = vadd.f32 0.0, %v5121
        %v5123 = vpop.f32.mrf.mxu0
        %v5124 = vpop.f32.mrf.mxu0
        %v5125 = vadd.f32 0.0, %v5124
        %v5126 = vpop.f32.mrf.mxu0
        %5127 = vmatprep.mubr.bf16.mxu0 0
        %5128 = vmatmul.mubr.bf16.gmra.mxu0 %v4851
        %v5129 = vpop.f32.mrf.mxu0
        %v5130 = vadd.f32 0.0, %v5129
        %v5131 = vpop.f32.mrf.mxu0
        %v5132 = vpop.f32.mrf.mxu0
        %v5133 = vadd.f32 0.0, %v5132
        %v5134 = vpop.f32.mrf.mxu0
        %5135 = vmatprep.mubr.bf16.mxu0 0
        %5136 = vmatmul.mubr.bf16.gmra.mxu0 %v4854
        %v5137 = vpop.f32.mrf.mxu0
        %v5138 = vadd.f32 0.0, %v5137
        %v5139 = vpop.f32.mrf.mxu0
        %v5140 = vpop.f32.mrf.mxu0
        %v5141 = vadd.f32 0.0, %v5140
        %v5142 = vpop.f32.mrf.mxu0
        %5143 = vmatprep.mubr.bf16.mxu0 0
        %5144 = vmatmul.mubr.bf16.gmra.mxu0 %v4857
        %v5145 = vpop.f32.mrf.mxu0
        %v5146 = vadd.f32 0.0, %v5145
        %v5147 = vpop.f32.mrf.mxu0
        %v5148 = vpop.f32.mrf.mxu0
        %v5149 = vadd.f32 0.0, %v5148
        %v5150 = vpop.f32.mrf.mxu0
        %5151 = vdwg.mxu0
        %v5152 = vmul.f32 %v3328, %v4898
        %v5153 = vmul.f32 %v3329, %v4901
        %v5154 = vmul.f32 %v3330, %v4906
        %v5155 = vmul.f32 %v3331, %v4909
        %v5156 = vmul.f32 %v3332, %v4914
        %v5157 = vmul.f32 %v3333, %v4917
        %v5158 = vmul.f32 %v3334, %v4922
        %v5159 = vmul.f32 %v3335, %v4925
        %v5160 = vmul.f32 %v3336, %v4930
        %v5161 = vmul.f32 %v3337, %v4933
        %v5162 = vmul.f32 %v3338, %v4938
        %v5163 = vmul.f32 %v3339, %v4941
        %v5164 = vmul.f32 %v3340, %v4946
        %v5165 = vmul.f32 %v3341, %v4949
        %v5166 = vmul.f32 %v3342, %v4954
        %v5167 = vmul.f32 %v3343, %v4957
        %v5168 = vmul.f32 %v3344, %v4962
        %v5169 = vmul.f32 %v3345, %v4965
        %v5170 = vmul.f32 %v3346, %v4970
        %v5171 = vmul.f32 %v3347, %v4973
        %v5172 = vmul.f32 %v3348, %v4978
        %v5173 = vmul.f32 %v3349, %v4981
        %v5174 = vmul.f32 %v3350, %v4986
        %v5175 = vmul.f32 %v3351, %v4989
        %v5176 = vmul.f32 %v3352, %v4994
        %v5177 = vmul.f32 %v3353, %v4997
        %v5178 = vmul.f32 %v3354, %v5002
        %v5179 = vmul.f32 %v3355, %v5005
        %v5180 = vmul.f32 %v3356, %v5010
        %v5181 = vmul.f32 %v3357, %v5013
        %v5182 = vmul.f32 %v3358, %v5018
        %v5183 = vmul.f32 %v3359, %v5021
        %v5184 = vmul.f32 %v3360, %v5026
        %v5185 = vmul.f32 %v3361, %v5029
        %v5186 = vmul.f32 %v3362, %v5034
        %v5187 = vmul.f32 %v3363, %v5037
        %v5188 = vmul.f32 %v3364, %v5042
        %v5189 = vmul.f32 %v3365, %v5045
        %v5190 = vmul.f32 %v3366, %v5050
        %v5191 = vmul.f32 %v3367, %v5053
        %v5192 = vmul.f32 %v3368, %v5058
        %v5193 = vmul.f32 %v3369, %v5061
        %v5194 = vmul.f32 %v3370, %v5066
        %v5195 = vmul.f32 %v3371, %v5069
        %v5196 = vmul.f32 %v3372, %v5074
        %v5197 = vmul.f32 %v3373, %v5077
        %v5198 = vmul.f32 %v3374, %v5082
        %v5199 = vmul.f32 %v3375, %v5085
        %v5200 = vmul.f32 %v3376, %v5090
        %v5201 = vmul.f32 %v3377, %v5093
        %v5202 = vmul.f32 %v3378, %v5098
        %v5203 = vmul.f32 %v3379, %v5101
        %v5204 = vmul.f32 %v3380, %v5106
        %v5205 = vmul.f32 %v3381, %v5109
        %v5206 = vmul.f32 %v3382, %v5114
        %v5207 = vmul.f32 %v3383, %v5117
        %v5208 = vmul.f32 %v3384, %v5122
        %v5209 = vmul.f32 %v3385, %v5125
        %v5210 = vmul.f32 %v3386, %v5130
        %v5211 = vmul.f32 %v3387, %v5133
        %v5212 = vmul.f32 %v3388, %v5138
        %v5213 = vmul.f32 %v3389, %v5141
        %v5214 = vmul.f32 %v3390, %v5146
        %v5215 = vmul.f32 %v3391, %v5149
        %v5216 = vpack.c.bf16 %v5153, %v5152
        %v5217 = vpack.c.bf16 %v5155, %v5154
        %v5218 = vpack.c.bf16 %v5157, %v5156
        %v5219 = vpack.c.bf16 %v5159, %v5158
        %v5220 = vpack.c.bf16 %v5161, %v5160
        %v5221 = vpack.c.bf16 %v5163, %v5162
        %v5222 = vpack.c.bf16 %v5165, %v5164
        %v5223 = vpack.c.bf16 %v5167, %v5166
        %v5224 = vpack.c.bf16 %v5169, %v5168
        %v5225 = vpack.c.bf16 %v5171, %v5170
        %v5226 = vpack.c.bf16 %v5173, %v5172
        %v5227 = vpack.c.bf16 %v5175, %v5174
        %v5228 = vpack.c.bf16 %v5177, %v5176
        %v5229 = vpack.c.bf16 %v5179, %v5178
        %v5230 = vpack.c.bf16 %v5181, %v5180
        %v5231 = vpack.c.bf16 %v5183, %v5182
        %v5232 = vpack.c.bf16 %v5185, %v5184
        %v5233 = vpack.c.bf16 %v5187, %v5186
        %v5234 = vpack.c.bf16 %v5189, %v5188
        %v5235 = vpack.c.bf16 %v5191, %v5190
        %v5236 = vpack.c.bf16 %v5193, %v5192
        %v5237 = vpack.c.bf16 %v5195, %v5194
        %v5238 = vpack.c.bf16 %v5197, %v5196
        %v5239 = vpack.c.bf16 %v5199, %v5198
        %v5240 = vpack.c.bf16 %v5201, %v5200
        %v5241 = vpack.c.bf16 %v5203, %v5202
        %v5242 = vpack.c.bf16 %v5205, %v5204
        %v5243 = vpack.c.bf16 %v5207, %v5206
        %v5244 = vpack.c.bf16 %v5209, %v5208
        %v5245 = vpack.c.bf16 %v5211, %v5210
        %v5246 = vpack.c.bf16 %v5213, %v5212
        %v5247 = vpack.c.bf16 %v5215, %v5214
        %v5248 = vld [vmem:[#allocation4] sm:$0xff]
        %v5249 = vld [vmem:[#allocation4 + $0x8] sm:$0xff]
        %v5250 = vld [vmem:[#allocation4 + $0x10] sm:$0xff]
        %v5251 = vld [vmem:[#allocation4 + $0x18] sm:$0xff]
        %v5252 = vld [vmem:[#allocation4 + $0x20] sm:$0xff]
        %v5253 = vld [vmem:[#allocation4 + $0x28] sm:$0xff]
        %v5254 = vld [vmem:[#allocation4 + $0x30] sm:$0xff]
        %v5255 = vld [vmem:[#allocation4 + $0x38] sm:$0xff]
        %v5256 = vld [vmem:[#allocation4 + $0x40] sm:$0xff]
        %v5257 = vld [vmem:[#allocation4 + $0x48] sm:$0xff]
        %v5258 = vld [vmem:[#allocation4 + $0x50] sm:$0xff]
        %v5259 = vld [vmem:[#allocation4 + $0x58] sm:$0xff]
        %v5260 = vld [vmem:[#allocation4 + $0x60] sm:$0xff]
        %v5261 = vld [vmem:[#allocation4 + $0x68] sm:$0xff]
        %v5262 = vld [vmem:[#allocation4 + $0x70] sm:$0xff]
        %v5263 = vld [vmem:[#allocation4 + $0x78] sm:$0xff]
        %v5296 = vunpack.c.l.b16 %v3230
        %v5297 = vunpack.c.h.b16 %v3230
        %v5298 = vunpack.c.l.b16 %v3231
        %v5299 = vunpack.c.h.b16 %v3231
        %v5300 = vunpack.c.l.b16 %v3232
        %v5301 = vunpack.c.h.b16 %v3232
        %v5302 = vunpack.c.l.b16 %v3233
        %v5303 = vunpack.c.h.b16 %v3233
        %v5304 = vunpack.c.l.b16 %v3234
        %v5305 = vunpack.c.h.b16 %v3234
        %v5306 = vunpack.c.l.b16 %v3235
        %v5307 = vunpack.c.h.b16 %v3235
        %v5308 = vunpack.c.l.b16 %v3236
        %v5309 = vunpack.c.h.b16 %v3236
        %v5310 = vunpack.c.l.b16 %v3237
        %v5311 = vunpack.c.h.b16 %v3237
        %v5312 = vunpack.c.l.b16 %v3238
        %v5313 = vunpack.c.h.b16 %v3238
        %v5314 = vunpack.c.l.b16 %v3239
        %v5315 = vunpack.c.h.b16 %v3239
        %v5316 = vunpack.c.l.b16 %v3240
        %v5317 = vunpack.c.h.b16 %v3240
        %v5318 = vunpack.c.l.b16 %v3241
        %v5319 = vunpack.c.h.b16 %v3241
        %v5320 = vunpack.c.l.b16 %v3242
        %v5321 = vunpack.c.h.b16 %v3242
        %v5322 = vunpack.c.l.b16 %v3243
        %v5323 = vunpack.c.h.b16 %v3243
        %v5324 = vunpack.c.l.b16 %v3244
        %v5325 = vunpack.c.h.b16 %v3244
        %v5326 = vunpack.c.l.b16 %v3245
        %v5327 = vunpack.c.h.b16 %v3245
        %v5328 = vunpack.c.l.b16 %v3246
        %v5329 = vunpack.c.h.b16 %v3246
        %v5330 = vunpack.c.l.b16 %v3247
        %v5331 = vunpack.c.h.b16 %v3247
        %v5332 = vunpack.c.l.b16 %v3248
        %v5333 = vunpack.c.h.b16 %v3248
        %v5334 = vunpack.c.l.b16 %v3249
        %v5335 = vunpack.c.h.b16 %v3249
        %v5336 = vunpack.c.l.b16 %v3250
        %v5337 = vunpack.c.h.b16 %v3250
        %v5338 = vunpack.c.l.b16 %v3251
        %v5339 = vunpack.c.h.b16 %v3251
        %v5340 = vunpack.c.l.b16 %v3252
        %v5341 = vunpack.c.h.b16 %v3252
        %v5342 = vunpack.c.l.b16 %v3253
        %v5343 = vunpack.c.h.b16 %v3253
        %v5344 = vunpack.c.l.b16 %v3254
        %v5345 = vunpack.c.h.b16 %v3254
        %v5346 = vunpack.c.l.b16 %v3255
        %v5347 = vunpack.c.h.b16 %v3255
        %v5348 = vunpack.c.l.b16 %v3256
        %v5349 = vunpack.c.h.b16 %v3256
        %v5350 = vunpack.c.l.b16 %v3257
        %v5351 = vunpack.c.h.b16 %v3257
        %v5352 = vunpack.c.l.b16 %v3258
        %v5353 = vunpack.c.h.b16 %v3258
        %v5354 = vunpack.c.l.b16 %v3259
        %v5355 = vunpack.c.h.b16 %v3259
        %v5356 = vunpack.c.l.b16 %v3260
        %v5357 = vunpack.c.h.b16 %v3260
        %v5358 = vunpack.c.l.b16 %v3261
        %v5359 = vunpack.c.h.b16 %v3261
        %v5360 = vpack.c.b16 %v5300, %v5296
        %v5361 = vpack.c.b16 %v5301, %v5297
        %v5362 = vpack.c.b16 %v5302, %v5298
        %v5363 = vpack.c.b16 %v5303, %v5299
        %v5364 = vpack.c.b16 %v5308, %v5304
        %v5365 = vpack.c.b16 %v5309, %v5305
        %v5366 = vpack.c.b16 %v5310, %v5306
        %v5367 = vpack.c.b16 %v5311, %v5307
        %v5368 = vpack.c.b16 %v5316, %v5312
        %v5369 = vpack.c.b16 %v5317, %v5313
        %v5370 = vpack.c.b16 %v5318, %v5314
        %v5371 = vpack.c.b16 %v5319, %v5315
        %v5372 = vpack.c.b16 %v5324, %v5320
        %v5373 = vpack.c.b16 %v5325, %v5321
        %v5374 = vpack.c.b16 %v5326, %v5322
        %v5375 = vpack.c.b16 %v5327, %v5323
        %v5376 = vpack.c.b16 %v5332, %v5328
        %v5377 = vpack.c.b16 %v5333, %v5329
        %v5378 = vpack.c.b16 %v5334, %v5330
        %v5379 = vpack.c.b16 %v5335, %v5331
        %v5380 = vpack.c.b16 %v5340, %v5336
        %v5381 = vpack.c.b16 %v5341, %v5337
        %v5382 = vpack.c.b16 %v5342, %v5338
        %v5383 = vpack.c.b16 %v5343, %v5339
        %v5384 = vpack.c.b16 %v5348, %v5344
        %v5385 = vpack.c.b16 %v5349, %v5345
        %v5386 = vpack.c.b16 %v5350, %v5346
        %v5387 = vpack.c.b16 %v5351, %v5347
        %v5388 = vpack.c.b16 %v5356, %v5352
        %v5389 = vpack.c.b16 %v5357, %v5353
        %v5390 = vpack.c.b16 %v5358, %v5354
        %v5391 = vpack.c.b16 %v5359, %v5355
        %5424 = vmatprep.subr.bf16.mxu0 0
        %5425 = vmatpush1.bf16.msra.mxu0 %v5223
        %5426 = vmatprep.subr.bf16.mxu0 0
        %5427 = vmatpush1.bf16.msra.mxu0 %v5222
        %5428 = vmatprep.subr.bf16.mxu0 0
        %5429 = vmatpush1.bf16.msra.mxu0 %v5221
        %5430 = vmatprep.subr.bf16.mxu0 0
        %5431 = vmatpush1.bf16.msra.mxu0 %v5220
        %5432 = vmatprep.subr.bf16.mxu0 0
        %5433 = vmatpush1.bf16.msra.mxu0 %v5219
        %5434 = vmatprep.subr.bf16.mxu0 0
        %5435 = vmatpush1.bf16.msra.mxu0 %v5218
        %5436 = vmatprep.subr.bf16.mxu0 0
        %5437 = vmatpush1.bf16.msra.mxu0 %v5217
        %5438 = vmatprep.subr.bf16.mxu0 0
        %5439 = vmatpush1.bf16.msra.mxu0 %v5216
        %5440 = vmatprep.subr.bf16.mxu0 0
        %5441 = vmatpush2.bf16.msra.mxu0 %v5231
        %5442 = vmatprep.subr.bf16.mxu0 0
        %5443 = vmatpush2.bf16.msra.mxu0 %v5230
        %5444 = vmatprep.subr.bf16.mxu0 0
        %5445 = vmatpush2.bf16.msra.mxu0 %v5229
        %5446 = vmatprep.subr.bf16.mxu0 0
        %5447 = vmatpush2.bf16.msra.mxu0 %v5228
        %5448 = vmatprep.subr.bf16.mxu0 0
        %5449 = vmatpush2.bf16.msra.mxu0 %v5227
        %5450 = vmatprep.subr.bf16.mxu0 0
        %5451 = vmatpush2.bf16.msra.mxu0 %v5226
        %5452 = vmatprep.subr.bf16.mxu0 0
        %5453 = vmatpush2.bf16.msra.mxu0 %v5225
        %5454 = vmatprep.subr.bf16.mxu0 0
        %5455 = vmatpush2.bf16.msra.mxu0 %v5224
        %5456 = vmatprep.mubr.bf16.mxu0 %v5361
        %5457 = vmatmul.mubr.bf16.gmra.mxu0 %v5360
        %v5458 = vpop.f32.mrf.mxu0
        %v5459 = vadd.f32 0.0, %v5458
        %v5460 = vpop.f32.mrf.mxu0
        %v5461 = vpop.f32.mrf.mxu0
        %v5462 = vadd.f32 0.0, %v5461
        %v5463 = vpop.f32.mrf.mxu0
        %5464 = vmatprep.mubr.bf16.mxu0 %v5365
        %5465 = vmatmul.mubr.bf16.gmra.mxu0 %v5364
        %v5466 = vpop.f32.mrf.mxu0
        %v5467 = vadd.f32 0.0, %v5466
        %v5468 = vpop.f32.mrf.mxu0
        %v5469 = vpop.f32.mrf.mxu0
        %v5470 = vadd.f32 0.0, %v5469
        %v5471 = vpop.f32.mrf.mxu0
        %5472 = vmatprep.mubr.bf16.mxu0 %v5369
        %5473 = vmatmul.mubr.bf16.gmra.mxu0 %v5368
        %v5474 = vpop.f32.mrf.mxu0
        %v5475 = vadd.f32 0.0, %v5474
        %v5476 = vpop.f32.mrf.mxu0
        %v5477 = vpop.f32.mrf.mxu0
        %v5478 = vadd.f32 0.0, %v5477
        %v5479 = vpop.f32.mrf.mxu0
        %5480 = vmatprep.mubr.bf16.mxu0 %v5373
        %5481 = vmatmul.mubr.bf16.gmra.mxu0 %v5372
        %v5482 = vpop.f32.mrf.mxu0
        %v5483 = vadd.f32 0.0, %v5482
        %v5484 = vpop.f32.mrf.mxu0
        %v5485 = vpop.f32.mrf.mxu0
        %v5486 = vadd.f32 0.0, %v5485
        %v5487 = vpop.f32.mrf.mxu0
        %5488 = vmatprep.mubr.bf16.mxu0 %v5377
        %5489 = vmatmul.mubr.bf16.gmra.mxu0 %v5376
        %v5490 = vpop.f32.mrf.mxu0
        %v5491 = vadd.f32 0.0, %v5490
        %v5492 = vpop.f32.mrf.mxu0
        %v5493 = vpop.f32.mrf.mxu0
        %v5494 = vadd.f32 0.0, %v5493
        %v5495 = vpop.f32.mrf.mxu0
        %5496 = vmatprep.mubr.bf16.mxu0 %v5381
        %5497 = vmatmul.mubr.bf16.gmra.mxu0 %v5380
        %v5498 = vpop.f32.mrf.mxu0
        %v5499 = vadd.f32 0.0, %v5498
        %v5500 = vpop.f32.mrf.mxu0
        %v5501 = vpop.f32.mrf.mxu0
        %v5502 = vadd.f32 0.0, %v5501
        %v5503 = vpop.f32.mrf.mxu0
        %5504 = vmatprep.mubr.bf16.mxu0 %v5385
        %5505 = vmatmul.mubr.bf16.gmra.mxu0 %v5384
        %v5506 = vpop.f32.mrf.mxu0
        %v5507 = vadd.f32 0.0, %v5506
        %v5508 = vpop.f32.mrf.mxu0
        %v5509 = vpop.f32.mrf.mxu0
        %v5510 = vadd.f32 0.0, %v5509
        %v5511 = vpop.f32.mrf.mxu0
        %5512 = vmatprep.mubr.bf16.mxu0 %v5389
        %5513 = vmatmul.mubr.bf16.gmra.mxu0 %v5388
        %v5514 = vpop.f32.mrf.mxu0
        %v5515 = vadd.f32 0.0, %v5514
        %v5516 = vpop.f32.mrf.mxu0
        %v5517 = vpop.f32.mrf.mxu0
        %v5518 = vadd.f32 0.0, %v5517
        %v5519 = vpop.f32.mrf.mxu0
        %5520 = vdwg.mxu0
        %5521 = vmatprep.subr.bf16.mxu0 0
        %5522 = vmatpush1.bf16.msra.mxu0 %v5239
        %5523 = vmatprep.subr.bf16.mxu0 0
        %5524 = vmatpush1.bf16.msra.mxu0 %v5238
        %5525 = vmatprep.subr.bf16.mxu0 0
        %5526 = vmatpush1.bf16.msra.mxu0 %v5237
        %5527 = vmatprep.subr.bf16.mxu0 0
        %5528 = vmatpush1.bf16.msra.mxu0 %v5236
        %5529 = vmatprep.subr.bf16.mxu0 0
        %5530 = vmatpush1.bf16.msra.mxu0 %v5235
        %5531 = vmatprep.subr.bf16.mxu0 0
        %5532 = vmatpush1.bf16.msra.mxu0 %v5234
        %5533 = vmatprep.subr.bf16.mxu0 0
        %5534 = vmatpush1.bf16.msra.mxu0 %v5233
        %5535 = vmatprep.subr.bf16.mxu0 0
        %5536 = vmatpush1.bf16.msra.mxu0 %v5232
        %5537 = vmatprep.subr.bf16.mxu0 0
        %5538 = vmatpush2.bf16.msra.mxu0 %v5247
        %5539 = vmatprep.subr.bf16.mxu0 0
        %5540 = vmatpush2.bf16.msra.mxu0 %v5246
        %5541 = vmatprep.subr.bf16.mxu0 0
        %5542 = vmatpush2.bf16.msra.mxu0 %v5245
        %5543 = vmatprep.subr.bf16.mxu0 0
        %5544 = vmatpush2.bf16.msra.mxu0 %v5244
        %5545 = vmatprep.subr.bf16.mxu0 0
        %5546 = vmatpush2.bf16.msra.mxu0 %v5243
        %5547 = vmatprep.subr.bf16.mxu0 0
        %5548 = vmatpush2.bf16.msra.mxu0 %v5242
        %5549 = vmatprep.subr.bf16.mxu0 0
        %5550 = vmatpush2.bf16.msra.mxu0 %v5241
        %5551 = vmatprep.subr.bf16.mxu0 0
        %5552 = vmatpush2.bf16.msra.mxu0 %v5240
        %5553 = vmatprep.mubr.bf16.mxu0 %v5363
        %5554 = vmatmul.mubr.bf16.gmra.mxu0 %v5362
        %v5555 = vpop.f32.mrf.mxu0
        %v5556 = vadd.f32 %v5459, %v5555
        %v5557 = vpop.f32.mrf.mxu0
        %v5558 = vpop.f32.mrf.mxu0
        %v5559 = vadd.f32 %v5462, %v5558
        %v5560 = vpop.f32.mrf.mxu0
        %5561 = vmatprep.mubr.bf16.mxu0 %v5367
        %5562 = vmatmul.mubr.bf16.gmra.mxu0 %v5366
        %v5563 = vpop.f32.mrf.mxu0
        %v5564 = vadd.f32 %v5467, %v5563
        %v5565 = vpop.f32.mrf.mxu0
        %v5566 = vpop.f32.mrf.mxu0
        %v5567 = vadd.f32 %v5470, %v5566
        %v5568 = vpop.f32.mrf.mxu0
        %5569 = vmatprep.mubr.bf16.mxu0 %v5371
        %5570 = vmatmul.mubr.bf16.gmra.mxu0 %v5370
        %v5571 = vpop.f32.mrf.mxu0
        %v5572 = vadd.f32 %v5475, %v5571
        %v5573 = vpop.f32.mrf.mxu0
        %v5574 = vpop.f32.mrf.mxu0
        %v5575 = vadd.f32 %v5478, %v5574
        %v5576 = vpop.f32.mrf.mxu0
        %5577 = vmatprep.mubr.bf16.mxu0 %v5375
        %5578 = vmatmul.mubr.bf16.gmra.mxu0 %v5374
        %v5579 = vpop.f32.mrf.mxu0
        %v5580 = vadd.f32 %v5483, %v5579
        %v5581 = vpop.f32.mrf.mxu0
        %v5582 = vpop.f32.mrf.mxu0
        %v5583 = vadd.f32 %v5486, %v5582
        %v5584 = vpop.f32.mrf.mxu0
        %5585 = vmatprep.mubr.bf16.mxu0 %v5379
        %5586 = vmatmul.mubr.bf16.gmra.mxu0 %v5378
        %v5587 = vpop.f32.mrf.mxu0
        %v5588 = vadd.f32 %v5491, %v5587
        %v5589 = vpop.f32.mrf.mxu0
        %v5590 = vpop.f32.mrf.mxu0
        %v5591 = vadd.f32 %v5494, %v5590
        %v5592 = vpop.f32.mrf.mxu0
        %5593 = vmatprep.mubr.bf16.mxu0 %v5383
        %5594 = vmatmul.mubr.bf16.gmra.mxu0 %v5382
        %v5595 = vpop.f32.mrf.mxu0
        %v5596 = vadd.f32 %v5499, %v5595
        %v5597 = vpop.f32.mrf.mxu0
        %v5598 = vpop.f32.mrf.mxu0
        %v5599 = vadd.f32 %v5502, %v5598
        %v5600 = vpop.f32.mrf.mxu0
        %5601 = vmatprep.mubr.bf16.mxu0 %v5387
        %5602 = vmatmul.mubr.bf16.gmra.mxu0 %v5386
        %v5603 = vpop.f32.mrf.mxu0
        %v5604 = vadd.f32 %v5507, %v5603
        %v5605 = vpop.f32.mrf.mxu0
        %v5606 = vpop.f32.mrf.mxu0
        %v5607 = vadd.f32 %v5510, %v5606
        %v5608 = vpop.f32.mrf.mxu0
        %5609 = vmatprep.mubr.bf16.mxu0 %v5391
        %5610 = vmatmul.mubr.bf16.gmra.mxu0 %v5390
        %v5611 = vpop.f32.mrf.mxu0
        %v5612 = vadd.f32 %v5515, %v5611
        %v5613 = vpop.f32.mrf.mxu0
        %v5614 = vpop.f32.mrf.mxu0
        %v5615 = vadd.f32 %v5518, %v5614
        %v5616 = vpop.f32.mrf.mxu0
        %5617 = vdwg.mxu0
        %v5618 = vadd.f32 %v5248, %v5556
        %v5619 = vadd.f32 %v5249, %v5559
        %v5620 = vadd.f32 %v5250, %v5564
        %v5621 = vadd.f32 %v5251, %v5567
        %v5622 = vadd.f32 %v5252, %v5572
        %v5623 = vadd.f32 %v5253, %v5575
        %v5624 = vadd.f32 %v5254, %v5580
        %v5625 = vadd.f32 %v5255, %v5583
        %v5626 = vadd.f32 %v5256, %v5588
        %v5627 = vadd.f32 %v5257, %v5591
        %v5628 = vadd.f32 %v5258, %v5596
        %v5629 = vadd.f32 %v5259, %v5599
        %v5630 = vadd.f32 %v5260, %v5604
        %v5631 = vadd.f32 %v5261, %v5607
        %v5632 = vadd.f32 %v5262, %v5612
        %v5633 = vadd.f32 %v5263, %v5615
        %5634 = vst [vmem:[#allocation4] sm:$0xff] %v5618
        %5635 = vst [vmem:[#allocation4 + $0x8] sm:$0xff] %v5619
        %5636 = vst [vmem:[#allocation4 + $0x10] sm:$0xff] %v5620
        %5637 = vst [vmem:[#allocation4 + $0x18] sm:$0xff] %v5621
        %5638 = vst [vmem:[#allocation4 + $0x20] sm:$0xff] %v5622
        %5639 = vst [vmem:[#allocation4 + $0x28] sm:$0xff] %v5623
        %5640 = vst [vmem:[#allocation4 + $0x30] sm:$0xff] %v5624
        %5641 = vst [vmem:[#allocation4 + $0x38] sm:$0xff] %v5625
        %5642 = vst [vmem:[#allocation4 + $0x40] sm:$0xff] %v5626
        %5643 = vst [vmem:[#allocation4 + $0x48] sm:$0xff] %v5627
        %5644 = vst [vmem:[#allocation4 + $0x50] sm:$0xff] %v5628
        %5645 = vst [vmem:[#allocation4 + $0x58] sm:$0xff] %v5629
        %5646 = vst [vmem:[#allocation4 + $0x60] sm:$0xff] %v5630
        %5647 = vst [vmem:[#allocation4 + $0x68] sm:$0xff] %v5631
        %5648 = vst [vmem:[#allocation4 + $0x70] sm:$0xff] %v5632
        %5649 = vst [vmem:[#allocation4 + $0x78] sm:$0xff] %v5633
        // Predicated region
        $region49: #{tpu_custom_call.1} parent=35 // pred_check
          %p5650 = pneg %p358
        $region50: #{tpu_custom_call.1} parent=35 // pred_check_branch
          %5652 = sbr.rel (%p5650) target = $region52
        $region51: #{tpu_custom_call.1} parent=35 // pred_region
          %v5653 = vld [vmem:[#allocation4] sm:$0xff]
          %v5654 = vld [vmem:[#allocation4 + $0x8] sm:$0xff]
          %v5655 = vld [vmem:[#allocation4 + $0x10] sm:$0xff]
          %v5656 = vld [vmem:[#allocation4 + $0x18] sm:$0xff]
          %v5657 = vld [vmem:[#allocation4 + $0x20] sm:$0xff]
          %v5658 = vld [vmem:[#allocation4 + $0x28] sm:$0xff]
          %v5659 = vld [vmem:[#allocation4 + $0x30] sm:$0xff]
          %v5660 = vld [vmem:[#allocation4 + $0x38] sm:$0xff]
          %v5661 = vld [vmem:[#allocation4 + $0x40] sm:$0xff]
          %v5662 = vld [vmem:[#allocation4 + $0x48] sm:$0xff]
          %v5663 = vld [vmem:[#allocation4 + $0x50] sm:$0xff]
          %v5664 = vld [vmem:[#allocation4 + $0x58] sm:$0xff]
          %v5665 = vld [vmem:[#allocation4 + $0x60] sm:$0xff]
          %v5666 = vld [vmem:[#allocation4 + $0x68] sm:$0xff]
          %v5667 = vld [vmem:[#allocation4 + $0x70] sm:$0xff]
          %v5668 = vld [vmem:[#allocation4 + $0x78] sm:$0xff]
          %v5669 = vld [vmem:[#allocation2] sm:$0xff]
          %v5670 = vld [vmem:[#allocation2 + $0x8] sm:$0xff]
          %v5671 = vld [vmem:[#allocation2 + $0x10] sm:$0xff]
          %v5672 = vld [vmem:[#allocation2 + $0x18] sm:$0xff]
          %v5673 = vld [vmem:[#allocation2 + $0x20] sm:$0xff]
          %v5674 = vld [vmem:[#allocation2 + $0x28] sm:$0xff]
          %v5675 = vld [vmem:[#allocation2 + $0x30] sm:$0xff]
          %v5676 = vld [vmem:[#allocation2 + $0x38] sm:$0xff]
          %v5677 = vld [vmem:[#allocation2 + $0x40] sm:$0xff]
          %v5678 = vld [vmem:[#allocation2 + $0x48] sm:$0xff]
          %v5679 = vld [vmem:[#allocation2 + $0x50] sm:$0xff]
          %v5680 = vld [vmem:[#allocation2 + $0x58] sm:$0xff]
          %v5681 = vld [vmem:[#allocation2 + $0x60] sm:$0xff]
          %v5682 = vld [vmem:[#allocation2 + $0x68] sm:$0xff]
          %v5683 = vld [vmem:[#allocation2 + $0x70] sm:$0xff]
          %v5684 = vld [vmem:[#allocation2 + $0x78] sm:$0xff]
          %v5685 = vadd.f32 %v5653, %v5669
          %v5686 = vadd.f32 %v5654, %v5670
          %v5687 = vadd.f32 %v5655, %v5671
          %v5688 = vadd.f32 %v5656, %v5672
          %v5689 = vadd.f32 %v5657, %v5673
          %v5690 = vadd.f32 %v5658, %v5674
          %v5691 = vadd.f32 %v5659, %v5675
          %v5692 = vadd.f32 %v5660, %v5676
          %v5693 = vadd.f32 %v5661, %v5677
          %v5694 = vadd.f32 %v5662, %v5678
          %v5695 = vadd.f32 %v5663, %v5679
          %v5696 = vadd.f32 %v5664, %v5680
          %v5697 = vadd.f32 %v5665, %v5681
          %v5698 = vadd.f32 %v5666, %v5682
          %v5699 = vadd.f32 %v5667, %v5683
          %v5700 = vadd.f32 %v5668, %v5684
          %v5701 = vmul.f32 %v5685, %v5685
          %v5702 = vmul.f32 %v5686, %v5686
          %v5703 = vmul.f32 %v5687, %v5687
          %v5704 = vmul.f32 %v5688, %v5688
          %v5705 = vmul.f32 %v5689, %v5689
          %v5706 = vmul.f32 %v5690, %v5690
          %v5707 = vmul.f32 %v5691, %v5691
          %v5708 = vmul.f32 %v5692, %v5692
          %v5709 = vmul.f32 %v5693, %v5693
          %v5710 = vmul.f32 %v5694, %v5694
          %v5711 = vmul.f32 %v5695, %v5695
          %v5712 = vmul.f32 %v5696, %v5696
          %v5713 = vmul.f32 %v5697, %v5697
          %v5714 = vmul.f32 %v5698, %v5698
          %v5715 = vmul.f32 %v5699, %v5699
          %v5716 = vmul.f32 %v5700, %v5700
          %5717 = vmatprep.subr.mxu0 0.0
          %5718 = vmatpush1.msra.mxu0 %v340
          %5719 = vmatprep.subr.mxu0 0.0
          %5720 = vmatpush1.msra.mxu0 %v339
          %5721 = vmatprep.subr.mxu0 0.0
          %5722 = vmatpush1.msra.mxu0 %v338
          %5723 = vmatprep.subr.mxu0 0.0
          %5724 = vmatpush1.msra.mxu0 %v337
          %5725 = vmatprep.subr.mxu0 0.0
          %5726 = vmatpush1.msra.mxu0 %v336
          %5727 = vmatprep.subr.mxu0 0.0
          %5728 = vmatpush1.msra.mxu0 %v335
          %5729 = vmatprep.subr.mxu0 0.0
          %5730 = vmatpush1.msra.mxu0 %v334
          %5731 = vmatprep.subr.mxu0 0.0
          %5732 = vmatpush1.msra.mxu0 %v333
          %5733 = vmatprep.subr.mxu0 0.0
          %5734 = vmatpush1.msra.mxu0 %v332
          %5735 = vmatprep.subr.mxu0 0.0
          %5736 = vmatpush1.msra.mxu0 %v331
          %5737 = vmatprep.subr.mxu0 0.0
          %5738 = vmatpush1.msra.mxu0 %v330
          %5739 = vmatprep.subr.mxu0 0.0
          %5740 = vmatpush1.msra.mxu0 %v329
          %5741 = vmatprep.subr.mxu0 0.0
          %5742 = vmatpush1.msra.mxu0 %v328
          %5743 = vmatprep.subr.mxu0 0.0
          %5744 = vmatpush1.msra.mxu0 %v327
          %5745 = vmatprep.subr.mxu0 0.0
          %5746 = vmatpush1.msra.mxu0 %v326
          %5747 = vmatprep.subr.mxu0 0.0
          %5748 = vmatpush1.msra.mxu0 %v325
          %5749 = vmatprep.subr.mxu0 0.0
          %5750 = vmatpush2.msra.mxu0 0.0
          %5751 = vmatprep.subr.mxu0 0.0
          %5752 = vmatpush2.msra.mxu0 0.0
          %5753 = vmatprep.subr.mxu0 0.0
          %5754 = vmatpush2.msra.mxu0 0.0
          %5755 = vmatprep.subr.mxu0 0.0
          %5756 = vmatpush2.msra.mxu0 0.0
          %5757 = vmatprep.subr.mxu0 0.0
          %5758 = vmatpush2.msra.mxu0 0.0
          %5759 = vmatprep.subr.mxu0 0.0
          %5760 = vmatpush2.msra.mxu0 0.0
          %5761 = vmatprep.subr.mxu0 0.0
          %5762 = vmatpush2.msra.mxu0 0.0
          %5763 = vmatprep.subr.mxu0 0.0
          %5764 = vmatpush2.msra.mxu0 0.0
          %5765 = vmatprep.subr.mxu0 0.0
          %5766 = vmatpush2.msra.mxu0 0.0
          %5767 = vmatprep.subr.mxu0 0.0
          %5768 = vmatpush2.msra.mxu0 0.0
          %5769 = vmatprep.subr.mxu0 0.0
          %5770 = vmatpush2.msra.mxu0 0.0
          %5771 = vmatprep.subr.mxu0 0.0
          %5772 = vmatpush2.msra.mxu0 0.0
          %5773 = vmatprep.subr.mxu0 0.0
          %5774 = vmatpush2.msra.mxu0 0.0
          %5775 = vmatprep.subr.mxu0 0.0
          %5776 = vmatpush2.msra.mxu0 0.0
          %5777 = vmatprep.subr.mxu0 0.0
          %5778 = vmatpush2.msra.mxu0 0.0
          %5779 = vmatprep.subr.mxu0 0.0
          %5780 = vmatpush2.msra.mxu0 0.0
          %5781 = vmatprep.mubr.f32.mxu0 0.0
          %5782 = vmatmul.mubr.f32.gmra.mxu0 %v5701
          %v5783 = vpop.f32.mrf.mxu0
          %v5784 = vadd.f32 0.0, %v5783
          %v5785 = vpop.f32.mrf.mxu0
          %5786 = vmatprep.mubr.f32.mxu0 0.0
          %5787 = vmatmul.mubr.f32.gmra.mxu0 %v5702
          %v5788 = vpop.f32.mrf.mxu0
          %v5789 = vadd.f32 0.0, %v5788
          %v5790 = vpop.f32.mrf.mxu0
          %5791 = vmatprep.mubr.f32.mxu0 0.0
          %5792 = vmatmul.mubr.f32.gmra.mxu0 %v5703
          %v5793 = vpop.f32.mrf.mxu0
          %v5794 = vadd.f32 0.0, %v5793
          %v5795 = vpop.f32.mrf.mxu0
          %5796 = vmatprep.mubr.f32.mxu0 0.0
          %5797 = vmatmul.mubr.f32.gmra.mxu0 %v5704
          %v5798 = vpop.f32.mrf.mxu0
          %v5799 = vadd.f32 0.0, %v5798
          %v5800 = vpop.f32.mrf.mxu0
          %5801 = vmatprep.mubr.f32.mxu0 0.0
          %5802 = vmatmul.mubr.f32.gmra.mxu0 %v5705
          %v5803 = vpop.f32.mrf.mxu0
          %v5804 = vadd.f32 0.0, %v5803
          %v5805 = vpop.f32.mrf.mxu0
          %5806 = vmatprep.mubr.f32.mxu0 0.0
          %5807 = vmatmul.mubr.f32.gmra.mxu0 %v5706
          %v5808 = vpop.f32.mrf.mxu0
          %v5809 = vadd.f32 0.0, %v5808
          %v5810 = vpop.f32.mrf.mxu0
          %5811 = vmatprep.mubr.f32.mxu0 0.0
          %5812 = vmatmul.mubr.f32.gmra.mxu0 %v5707
          %v5813 = vpop.f32.mrf.mxu0
          %v5814 = vadd.f32 0.0, %v5813
          %v5815 = vpop.f32.mrf.mxu0
          %5816 = vmatprep.mubr.f32.mxu0 0.0
          %5817 = vmatmul.mubr.f32.gmra.mxu0 %v5708
          %v5818 = vpop.f32.mrf.mxu0
          %v5819 = vadd.f32 0.0, %v5818
          %v5820 = vpop.f32.mrf.mxu0
          %5821 = vmatprep.mubr.f32.mxu0 0.0
          %5822 = vmatmul.mubr.f32.gmra.mxu0 %v5709
          %v5823 = vpop.f32.mrf.mxu0
          %v5824 = vadd.f32 0.0, %v5823
          %v5825 = vpop.f32.mrf.mxu0
          %5826 = vmatprep.mubr.f32.mxu0 0.0
          %5827 = vmatmul.mubr.f32.gmra.mxu0 %v5710
          %v5828 = vpop.f32.mrf.mxu0
          %v5829 = vadd.f32 0.0, %v5828
          %v5830 = vpop.f32.mrf.mxu0
          %5831 = vmatprep.mubr.f32.mxu0 0.0
          %5832 = vmatmul.mubr.f32.gmra.mxu0 %v5711
          %v5833 = vpop.f32.mrf.mxu0
          %v5834 = vadd.f32 0.0, %v5833
          %v5835 = vpop.f32.mrf.mxu0
          %5836 = vmatprep.mubr.f32.mxu0 0.0
          %5837 = vmatmul.mubr.f32.gmra.mxu0 %v5712
          %v5838 = vpop.f32.mrf.mxu0
          %v5839 = vadd.f32 0.0, %v5838
          %v5840 = vpop.f32.mrf.mxu0
          %5841 = vmatprep.mubr.f32.mxu0 0.0
          %5842 = vmatmul.mubr.f32.gmra.mxu0 %v5713
          %v5843 = vpop.f32.mrf.mxu0
          %v5844 = vadd.f32 0.0, %v5843
          %v5845 = vpop.f32.mrf.mxu0
          %5846 = vmatprep.mubr.f32.mxu0 0.0
          %5847 = vmatmul.mubr.f32.gmra.mxu0 %v5714
          %v5848 = vpop.f32.mrf.mxu0
          %v5849 = vadd.f32 0.0, %v5848
          %v5850 = vpop.f32.mrf.mxu0
          %5851 = vmatprep.mubr.f32.mxu0 0.0
          %5852 = vmatmul.mubr.f32.gmra.mxu0 %v5715
          %v5853 = vpop.f32.mrf.mxu0
          %v5854 = vadd.f32 0.0, %v5853
          %v5855 = vpop.f32.mrf.mxu0
          %5856 = vmatprep.mubr.f32.mxu0 0.0
          %5857 = vmatmul.mubr.f32.gmra.mxu0 %v5716
          %v5858 = vpop.f32.mrf.mxu0
          %v5859 = vadd.f32 0.0, %v5858
          %v5860 = vpop.f32.mrf.mxu0
          %5861 = vdwg.mxu0
          %v5862 = vmax.f32 %v5784, 1e-24
          %v5863 = vmax.f32 %v5789, 1e-24
          %v5864 = vmax.f32 %v5794, 1e-24
          %v5865 = vmax.f32 %v5799, 1e-24
          %v5866 = vmax.f32 %v5804, 1e-24
          %v5867 = vmax.f32 %v5809, 1e-24
          %v5868 = vmax.f32 %v5814, 1e-24
          %v5869 = vmax.f32 %v5819, 1e-24
          %v5870 = vmax.f32 %v5824, 1e-24
          %v5871 = vmax.f32 %v5829, 1e-24
          %v5872 = vmax.f32 %v5834, 1e-24
          %v5873 = vmax.f32 %v5839, 1e-24
          %v5874 = vmax.f32 %v5844, 1e-24
          %v5875 = vmax.f32 %v5849, 1e-24
          %v5876 = vmax.f32 %v5854, 1e-24
          %v5877 = vmax.f32 %v5859, 1e-24
          %v5878 = vrsqrt.pop %v5862
          %v5879 = vrsqrt.pop %v5863
          %v5880 = vrsqrt.pop %v5864
          %v5881 = vrsqrt.pop %v5865
          %v5882 = vrsqrt.pop %v5866
          %v5883 = vrsqrt.pop %v5867
          %v5884 = vrsqrt.pop %v5868
          %v5885 = vrsqrt.pop %v5869
          %v5886 = vrsqrt.pop %v5870
          %v5887 = vrsqrt.pop %v5871
          %v5888 = vrsqrt.pop %v5872
          %v5889 = vrsqrt.pop %v5873
          %v5890 = vrsqrt.pop %v5874
          %v5891 = vrsqrt.pop %v5875
          %v5892 = vrsqrt.pop %v5876
          %v5893 = vrsqrt.pop %v5877
          %v5895 = vsel %vm4410, %v5878, 0
          %v5898 = vsel %vm4410, %v5879, 0
          %v5901 = vsel %vm4410, %v5880, 0
          %v5904 = vsel %vm4410, %v5881, 0
          %v5907 = vsel %vm4410, %v5882, 0
          %v5910 = vsel %vm4410, %v5883, 0
          %v5913 = vsel %vm4410, %v5884, 0
          %v5916 = vsel %vm4410, %v5885, 0
          %v5919 = vsel %vm4410, %v5886, 0
          %v5922 = vsel %vm4410, %v5887, 0
          %v5925 = vsel %vm4410, %v5888, 0
          %v5928 = vsel %vm4410, %v5889, 0
          %v5931 = vsel %vm4410, %v5890, 0
          %v5934 = vsel %vm4410, %v5891, 0
          %v5937 = vsel %vm4410, %v5892, 0
          %v5940 = vsel %vm4410, %v5893, 0
          %vm5942 = vcmask 1043456
          %v5944 = vsel %vm5942, %v347, 0
          %5946 = vmatprep.subr.mxu0 0.0
          %5947 = vmatpush1.msra.mxu0 0.0
          %5948 = vmatprep.subr.mxu0 0.0
          %5949 = vmatpush1.msra.mxu0 0.0
          %5950 = vmatprep.subr.mxu0 0.0
          %5951 = vmatpush1.msra.mxu0 0.0
          %5952 = vmatprep.subr.mxu0 0.0
          %5953 = vmatpush1.msra.mxu0 0.0
          %5954 = vmatprep.subr.mxu0 0.0
          %5955 = vmatpush1.msra.mxu0 0.0
          %5956 = vmatprep.subr.mxu0 0.0
          %5957 = vmatpush1.msra.mxu0 0.0
          %5958 = vmatprep.subr.mxu0 0.0
          %5959 = vmatpush1.msra.mxu0 0.0
          %5960 = vmatprep.subr.mxu0 0.0
          %5961 = vmatpush1.msra.mxu0 0.0
          %5962 = vmatprep.subr.mxu0 0.0
          %5963 = vmatpush1.msra.mxu0 0.0
          %5964 = vmatprep.subr.mxu0 0.0
          %5965 = vmatpush1.msra.mxu0 0.0
          %5966 = vmatprep.subr.mxu0 0.0
          %5967 = vmatpush1.msra.mxu0 0.0
          %5968 = vmatprep.subr.mxu0 0.0
          %5969 = vmatpush1.msra.mxu0 0.0
          %5970 = vmatprep.subr.mxu0 0.0
          %5971 = vmatpush1.msra.mxu0 0.0
          %5972 = vmatprep.subr.mxu0 0.0
          %5973 = vmatpush1.msra.mxu0 0.0
          %5974 = vmatprep.subr.mxu0 0.0
          %5975 = vmatpush1.msra.mxu0 0.0
          %5976 = vmatprep.subr.mxu0 0.0
          %5977 = vmatpush1.msra.mxu0 %v5944
          %5978 = vmatprep.subr.mxu0 0.0
          %5979 = vmatpush2.msra.mxu0 0.0
          %5980 = vmatprep.subr.mxu0 0.0
          %5981 = vmatpush2.msra.mxu0 0.0
          %5982 = vmatprep.subr.mxu0 0.0
          %5983 = vmatpush2.msra.mxu0 0.0
          %5984 = vmatprep.subr.mxu0 0.0
          %5985 = vmatpush2.msra.mxu0 0.0
          %5986 = vmatprep.subr.mxu0 0.0
          %5987 = vmatpush2.msra.mxu0 0.0
          %5988 = vmatprep.subr.mxu0 0.0
          %5989 = vmatpush2.msra.mxu0 0.0
          %5990 = vmatprep.subr.mxu0 0.0
          %5991 = vmatpush2.msra.mxu0 0.0
          %5992 = vmatprep.subr.mxu0 0.0
          %5993 = vmatpush2.msra.mxu0 0.0
          %5994 = vmatprep.subr.mxu0 0.0
          %5995 = vmatpush2.msra.mxu0 0.0
          %5996 = vmatprep.subr.mxu0 0.0
          %5997 = vmatpush2.msra.mxu0 0.0
          %5998 = vmatprep.subr.mxu0 0.0
          %5999 = vmatpush2.msra.mxu0 0.0
          %6000 = vmatprep.subr.mxu0 0.0
          %6001 = vmatpush2.msra.mxu0 0.0
          %6002 = vmatprep.subr.mxu0 0.0
          %6003 = vmatpush2.msra.mxu0 0.0
          %6004 = vmatprep.subr.mxu0 0.0
          %6005 = vmatpush2.msra.mxu0 0.0
          %6006 = vmatprep.subr.mxu0 0.0
          %6007 = vmatpush2.msra.mxu0 0.0
          %6008 = vmatprep.subr.mxu0 0.0
          %6009 = vmatpush2.msra.mxu0 0.0
          %6010 = vmatprep.mubr.f32.mxu0 0.0
          %6011 = vmatmul.mubr.f32.gmra.mxu0 %v5895
          %v6012 = vpop.f32.mrf.mxu0
          %v6013 = vadd.f32 0.0, %v6012
          %v6014 = vpop.f32.mrf.mxu0
          %6015 = vmatprep.mubr.f32.mxu0 0.0
          %6016 = vmatmul.mubr.f32.gmra.mxu0 %v5898
          %v6017 = vpop.f32.mrf.mxu0
          %v6018 = vadd.f32 0.0, %v6017
          %v6019 = vpop.f32.mrf.mxu0
          %6020 = vmatprep.mubr.f32.mxu0 0.0
          %6021 = vmatmul.mubr.f32.gmra.mxu0 %v5901
          %v6022 = vpop.f32.mrf.mxu0
          %v6023 = vadd.f32 0.0, %v6022
          %v6024 = vpop.f32.mrf.mxu0
          %6025 = vmatprep.mubr.f32.mxu0 0.0
          %6026 = vmatmul.mubr.f32.gmra.mxu0 %v5904
          %v6027 = vpop.f32.mrf.mxu0
          %v6028 = vadd.f32 0.0, %v6027
          %v6029 = vpop.f32.mrf.mxu0
          %6030 = vmatprep.mubr.f32.mxu0 0.0
          %6031 = vmatmul.mubr.f32.gmra.mxu0 %v5907
          %v6032 = vpop.f32.mrf.mxu0
          %v6033 = vadd.f32 0.0, %v6032
          %v6034 = vpop.f32.mrf.mxu0
          %6035 = vmatprep.mubr.f32.mxu0 0.0
          %6036 = vmatmul.mubr.f32.gmra.mxu0 %v5910
          %v6037 = vpop.f32.mrf.mxu0
          %v6038 = vadd.f32 0.0, %v6037
          %v6039 = vpop.f32.mrf.mxu0
          %6040 = vmatprep.mubr.f32.mxu0 0.0
          %6041 = vmatmul.mubr.f32.gmra.mxu0 %v5913
          %v6042 = vpop.f32.mrf.mxu0
          %v6043 = vadd.f32 0.0, %v6042
          %v6044 = vpop.f32.mrf.mxu0
          %6045 = vmatprep.mubr.f32.mxu0 0.0
          %6046 = vmatmul.mubr.f32.gmra.mxu0 %v5916
          %v6047 = vpop.f32.mrf.mxu0
          %v6048 = vadd.f32 0.0, %v6047
          %v6049 = vpop.f32.mrf.mxu0
          %6050 = vmatprep.mubr.f32.mxu0 0.0
          %6051 = vmatmul.mubr.f32.gmra.mxu0 %v5919
          %v6052 = vpop.f32.mrf.mxu0
          %v6053 = vadd.f32 0.0, %v6052
          %v6054 = vpop.f32.mrf.mxu0
          %6055 = vmatprep.mubr.f32.mxu0 0.0
          %6056 = vmatmul.mubr.f32.gmra.mxu0 %v5922
          %v6057 = vpop.f32.mrf.mxu0
          %v6058 = vadd.f32 0.0, %v6057
          %v6059 = vpop.f32.mrf.mxu0
          %6060 = vmatprep.mubr.f32.mxu0 0.0
          %6061 = vmatmul.mubr.f32.gmra.mxu0 %v5925
          %v6062 = vpop.f32.mrf.mxu0
          %v6063 = vadd.f32 0.0, %v6062
          %v6064 = vpop.f32.mrf.mxu0
          %6065 = vmatprep.mubr.f32.mxu0 0.0
          %6066 = vmatmul.mubr.f32.gmra.mxu0 %v5928
          %v6067 = vpop.f32.mrf.mxu0
          %v6068 = vadd.f32 0.0, %v6067
          %v6069 = vpop.f32.mrf.mxu0
          %6070 = vmatprep.mubr.f32.mxu0 0.0
          %6071 = vmatmul.mubr.f32.gmra.mxu0 %v5931
          %v6072 = vpop.f32.mrf.mxu0
          %v6073 = vadd.f32 0.0, %v6072
          %v6074 = vpop.f32.mrf.mxu0
          %6075 = vmatprep.mubr.f32.mxu0 0.0
          %6076 = vmatmul.mubr.f32.gmra.mxu0 %v5934
          %v6077 = vpop.f32.mrf.mxu0
          %v6078 = vadd.f32 0.0, %v6077
          %v6079 = vpop.f32.mrf.mxu0
          %6080 = vmatprep.mubr.f32.mxu0 0.0
          %6081 = vmatmul.mubr.f32.gmra.mxu0 %v5937
          %v6082 = vpop.f32.mrf.mxu0
          %v6083 = vadd.f32 0.0, %v6082
          %v6084 = vpop.f32.mrf.mxu0
          %6085 = vmatprep.mubr.f32.mxu0 0.0
          %6086 = vmatmul.mubr.f32.gmra.mxu0 %v5940
          %v6087 = vpop.f32.mrf.mxu0
          %v6088 = vadd.f32 0.0, %v6087
          %v6089 = vpop.f32.mrf.mxu0
          %6090 = vdwg.mxu0
          %v6091 = vmul.f32 %v5685, %v6013
          %v6092 = vmul.f32 %v5686, %v6018
          %v6093 = vmul.f32 %v5687, %v6023
          %v6094 = vmul.f32 %v5688, %v6028
          %v6095 = vmul.f32 %v5689, %v6033
          %v6096 = vmul.f32 %v5690, %v6038
          %v6097 = vmul.f32 %v5691, %v6043
          %v6098 = vmul.f32 %v5692, %v6048
          %v6099 = vmul.f32 %v5693, %v6053
          %v6100 = vmul.f32 %v5694, %v6058
          %v6101 = vmul.f32 %v5695, %v6063
          %v6102 = vmul.f32 %v5696, %v6068
          %v6103 = vmul.f32 %v5697, %v6073
          %v6104 = vmul.f32 %v5698, %v6078
          %v6105 = vmul.f32 %v5699, %v6083
          %v6106 = vmul.f32 %v5700, %v6088
          %6107 = vst [vmem:[#allocation3] sm:$0xff] %v6091
          %6108 = vst [vmem:[#allocation3 + $0x8] sm:$0xff] %v6092
          %6109 = vst [vmem:[#allocation3 + $0x10] sm:$0xff] %v6093
          %6110 = vst [vmem:[#allocation3 + $0x18] sm:$0xff] %v6094
          %6111 = vst [vmem:[#allocation3 + $0x20] sm:$0xff] %v6095
          %6112 = vst [vmem:[#allocation3 + $0x28] sm:$0xff] %v6096
          %6113 = vst [vmem:[#allocation3 + $0x30] sm:$0xff] %v6097
          %6114 = vst [vmem:[#allocation3 + $0x38] sm:$0xff] %v6098
          %6115 = vst [vmem:[#allocation3 + $0x40] sm:$0xff] %v6099
          %6116 = vst [vmem:[#allocation3 + $0x48] sm:$0xff] %v6100
          %6117 = vst [vmem:[#allocation3 + $0x50] sm:$0xff] %v6101
          %6118 = vst [vmem:[#allocation3 + $0x58] sm:$0xff] %v6102
          %6119 = vst [vmem:[#allocation3 + $0x60] sm:$0xff] %v6103
          %6120 = vst [vmem:[#allocation3 + $0x68] sm:$0xff] %v6104
          %6121 = vst [vmem:[#allocation3 + $0x70] sm:$0xff] %v6105
          %6122 = vst [vmem:[#allocation3 + $0x78] sm:$0xff] %v6106
        $region52: #{tpu_custom_call.1} parent=35 // pred_fallthru
          _
        %p6123 = scmp.eq.s32.totalorder %s20, 2
        %p6124 = pnand %p6123, %p358
        %p6125 = pneg %p6124
        // Predicated region
        $region53: #{tpu_custom_call.1} parent=35 // pred_check
          _
        $region54: #{tpu_custom_call.1} parent=35 // pred_check_branch
          %6127 = sbr.rel (%p6124) target = $region56
        $region55: #{tpu_custom_call.1} parent=35 // pred_region
          %v6128 = vld [vmem:[#allocation3] sm:$0xff]
          %v6129 = vld [vmem:[#allocation3 + $0x8] sm:$0xff]
          %v6130 = vld [vmem:[#allocation3 + $0x10] sm:$0xff]
          %v6131 = vld [vmem:[#allocation3 + $0x18] sm:$0xff]
          %v6132 = vld [vmem:[#allocation3 + $0x20] sm:$0xff]
          %v6133 = vld [vmem:[#allocation3 + $0x28] sm:$0xff]
          %v6134 = vld [vmem:[#allocation3 + $0x30] sm:$0xff]
          %v6135 = vld [vmem:[#allocation3 + $0x38] sm:$0xff]
          %v6136 = vld [vmem:[#allocation3 + $0x40] sm:$0xff]
          %v6137 = vld [vmem:[#allocation3 + $0x48] sm:$0xff]
          %v6138 = vld [vmem:[#allocation3 + $0x50] sm:$0xff]
          %v6139 = vld [vmem:[#allocation3 + $0x58] sm:$0xff]
          %v6140 = vld [vmem:[#allocation3 + $0x60] sm:$0xff]
          %v6141 = vld [vmem:[#allocation3 + $0x68] sm:$0xff]
          %v6142 = vld [vmem:[#allocation3 + $0x70] sm:$0xff]
          %v6143 = vld [vmem:[#allocation3 + $0x78] sm:$0xff]
          %6144 = vst [vmem:[#allocation8] sm:$0xff] %v6128
          %6145 = vst [vmem:[#allocation8 + $0x8] sm:$0xff] %v6129
          %6146 = vst [vmem:[#allocation8 + $0x10] sm:$0xff] %v6130
          %6147 = vst [vmem:[#allocation8 + $0x18] sm:$0xff] %v6131
          %6148 = vst [vmem:[#allocation8 + $0x20] sm:$0xff] %v6132
          %6149 = vst [vmem:[#allocation8 + $0x28] sm:$0xff] %v6133
          %6150 = vst [vmem:[#allocation8 + $0x30] sm:$0xff] %v6134
          %6151 = vst [vmem:[#allocation8 + $0x38] sm:$0xff] %v6135
          %6152 = vst [vmem:[#allocation8 + $0x40] sm:$0xff] %v6136
          %6153 = vst [vmem:[#allocation8 + $0x48] sm:$0xff] %v6137
          %6154 = vst [vmem:[#allocation8 + $0x50] sm:$0xff] %v6138
          %6155 = vst [vmem:[#allocation8 + $0x58] sm:$0xff] %v6139
          %6156 = vst [vmem:[#allocation8 + $0x60] sm:$0xff] %v6140
          %6157 = vst [vmem:[#allocation8 + $0x68] sm:$0xff] %v6141
          %6158 = vst [vmem:[#allocation8 + $0x70] sm:$0xff] %v6142
          %6159 = vst [vmem:[#allocation8 + $0x78] sm:$0xff] %v6143
        $region56: #{tpu_custom_call.1} parent=35 // pred_fallthru
          _
        // Predicated region
        $region57: #{tpu_custom_call.1} parent=35 // pred_check
          %p6160 = pneg %p140
        $region58: #{tpu_custom_call.1} parent=35 // pred_check_branch
          %6162 = sbr.rel (%p6160) target = $region60
        $region59: #{tpu_custom_call.1} parent=35 // pred_region
          %s6164 = ssub.s32 2048, 2048
          %6165 = vsyncadd [#allocation9], %s6164
          %s6166 = sshll.u32 [#allocation8], 4
          %s6167 = int_to_ptr.vmem [resolvable:$true] %s6166
          %6172 = dma.vmem_to_hbm [thread:$0]  %s6167, 2048, %s4, [#allocation9], 128, 128, 8
        $region60: #{tpu_custom_call.1} parent=35 // pred_fallthru
          _
        // Predicated region
        $region61: #{tpu_custom_call.1} parent=35 // pred_check
          %p6173 = pneg %p140
        $region62: #{tpu_custom_call.1} parent=35 // pred_check_branch
          %6175 = sbr.rel (%p6173) target = $region64
        $region63: #{tpu_custom_call.1} parent=35 // pred_region
          %6176 = dma.done [#allocation9], 2048
        $region64: #{tpu_custom_call.1} parent=35 // pred_fallthru
          _
      $region36: #{tpu_custom_call.1} parent=5 // pred_fallthru
        _
      %p6177 = scmp.le.s32.totalorder 2, %s11
      // Predicated region
      $region65: #{tpu_custom_call.1} parent=5 // pred_check
        %p6178 = pneg %p6177
      $region66: #{tpu_custom_call.1} parent=5 // pred_check_branch
        %6180 = sbr.rel (%p6178) target = $region68
      $region67: #{tpu_custom_call.1} parent=5 // pred_region
        %s6181 = ssub.s32 %s11, 2
      $region68: #{tpu_custom_call.1} parent=5 // pred_fallthru
        _
    $region6: #{tpu_custom_call.1} parent=1 // loop_footer
      %s15 = sadd.s32 1, %s11
    $region7: #{tpu_custom_call.1} parent=1 // loop_footer_branch
      %10 = sbr.rel target = $region3
    $region8: #{tpu_custom_call.1} parent=1 // loop_exit
      _
    %6182 = vsyncpa [#allocation9], 1
    %s6183 = scalar_lea.sflag [#allocation9], 1
    %6184 = vsyncpa %s6183, 1

</llo_original>
